<compile_context>
chip_gen: v7x
topology: tpu7x:2x2x1
jax: 0.10.0
libtpu: 0.0.40
codegen_flags: <defaults>
</compile_context>

<pallas_src>
import jax
import jax.numpy as jnp
from jax import lax
from jax.experimental import pallas as pl
from jax.experimental.pallas import tpu as pltpu


def _round_up(n, m):
    return ((n + m - 1) // m) * m


def make_mynet_kernel(L, B, T, HP):
    """Fused GRU (layer-outer / time-inner) + sigmoid-MLP head kernel."""

    n_in = 2 + 4 * L + 5

    def kernel(*refs):
        x_ref = refs[0]                       # (T*B, Din)  time-major flattened input
        h0_ref = refs[1]                      # (L, B, HP)  zero-padded hidden init
        p = refs[2:2 + 4 * L]                 # per layer: w_ih_p, w_hh_p, b_gi_p, b_hn_p
        fc0_w, fc0_b, fc1_w, fc2_w, fc3_w = refs[2 + 4 * L:n_in]
        y_ref = refs[n_in]                    # (B, OP)     padded output
        hout_ref = refs[n_in + 1]             # (L, B, HP)  padded final hidden
        hseq_ref = refs[n_in + 2]             # (T*B, HP)   VMEM scratch: layer output seq

        seq_in = x_ref[...]                   # layer-0 input, (T*B, Din)
        h = None

        for l in range(L):
            w_ih = p[4 * l + 0][...]          # (K, 3*HP)  lane-aligned per-gate slabs
            w_hh = p[4 * l + 1][...]          # (HP, 3*HP)
            b_gi = p[4 * l + 2][...]          # (1, 3*HP)  b_ih (+ b_hh for r,z gates)
            b_hn = p[4 * l + 3][...]          # (1, HP)    b_hh of the n gate

            # Hoisted over all timesteps: one big MXU push per layer.
            gi_all = jnp.dot(seq_in, w_ih,
                             preferred_element_type=jnp.float32) + b_gi   # (T*B, 3*HP)
            # Hoisted bias broadcast (JAX does not CSE broadcast_in_dim).
            bhn = jnp.broadcast_to(b_hn, (B, HP))

            h = h0_ref[l]                     # (B, HP)
            last = (l == L - 1)

            # Serial recurrence; T is small & static -> fully unrolled.
            for t in range(T):
                r0 = t * B
                gi = gi_all[r0:r0 + B, :]                                  # (B, 3*HP)
                gh = jnp.dot(h, w_hh,
                             preferred_element_type=jnp.float32)           # (B, 3*HP)
                # 128-lane aligned gate slabs -> free vreg selects.
                r = jax.nn.sigmoid(gi[:, 0:HP] + gh[:, 0:HP])
                z = jax.nn.sigmoid(gi[:, HP:2 * HP] + gh[:, HP:2 * HP])
                n = jnp.tanh(gi[:, 2 * HP:3 * HP]
                             + r * (gh[:, 2 * HP:3 * HP] + bhn))
                h = (1.0 - z) * n + z * h
                if not last:
                    hseq_ref[r0:r0 + B, :] = h

            hout_ref[l] = h
            if not last:
                seq_in = hseq_ref[...]        # (T*B, HP) feeds the next layer

        # data[:, -1] of the GRU output == final hidden of the last layer.
        feat = h                              # (B, HP)

        a = jnp.dot(jax.nn.sigmoid(feat), fc0_w[...],
                    preferred_element_type=jnp.float32) + fc0_b[...]
        # dropout(p=0.01) -> identity at inference
        a = jnp.dot(jax.nn.sigmoid(a), fc1_w[...],
                    preferred_element_type=jnp.float32)
        a = jnp.dot(jax.nn.sigmoid(a), fc2_w[...],
                    preferred_element_type=jnp.float32)
        a = jnp.dot(jax.nn.sigmoid(a), fc3_w[...],
                    preferred_element_type=jnp.float32)

        y_ref[...] = a.astype(y_ref.dtype)

    return kernel


def mynet_forward(x, h0, params):
    """Pallas-backed forward.  x: (B,T,Din), h0: (L,B,H) -> (y, h_out)."""
    B, T, Din = x.shape
    L, _, H = h0.shape
    out_dim = params["fc3_w"].shape[0]
    d1 = params["fc1_w"].shape[0]
    d2 = params["fc2_w"].shape[0]

    HP = _round_up(H, 128)
    D1P = _round_up(d1, 128)
    D2P = _round_up(d2, 128)
    OP = _round_up(out_dim, 128)
    f32 = jnp.float32

    # Time-major flatten of the input so a single matmul covers all timesteps.
    x2d = jnp.transpose(x, (1, 0, 2)).reshape(T * B, Din).astype(f32)
    h0p = jnp.pad(h0.astype(f32), ((0, 0), (0, 0), (0, HP - H)))

    inputs = [x2d, h0p]
    for l in range(L):
        in_dim = Din if l == 0 else H
        k_in = Din if l == 0 else HP          # layer>0 input is the padded hidden seq
        w_ih = params[f"w_ih_{l}"].astype(f32)    # (3H, in_dim), gate order r,z,n
        w_hh = params[f"w_hh_{l}"].astype(f32)    # (3H, H)
        b_ih = params[f"b_ih_{l}"].astype(f32)    # (3H,)
        b_hh = params[f"b_hh_{l}"].astype(f32)    # (3H,)

        w_ih_p = jnp.zeros((k_in, 3 * HP), f32)
        w_hh_p = jnp.zeros((HP, 3 * HP), f32)
        b_gi_p = jnp.zeros((1, 3 * HP), f32)
        for g in range(3):
            w_ih_p = w_ih_p.at[:in_dim, g * HP:g * HP + H].set(
                w_ih[g * H:(g + 1) * H, :].T)
            w_hh_p = w_hh_p.at[:H, g * HP:g * HP + H].set(
                w_hh[g * H:(g + 1) * H, :].T)
            bg = b_ih[g * H:(g + 1) * H]
            if g < 2:                          # fold b_hh into r,z gate biases
                bg = bg + b_hh[g * H:(g + 1) * H]
            b_gi_p = b_gi_p.at[0, g * HP:g * HP + H].set(bg)
        b_hn_p = jnp.zeros((1, HP), f32).at[0, :H].set(b_hh[2 * H:3 * H])
        inputs += [w_ih_p, w_hh_p, b_gi_p, b_hn_p]

    # MLP head, padded to 128-lane slabs (zero rows kill sigmoid(0)=0.5 padding).
    fc0_w_p = jnp.zeros((HP, HP), f32).at[:H, :H].set(params["fc0_w"].astype(f32).T)
    fc0_b_p = jnp.zeros((1, HP), f32).at[0, :H].set(params["fc0_b"].astype(f32))
    fc1_w_p = jnp.zeros((HP, D1P), f32).at[:H, :d1].set(params["fc1_w"].astype(f32).T)
    fc2_w_p = jnp.zeros((D1P, D2P), f32).at[:d1, :d2].set(params["fc2_w"].astype(f32).T)
    fc3_w_p = jnp.zeros((D2P, OP), f32).at[:d2, :out_dim].set(params["fc3_w"].astype(f32).T)
    inputs += [fc0_w_p, fc0_b_p, fc1_w_p, fc2_w_p, fc3_w_p]

    kernel = make_mynet_kernel(L, B, T, HP)
    vmem = pltpu.MemorySpace.VMEM
    # NOTE: single invocation (no grid) — the whole working set is a few 10s of KB.
    # For large B on v7x, add a parallel grid over batch blocks of 8+ rows.
    y_p, h_p = pl.pallas_call(
        kernel,
        out_shape=(jax.ShapeDtypeStruct((B, OP), f32),
                   jax.ShapeDtypeStruct((L, B, HP), f32)),
        in_specs=[pl.BlockSpec(memory_space=vmem) for _ in inputs],
        out_specs=(pl.BlockSpec(memory_space=vmem),
                   pl.BlockSpec(memory_space=vmem)),
        scratch_shapes=[pltpu.VMEM((T * B, HP), f32)],
    )(*inputs)

    return y_p[:, :out_dim], h_p[:, :, :H]


def mynet_forward_ref(x, h0, params):
    """Pure-JAX reference (mirrors PyTorch semantics) for correctness check."""
    L, B, H = h0.shape
    T = x.shape[1]
    h = [h0[l] for l in range(L)]
    for t in range(T):
        inp = x[:, t, :]
        for l in range(L):
            gi = inp @ params[f"w_ih_{l}"].T + params[f"b_ih_{l}"]
            gh = h[l] @ params[f"w_hh_{l}"].T + params[f"b_hh_{l}"]
            r = jax.nn.sigmoid(gi[:, :H] + gh[:, :H])
            z = jax.nn.sigmoid(gi[:, H:2 * H] + gh[:, H:2 * H])
            n = jnp.tanh(gi[:, 2 * H:] + r * gh[:, 2 * H:])
            h[l] = (1.0 - z) * n + z * h[l]
            inp = h[l]
    feat = h[-1]
    a = jax.nn.sigmoid(feat) @ params["fc0_w"].T + params["fc0_b"]
    a = jax.nn.sigmoid(a) @ params["fc1_w"].T
    a = jax.nn.sigmoid(a) @ params["fc2_w"].T
    a = jax.nn.sigmoid(a) @ params["fc3_w"].T
    return a, jnp.stack(h, axis=0)


def init_params(key, n_layers, days_in_data, hidden_dim, output_dim):
    """Deterministic synthetic init.
    GRU params: PyTorch default U(-1/sqrt(H), 1/sqrt(H)).
    Linear params: weights_initialization() uniform limits (here +-0.1)."""
    params = {}
    H = hidden_dim
    k = 1.0 / jnp.sqrt(jnp.float32(H))
    keys = jax.random.split(key, 4 * n_layers + 6)
    ki = 0
    for l in range(n_layers):
        in_dim = days_in_data if l == 0 else H
        params[f"w_ih_{l}"] = jax.random.uniform(keys[ki], (3 * H, in_dim),
                                                 minval=-k, maxval=k); ki += 1
        params[f"w_hh_{l}"] = jax.random.uniform(keys[ki], (3 * H, H),
                                                 minval=-k, maxval=k); ki += 1
        params[f"b_ih_{l}"] = jax.random.uniform(keys[ki], (3 * H,),
                                                 minval=-k, maxval=k); ki += 1
        params[f"b_hh_{l}"] = jax.random.uniform(keys[ki], (3 * H,),
                                                 minval=-k, maxval=k); ki += 1
    wl, wh = -0.1, 0.1
    d1 = H // 4 + 1
    d2 = H // 8 + 1
    params["fc0_w"] = jax.random.uniform(keys[ki], (H, H), minval=wl, maxval=wh); ki += 1
    params["fc0_b"] = jax.random.uniform(keys[ki], (H,), minval=wl, maxval=wh); ki += 1
    params["fc1_w"] = jax.random.uniform(keys[ki], (d1, H), minval=wl, maxval=wh); ki += 1
    params["fc2_w"] = jax.random.uniform(keys[ki], (d2, d1), minval=wl, maxval=wh); ki += 1
    params["fc3_w"] = jax.random.uniform(keys[ki], (output_dim, d2), minval=wl, maxval=wh); ki += 1
    return params


if __name__ == "__main__":
    # Small shapes consistent with the module: useGRU=True
    batch = 2
    seq = 8
    days_in_data = 16     # GRU input feature size
    hidden_dim = 32
    output_dim = 4
    n_layers = 2

    root = jax.random.PRNGKey(0)
    kx, kp = jax.random.split(root)
    x = jax.random.normal(kx, (batch, seq, days_in_data), dtype=jnp.float32)
    h0 = jnp.zeros((n_layers, batch, hidden_dim), dtype=jnp.float32)  # init_hidden()

    params = init_params(kp, n_layers, days_in_data, hidden_dim, output_dim)

    y, h_out = jax.jit(mynet_forward)(x, h0, params)
    jax.block_until_ready((y, h_out))

    y_ref, h_ref = mynet_forward_ref(x, h0, params)
    assert y.shape == (batch, output_dim)
    assert h_out.shape == (n_layers, batch, hidden_dim)
    assert jnp.allclose(y, y_ref, atol=1e-5, rtol=1e-5)
    assert jnp.allclose(h_out, h_ref, atol=1e-5, rtol=1e-5)

    print("KERNEL_OK")
</pallas_src>

<mosaic_0001>
module attributes {stable_mosaic.version = 11 : i64} {
  func.func @kernel(%arg0: memref<16x16xf32, #tpu.memory_space<vmem>>, %arg1: memref<2x2x128xf32, #tpu.memory_space<vmem>>, %arg2: memref<16x384xf32, #tpu.memory_space<vmem>>, %arg3: memref<128x384xf32, #tpu.memory_space<vmem>>, %arg4: memref<1x384xf32, #tpu.memory_space<vmem>>, %arg5: memref<1x128xf32, #tpu.memory_space<vmem>>, %arg6: memref<128x384xf32, #tpu.memory_space<vmem>>, %arg7: memref<128x384xf32, #tpu.memory_space<vmem>>, %arg8: memref<1x384xf32, #tpu.memory_space<vmem>>, %arg9: memref<1x128xf32, #tpu.memory_space<vmem>>, %arg10: memref<128x128xf32, #tpu.memory_space<vmem>>, %arg11: memref<1x128xf32, #tpu.memory_space<vmem>>, %arg12: memref<128x128xf32, #tpu.memory_space<vmem>>, %arg13: memref<128x128xf32, #tpu.memory_space<vmem>>, %arg14: memref<128x128xf32, #tpu.memory_space<vmem>>, %arg15: memref<2x128xf32, #tpu.memory_space<vmem>>, %arg16: memref<2x2x128xf32, #tpu.memory_space<vmem>>, %arg17: memref<16x128xf32, #tpu.memory_space<vmem>>) attributes {dimension_semantics = [], scalar_prefetch = 0 : i64, scratch_operands = 1 : i64, tpu.core_type = #tpu.core_type<tc>} {
    %c0 = arith.constant 0 : index
    %c0_0 = arith.constant 0 : index
    %0 = vector.load %arg0[%c0, %c0_0] : memref<16x16xf32, #tpu.memory_space<vmem>>, vector<16x16xf32>
    %c0_1 = arith.constant 0 : index
    %c0_2 = arith.constant 0 : index
    %1 = vector.load %arg2[%c0_1, %c0_2] : memref<16x384xf32, #tpu.memory_space<vmem>>, vector<16x384xf32>
    %c0_3 = arith.constant 0 : index
    %c0_4 = arith.constant 0 : index
    %2 = vector.load %arg3[%c0_3, %c0_4] : memref<128x384xf32, #tpu.memory_space<vmem>>, vector<128x384xf32>
    %c0_5 = arith.constant 0 : index
    %c0_6 = arith.constant 0 : index
    %3 = vector.load %arg4[%c0_5, %c0_6] : memref<1x384xf32, #tpu.memory_space<vmem>>, vector<1x384xf32>
    %c0_7 = arith.constant 0 : index
    %c0_8 = arith.constant 0 : index
    %4 = vector.load %arg5[%c0_7, %c0_8] : memref<1x128xf32, #tpu.memory_space<vmem>>, vector<1x128xf32>
    %cst = arith.constant dense<0.000000e+00> : vector<16x384xf32>
    %5 = tpu.matmul %0, %1, %cst {dimension_numbers = #tpu.dot_dimension_numbers<[1], [0], [0], [1], [0, 0, 1, 1], [], []>} : vector<16x16xf32>, vector<16x384xf32>, vector<16x384xf32> -> vector<16x384xf32>
    %6 = vector.broadcast %3 : vector<1x384xf32> to vector<16x384xf32>
    %7 = arith.addf %5, %6 : vector<16x384xf32>
    %8 = vector.shape_cast %4 : vector<1x128xf32> to vector<1x128xf32>
    %9 = vector.broadcast %8 : vector<1x128xf32> to vector<2x128xf32>
    %c0_9 = arith.constant 0 : index
    %c0_10 = arith.constant 0 : index
    %c0_11 = arith.constant 0 : index
    %10 = vector.load %arg1[%c0_9, %c0_10, %c0_11] : memref<2x2x128xf32, #tpu.memory_space<vmem>>, vector<1x2x128xf32>
    %11 = vector.shape_cast %10 : vector<1x2x128xf32> to vector<2x128xf32>
    %12 = vector.extract_strided_slice %7 {offsets = [0, 0], sizes = [2, 384], strides = [1, 1]} : vector<16x384xf32> to vector<2x384xf32>
    %cst_12 = arith.constant dense<0.000000e+00> : vector<2x384xf32>
    %13 = tpu.matmul %11, %2, %cst_12 {dimension_numbers = #tpu.dot_dimension_numbers<[1], [0], [0], [1], [0, 0, 1, 1], [], []>} : vector<2x128xf32>, vector<128x384xf32>, vector<2x384xf32> -> vector<2x384xf32>
    %14 = vector.extract_strided_slice %12 {offsets = [0, 0], sizes = [2, 128], strides = [1, 1]} : vector<2x384xf32> to vector<2x128xf32>
    %15 = vector.extract_strided_slice %13 {offsets = [0, 0], sizes = [2, 128], strides = [1, 1]} : vector<2x384xf32> to vector<2x128xf32>
    %16 = arith.addf %14, %15 : vector<2x128xf32>
    %17 = arith.negf %16 : vector<2x128xf32>
    %18 = math.exp %17 : vector<2x128xf32>
    %cst_13 = arith.constant 1.000000e+00 : f32
    %19 = vector.broadcast %cst_13 : f32 to vector<2x128xf32>
    %20 = arith.addf %19, %18 : vector<2x128xf32>
    %21 = arith.divf %19, %20 : vector<2x128xf32>
    %22 = vector.extract_strided_slice %12 {offsets = [0, 128], sizes = [2, 128], strides = [1, 1]} : vector<2x384xf32> to vector<2x128xf32>
    %23 = vector.extract_strided_slice %13 {offsets = [0, 128], sizes = [2, 128], strides = [1, 1]} : vector<2x384xf32> to vector<2x128xf32>
    %24 = arith.addf %22, %23 : vector<2x128xf32>
    %25 = arith.negf %24 : vector<2x128xf32>
    %26 = math.exp %25 : vector<2x128xf32>
    %cst_14 = arith.constant 1.000000e+00 : f32
    %27 = vector.broadcast %cst_14 : f32 to vector<2x128xf32>
    %28 = arith.addf %27, %26 : vector<2x128xf32>
    %29 = arith.divf %27, %28 : vector<2x128xf32>
    %30 = vector.extract_strided_slice %12 {offsets = [0, 256], sizes = [2, 128], strides = [1, 1]} : vector<2x384xf32> to vector<2x128xf32>
    %31 = vector.extract_strided_slice %13 {offsets = [0, 256], sizes = [2, 128], strides = [1, 1]} : vector<2x384xf32> to vector<2x128xf32>
    %32 = arith.addf %31, %9 : vector<2x128xf32>
    %33 = arith.mulf %21, %32 : vector<2x128xf32>
    %34 = arith.addf %30, %33 : vector<2x128xf32>
    %35 = math.tanh %34 : vector<2x128xf32>
    %cst_15 = arith.constant 1.000000e+00 : f32
    %36 = vector.broadcast %cst_15 : f32 to vector<2x128xf32>
    %37 = arith.subf %36, %29 : vector<2x128xf32>
    %38 = arith.mulf %37, %35 : vector<2x128xf32>
    %39 = arith.mulf %29, %11 : vector<2x128xf32>
    %40 = arith.addf %38, %39 : vector<2x128xf32>
    %c0_16 = arith.constant 0 : index
    %c0_17 = arith.constant 0 : index
    %41 = vector.load %arg17[%c0_16, %c0_17] : memref<16x128xf32, #tpu.memory_space<vmem>>, vector<2x128xf32>
    tpu.vector_store %arg17[%c0_16, %c0_17], %40 {strides = array<i32>} : memref<16x128xf32, #tpu.memory_space<vmem>>, vector<2x128xf32>,
    %42 = vector.extract_strided_slice %7 {offsets = [2, 0], sizes = [2, 384], strides = [1, 1]} : vector<16x384xf32> to vector<2x384xf32>
    %cst_18 = arith.constant dense<0.000000e+00> : vector<2x384xf32>
    %43 = tpu.matmul %40, %2, %cst_18 {dimension_numbers = #tpu.dot_dimension_numbers<[1], [0], [0], [1], [0, 0, 1, 1], [], []>} : vector<2x128xf32>, vector<128x384xf32>, vector<2x384xf32> -> vector<2x384xf32>
    %44 = vector.extract_strided_slice %42 {offsets = [0, 0], sizes = [2, 128], strides = [1, 1]} : vector<2x384xf32> to vector<2x128xf32>
    %45 = vector.extract_strided_slice %43 {offsets = [0, 0], sizes = [2, 128], strides = [1, 1]} : vector<2x384xf32> to vector<2x128xf32>
    %46 = arith.addf %44, %45 : vector<2x128xf32>
    %47 = arith.negf %46 : vector<2x128xf32>
    %48 = math.exp %47 : vector<2x128xf32>
    %cst_19 = arith.constant 1.000000e+00 : f32
    %49 = vector.broadcast %cst_19 : f32 to vector<2x128xf32>
    %50 = arith.addf %49, %48 : vector<2x128xf32>
    %51 = arith.divf %49, %50 : vector<2x128xf32>
    %52 = vector.extract_strided_slice %42 {offsets = [0, 128], sizes = [2, 128], strides = [1, 1]} : vector<2x384xf32> to vector<2x128xf32>
    %53 = vector.extract_strided_slice %43 {offsets = [0, 128], sizes = [2, 128], strides = [1, 1]} : vector<2x384xf32> to vector<2x128xf32>
    %54 = arith.addf %52, %53 : vector<2x128xf32>
    %55 = arith.negf %54 : vector<2x128xf32>
    %56 = math.exp %55 : vector<2x128xf32>
    %cst_20 = arith.constant 1.000000e+00 : f32
    %57 = vector.broadcast %cst_20 : f32 to vector<2x128xf32>
    %58 = arith.addf %57, %56 : vector<2x128xf32>
    %59 = arith.divf %57, %58 : vector<2x128xf32>
    %60 = vector.extract_strided_slice %42 {offsets = [0, 256], sizes = [2, 128], strides = [1, 1]} : vector<2x384xf32> to vector<2x128xf32>
    %61 = vector.extract_strided_slice %43 {offsets = [0, 256], sizes = [2, 128], strides = [1, 1]} : vector<2x384xf32> to vector<2x128xf32>
    %62 = arith.addf %61, %9 : vector<2x128xf32>
    %63 = arith.mulf %51, %62 : vector<2x128xf32>
    %64 = arith.addf %60, %63 : vector<2x128xf32>
    %65 = math.tanh %64 : vector<2x128xf32>
    %cst_21 = arith.constant 1.000000e+00 : f32
    %66 = vector.broadcast %cst_21 : f32 to vector<2x128xf32>
    %67 = arith.subf %66, %59 : vector<2x128xf32>
    %68 = arith.mulf %67, %65 : vector<2x128xf32>
    %69 = arith.mulf %59, %40 : vector<2x128xf32>
    %70 = arith.addf %68, %69 : vector<2x128xf32>
    %c2 = arith.constant 2 : index
    %c0_22 = arith.constant 0 : index
    %71 = vector.load %arg17[%c2, %c0_22] : memref<16x128xf32, #tpu.memory_space<vmem>>, vector<2x128xf32>
    tpu.vector_store %arg17[%c2, %c0_22], %70 {strides = array<i32>} : memref<16x128xf32, #tpu.memory_space<vmem>>, vector<2x128xf32>,
    %72 = vector.extract_strided_slice %7 {offsets = [4, 0], sizes = [2, 384], strides = [1, 1]} : vector<16x384xf32> to vector<2x384xf32>
    %cst_23 = arith.constant dense<0.000000e+00> : vector<2x384xf32>
    %73 = tpu.matmul %70, %2, %cst_23 {dimension_numbers = #tpu.dot_dimension_numbers<[1], [0], [0], [1], [0, 0, 1, 1], [], []>} : vector<2x128xf32>, vector<128x384xf32>, vector<2x384xf32> -> vector<2x384xf32>
    %74 = vector.extract_strided_slice %72 {offsets = [0, 0], sizes = [2, 128], strides = [1, 1]} : vector<2x384xf32> to vector<2x128xf32>
    %75 = vector.extract_strided_slice %73 {offsets = [0, 0], sizes = [2, 128], strides = [1, 1]} : vector<2x384xf32> to vector<2x128xf32>
    %76 = arith.addf %74, %75 : vector<2x128xf32>
    %77 = arith.negf %76 : vector<2x128xf32>
    %78 = math.exp %77 : vector<2x128xf32>
    %cst_24 = arith.constant 1.000000e+00 : f32
    %79 = vector.broadcast %cst_24 : f32 to vector<2x128xf32>
    %80 = arith.addf %79, %78 : vector<2x128xf32>
    %81 = arith.divf %79, %80 : vector<2x128xf32>
    %82 = vector.extract_strided_slice %72 {offsets = [0, 128], sizes = [2, 128], strides = [1, 1]} : vector<2x384xf32> to vector<2x128xf32>
    %83 = vector.extract_strided_slice %73 {offsets = [0, 128], sizes = [2, 128], strides = [1, 1]} : vector<2x384xf32> to vector<2x128xf32>
    %84 = arith.addf %82, %83 : vector<2x128xf32>
    %85 = arith.negf %84 : vector<2x128xf32>
    %86 = math.exp %85 : vector<2x128xf32>
    %cst_25 = arith.constant 1.000000e+00 : f32
    %87 = vector.broadcast %cst_25 : f32 to vector<2x128xf32>
    %88 = arith.addf %87, %86 : vector<2x128xf32>
    %89 = arith.divf %87, %88 : vector<2x128xf32>
    %90 = vector.extract_strided_slice %72 {offsets = [0, 256], sizes = [2, 128], strides = [1, 1]} : vector<2x384xf32> to vector<2x128xf32>
    %91 = vector.extract_strided_slice %73 {offsets = [0, 256], sizes = [2, 128], strides = [1, 1]} : vector<2x384xf32> to vector<2x128xf32>
    %92 = arith.addf %91, %9 : vector<2x128xf32>
    %93 = arith.mulf %81, %92 : vector<2x128xf32>
    %94 = arith.addf %90, %93 : vector<2x128xf32>
    %95 = math.tanh %94 : vector<2x128xf32>
    %cst_26 = arith.constant 1.000000e+00 : f32
    %96 = vector.broadcast %cst_26 : f32 to vector<2x128xf32>
    %97 = arith.subf %96, %89 : vector<2x128xf32>
    %98 = arith.mulf %97, %95 : vector<2x128xf32>
    %99 = arith.mulf %89, %70 : vector<2x128xf32>
    %100 = arith.addf %98, %99 : vector<2x128xf32>
    %c4 = arith.constant 4 : index
    %c0_27 = arith.constant 0 : index
    %101 = vector.load %arg17[%c4, %c0_27] : memref<16x128xf32, #tpu.memory_space<vmem>>, vector<2x128xf32>
    tpu.vector_store %arg17[%c4, %c0_27], %100 {strides = array<i32>} : memref<16x128xf32, #tpu.memory_space<vmem>>, vector<2x128xf32>,
    %102 = vector.extract_strided_slice %7 {offsets = [6, 0], sizes = [2, 384], strides = [1, 1]} : vector<16x384xf32> to vector<2x384xf32>
    %cst_28 = arith.constant dense<0.000000e+00> : vector<2x384xf32>
    %103 = tpu.matmul %100, %2, %cst_28 {dimension_numbers = #tpu.dot_dimension_numbers<[1], [0], [0], [1], [0, 0, 1, 1], [], []>} : vector<2x128xf32>, vector<128x384xf32>, vector<2x384xf32> -> vector<2x384xf32>
    %104 = vector.extract_strided_slice %102 {offsets = [0, 0], sizes = [2, 128], strides = [1, 1]} : vector<2x384xf32> to vector<2x128xf32>
    %105 = vector.extract_strided_slice %103 {offsets = [0, 0], sizes = [2, 128], strides = [1, 1]} : vector<2x384xf32> to vector<2x128xf32>
    %106 = arith.addf %104, %105 : vector<2x128xf32>
    %107 = arith.negf %106 : vector<2x128xf32>
    %108 = math.exp %107 : vector<2x128xf32>
    %cst_29 = arith.constant 1.000000e+00 : f32
    %109 = vector.broadcast %cst_29 : f32 to vector<2x128xf32>
    %110 = arith.addf %109, %108 : vector<2x128xf32>
    %111 = arith.divf %109, %110 : vector<2x128xf32>
    %112 = vector.extract_strided_slice %102 {offsets = [0, 128], sizes = [2, 128], strides = [1, 1]} : vector<2x384xf32> to vector<2x128xf32>
    %113 = vector.extract_strided_slice %103 {offsets = [0, 128], sizes = [2, 128], strides = [1, 1]} : vector<2x384xf32> to vector<2x128xf32>
    %114 = arith.addf %112, %113 : vector<2x128xf32>
    %115 = arith.negf %114 : vector<2x128xf32>
    %116 = math.exp %115 : vector<2x128xf32>
    %cst_30 = arith.constant 1.000000e+00 : f32
    %117 = vector.broadcast %cst_30 : f32 to vector<2x128xf32>
    %118 = arith.addf %117, %116 : vector<2x128xf32>
    %119 = arith.divf %117, %118 : vector<2x128xf32>
    %120 = vector.extract_strided_slice %102 {offsets = [0, 256], sizes = [2, 128], strides = [1, 1]} : vector<2x384xf32> to vector<2x128xf32>
    %121 = vector.extract_strided_slice %103 {offsets = [0, 256], sizes = [2, 128], strides = [1, 1]} : vector<2x384xf32> to vector<2x128xf32>
    %122 = arith.addf %121, %9 : vector<2x128xf32>
    %123 = arith.mulf %111, %122 : vector<2x128xf32>
    %124 = arith.addf %120, %123 : vector<2x128xf32>
    %125 = math.tanh %124 : vector<2x128xf32>
    %cst_31 = arith.constant 1.000000e+00 : f32
    %126 = vector.broadcast %cst_31 : f32 to vector<2x128xf32>
    %127 = arith.subf %126, %119 : vector<2x128xf32>
    %128 = arith.mulf %127, %125 : vector<2x128xf32>
    %129 = arith.mulf %119, %100 : vector<2x128xf32>
    %130 = arith.addf %128, %129 : vector<2x128xf32>
    %c6 = arith.constant 6 : index
    %c0_32 = arith.constant 0 : index
    %131 = vector.load %arg17[%c6, %c0_32] : memref<16x128xf32, #tpu.memory_space<vmem>>, vector<2x128xf32>
    tpu.vector_store %arg17[%c6, %c0_32], %130 {strides = array<i32>} : memref<16x128xf32, #tpu.memory_space<vmem>>, vector<2x128xf32>,
    %132 = vector.extract_strided_slice %7 {offsets = [8, 0], sizes = [2, 384], strides = [1, 1]} : vector<16x384xf32> to vector<2x384xf32>
    %cst_33 = arith.constant dense<0.000000e+00> : vector<2x384xf32>
    %133 = tpu.matmul %130, %2, %cst_33 {dimension_numbers = #tpu.dot_dimension_numbers<[1], [0], [0], [1], [0, 0, 1, 1], [], []>} : vector<2x128xf32>, vector<128x384xf32>, vector<2x384xf32> -> vector<2x384xf32>
    %134 = vector.extract_strided_slice %132 {offsets = [0, 0], sizes = [2, 128], strides = [1, 1]} : vector<2x384xf32> to vector<2x128xf32>
    %135 = vector.extract_strided_slice %133 {offsets = [0, 0], sizes = [2, 128], strides = [1, 1]} : vector<2x384xf32> to vector<2x128xf32>
    %136 = arith.addf %134, %135 : vector<2x128xf32>
    %137 = arith.negf %136 : vector<2x128xf32>
    %138 = math.exp %137 : vector<2x128xf32>
    %cst_34 = arith.constant 1.000000e+00 : f32
    %139 = vector.broadcast %cst_34 : f32 to vector<2x128xf32>
    %140 = arith.addf %139, %138 : vector<2x128xf32>
    %141 = arith.divf %139, %140 : vector<2x128xf32>
    %142 = vector.extract_strided_slice %132 {offsets = [0, 128], sizes = [2, 128], strides = [1, 1]} : vector<2x384xf32> to vector<2x128xf32>
    %143 = vector.extract_strided_slice %133 {offsets = [0, 128], sizes = [2, 128], strides = [1, 1]} : vector<2x384xf32> to vector<2x128xf32>
    %144 = arith.addf %142, %143 : vector<2x128xf32>
    %145 = arith.negf %144 : vector<2x128xf32>
    %146 = math.exp %145 : vector<2x128xf32>
    %cst_35 = arith.constant 1.000000e+00 : f32
    %147 = vector.broadcast %cst_35 : f32 to vector<2x128xf32>
    %148 = arith.addf %147, %146 : vector<2x128xf32>
    %149 = arith.divf %147, %148 : vector<2x128xf32>
    %150 = vector.extract_strided_slice %132 {offsets = [0, 256], sizes = [2, 128], strides = [1, 1]} : vector<2x384xf32> to vector<2x128xf32>
    %151 = vector.extract_strided_slice %133 {offsets = [0, 256], sizes = [2, 128], strides = [1, 1]} : vector<2x384xf32> to vector<2x128xf32>
    %152 = arith.addf %151, %9 : vector<2x128xf32>
    %153 = arith.mulf %141, %152 : vector<2x128xf32>
    %154 = arith.addf %150, %153 : vector<2x128xf32>
    %155 = math.tanh %154 : vector<2x128xf32>
    %cst_36 = arith.constant 1.000000e+00 : f32
    %156 = vector.broadcast %cst_36 : f32 to vector<2x128xf32>
    %157 = arith.subf %156, %149 : vector<2x128xf32>
    %158 = arith.mulf %157, %155 : vector<2x128xf32>
    %159 = arith.mulf %149, %130 : vector<2x128xf32>
    %160 = arith.addf %158, %159 : vector<2x128xf32>
    %c8 = arith.constant 8 : index
    %c0_37 = arith.constant 0 : index
    %161 = vector.load %arg17[%c8, %c0_37] : memref<16x128xf32, #tpu.memory_space<vmem>>, vector<2x128xf32>
    tpu.vector_store %arg17[%c8, %c0_37], %160 {strides = array<i32>} : memref<16x128xf32, #tpu.memory_space<vmem>>, vector<2x128xf32>,
    %162 = vector.extract_strided_slice %7 {offsets = [10, 0], sizes = [2, 384], strides = [1, 1]} : vector<16x384xf32> to vector<2x384xf32>
    %cst_38 = arith.constant dense<0.000000e+00> : vector<2x384xf32>
    %163 = tpu.matmul %160, %2, %cst_38 {dimension_numbers = #tpu.dot_dimension_numbers<[1], [0], [0], [1], [0, 0, 1, 1], [], []>} : vector<2x128xf32>, vector<128x384xf32>, vector<2x384xf32> -> vector<2x384xf32>
    %164 = vector.extract_strided_slice %162 {offsets = [0, 0], sizes = [2, 128], strides = [1, 1]} : vector<2x384xf32> to vector<2x128xf32>
    %165 = vector.extract_strided_slice %163 {offsets = [0, 0], sizes = [2, 128], strides = [1, 1]} : vector<2x384xf32> to vector<2x128xf32>
    %166 = arith.addf %164, %165 : vector<2x128xf32>
    %167 = arith.negf %166 : vector<2x128xf32>
    %168 = math.exp %167 : vector<2x128xf32>
    %cst_39 = arith.constant 1.000000e+00 : f32
    %169 = vector.broadcast %cst_39 : f32 to vector<2x128xf32>
    %170 = arith.addf %169, %168 : vector<2x128xf32>
    %171 = arith.divf %169, %170 : vector<2x128xf32>
    %172 = vector.extract_strided_slice %162 {offsets = [0, 128], sizes = [2, 128], strides = [1, 1]} : vector<2x384xf32> to vector<2x128xf32>
    %173 = vector.extract_strided_slice %163 {offsets = [0, 128], sizes = [2, 128], strides = [1, 1]} : vector<2x384xf32> to vector<2x128xf32>
    %174 = arith.addf %172, %173 : vector<2x128xf32>
    %175 = arith.negf %174 : vector<2x128xf32>
    %176 = math.exp %175 : vector<2x128xf32>
    %cst_40 = arith.constant 1.000000e+00 : f32
    %177 = vector.broadcast %cst_40 : f32 to vector<2x128xf32>
    %178 = arith.addf %177, %176 : vector<2x128xf32>
    %179 = arith.divf %177, %178 : vector<2x128xf32>
    %180 = vector.extract_strided_slice %162 {offsets = [0, 256], sizes = [2, 128], strides = [1, 1]} : vector<2x384xf32> to vector<2x128xf32>
    %181 = vector.extract_strided_slice %163 {offsets = [0, 256], sizes = [2, 128], strides = [1, 1]} : vector<2x384xf32> to vector<2x128xf32>
    %182 = arith.addf %181, %9 : vector<2x128xf32>
    %183 = arith.mulf %171, %182 : vector<2x128xf32>
    %184 = arith.addf %180, %183 : vector<2x128xf32>
    %185 = math.tanh %184 : vector<2x128xf32>
    %cst_41 = arith.constant 1.000000e+00 : f32
    %186 = vector.broadcast %cst_41 : f32 to vector<2x128xf32>
    %187 = arith.subf %186, %179 : vector<2x128xf32>
    %188 = arith.mulf %187, %185 : vector<2x128xf32>
    %189 = arith.mulf %179, %160 : vector<2x128xf32>
    %190 = arith.addf %188, %189 : vector<2x128xf32>
    %c10 = arith.constant 10 : index
    %c0_42 = arith.constant 0 : index
    %191 = vector.load %arg17[%c10, %c0_42] : memref<16x128xf32, #tpu.memory_space<vmem>>, vector<2x128xf32>
    tpu.vector_store %arg17[%c10, %c0_42], %190 {strides = array<i32>} : memref<16x128xf32, #tpu.memory_space<vmem>>, vector<2x128xf32>,
    %192 = vector.extract_strided_slice %7 {offsets = [12, 0], sizes = [2, 384], strides = [1, 1]} : vector<16x384xf32> to vector<2x384xf32>
    %cst_43 = arith.constant dense<0.000000e+00> : vector<2x384xf32>
    %193 = tpu.matmul %190, %2, %cst_43 {dimension_numbers = #tpu.dot_dimension_numbers<[1], [0], [0], [1], [0, 0, 1, 1], [], []>} : vector<2x128xf32>, vector<128x384xf32>, vector<2x384xf32> -> vector<2x384xf32>
    %194 = vector.extract_strided_slice %192 {offsets = [0, 0], sizes = [2, 128], strides = [1, 1]} : vector<2x384xf32> to vector<2x128xf32>
    %195 = vector.extract_strided_slice %193 {offsets = [0, 0], sizes = [2, 128], strides = [1, 1]} : vector<2x384xf32> to vector<2x128xf32>
    %196 = arith.addf %194, %195 : vector<2x128xf32>
    %197 = arith.negf %196 : vector<2x128xf32>
    %198 = math.exp %197 : vector<2x128xf32>
    %cst_44 = arith.constant 1.000000e+00 : f32
    %199 = vector.broadcast %cst_44 : f32 to vector<2x128xf32>
    %200 = arith.addf %199, %198 : vector<2x128xf32>
    %201 = arith.divf %199, %200 : vector<2x128xf32>
    %202 = vector.extract_strided_slice %192 {offsets = [0, 128], sizes = [2, 128], strides = [1, 1]} : vector<2x384xf32> to vector<2x128xf32>
    %203 = vector.extract_strided_slice %193 {offsets = [0, 128], sizes = [2, 128], strides = [1, 1]} : vector<2x384xf32> to vector<2x128xf32>
    %204 = arith.addf %202, %203 : vector<2x128xf32>
    %205 = arith.negf %204 : vector<2x128xf32>
    %206 = math.exp %205 : vector<2x128xf32>
    %cst_45 = arith.constant 1.000000e+00 : f32
    %207 = vector.broadcast %cst_45 : f32 to vector<2x128xf32>
    %208 = arith.addf %207, %206 : vector<2x128xf32>
    %209 = arith.divf %207, %208 : vector<2x128xf32>
    %210 = vector.extract_strided_slice %192 {offsets = [0, 256], sizes = [2, 128], strides = [1, 1]} : vector<2x384xf32> to vector<2x128xf32>
    %211 = vector.extract_strided_slice %193 {offsets = [0, 256], sizes = [2, 128], strides = [1, 1]} : vector<2x384xf32> to vector<2x128xf32>
    %212 = arith.addf %211, %9 : vector<2x128xf32>
    %213 = arith.mulf %201, %212 : vector<2x128xf32>
    %214 = arith.addf %210, %213 : vector<2x128xf32>
    %215 = math.tanh %214 : vector<2x128xf32>
    %cst_46 = arith.constant 1.000000e+00 : f32
    %216 = vector.broadcast %cst_46 : f32 to vector<2x128xf32>
    %217 = arith.subf %216, %209 : vector<2x128xf32>
    %218 = arith.mulf %217, %215 : vector<2x128xf32>
    %219 = arith.mulf %209, %190 : vector<2x128xf32>
    %220 = arith.addf %218, %219 : vector<2x128xf32>
    %c12 = arith.constant 12 : index
    %c0_47 = arith.constant 0 : index
    %221 = vector.load %arg17[%c12, %c0_47] : memref<16x128xf32, #tpu.memory_space<vmem>>, vector<2x128xf32>
    tpu.vector_store %arg17[%c12, %c0_47], %220 {strides = array<i32>} : memref<16x128xf32, #tpu.memory_space<vmem>>, vector<2x128xf32>,
    %222 = vector.extract_strided_slice %7 {offsets = [14, 0], sizes = [2, 384], strides = [1, 1]} : vector<16x384xf32> to vector<2x384xf32>
    %cst_48 = arith.constant dense<0.000000e+00> : vector<2x384xf32>
    %223 = tpu.matmul %220, %2, %cst_48 {dimension_numbers = #tpu.dot_dimension_numbers<[1], [0], [0], [1], [0, 0, 1, 1], [], []>} : vector<2x128xf32>, vector<128x384xf32>, vector<2x384xf32> -> vector<2x384xf32>
    %224 = vector.extract_strided_slice %222 {offsets = [0, 0], sizes = [2, 128], strides = [1, 1]} : vector<2x384xf32> to vector<2x128xf32>
    %225 = vector.extract_strided_slice %223 {offsets = [0, 0], sizes = [2, 128], strides = [1, 1]} : vector<2x384xf32> to vector<2x128xf32>
    %226 = arith.addf %224, %225 : vector<2x128xf32>
    %227 = arith.negf %226 : vector<2x128xf32>
    %228 = math.exp %227 : vector<2x128xf32>
    %cst_49 = arith.constant 1.000000e+00 : f32
    %229 = vector.broadcast %cst_49 : f32 to vector<2x128xf32>
    %230 = arith.addf %229, %228 : vector<2x128xf32>
    %231 = arith.divf %229, %230 : vector<2x128xf32>
    %232 = vector.extract_strided_slice %222 {offsets = [0, 128], sizes = [2, 128], strides = [1, 1]} : vector<2x384xf32> to vector<2x128xf32>
    %233 = vector.extract_strided_slice %223 {offsets = [0, 128], sizes = [2, 128], strides = [1, 1]} : vector<2x384xf32> to vector<2x128xf32>
    %234 = arith.addf %232, %233 : vector<2x128xf32>
    %235 = arith.negf %234 : vector<2x128xf32>
    %236 = math.exp %235 : vector<2x128xf32>
    %cst_50 = arith.constant 1.000000e+00 : f32
    %237 = vector.broadcast %cst_50 : f32 to vector<2x128xf32>
    %238 = arith.addf %237, %236 : vector<2x128xf32>
    %239 = arith.divf %237, %238 : vector<2x128xf32>
    %240 = vector.extract_strided_slice %222 {offsets = [0, 256], sizes = [2, 128], strides = [1, 1]} : vector<2x384xf32> to vector<2x128xf32>
    %241 = vector.extract_strided_slice %223 {offsets = [0, 256], sizes = [2, 128], strides = [1, 1]} : vector<2x384xf32> to vector<2x128xf32>
    %242 = arith.addf %241, %9 : vector<2x128xf32>
    %243 = arith.mulf %231, %242 : vector<2x128xf32>
    %244 = arith.addf %240, %243 : vector<2x128xf32>
    %245 = math.tanh %244 : vector<2x128xf32>
    %cst_51 = arith.constant 1.000000e+00 : f32
    %246 = vector.broadcast %cst_51 : f32 to vector<2x128xf32>
    %247 = arith.subf %246, %239 : vector<2x128xf32>
    %248 = arith.mulf %247, %245 : vector<2x128xf32>
    %249 = arith.mulf %239, %220 : vector<2x128xf32>
    %250 = arith.addf %248, %249 : vector<2x128xf32>
    %c14 = arith.constant 14 : index
    %c0_52 = arith.constant 0 : index
    %251 = vector.load %arg17[%c14, %c0_52] : memref<16x128xf32, #tpu.memory_space<vmem>>, vector<2x128xf32>
    tpu.vector_store %arg17[%c14, %c0_52], %250 {strides = array<i32>} : memref<16x128xf32, #tpu.memory_space<vmem>>, vector<2x128xf32>,
    %c0_53 = arith.constant 0 : index
    %c0_54 = arith.constant 0 : index
    %c0_55 = arith.constant 0 : index
    %252 = vector.load %arg16[%c0_53, %c0_54, %c0_55] : memref<2x2x128xf32, #tpu.memory_space<vmem>>, vector<1x2x128xf32>
    %253 = vector.shape_cast %252 : vector<1x2x128xf32> to vector<2x128xf32>
    %254 = vector.shape_cast %250 : vector<2x128xf32> to vector<1x2x128xf32>
    tpu.vector_store %arg16[%c0_53, %c0_54, %c0_55], %254 {strides = array<i32>} : memref<2x2x128xf32, #tpu.memory_space<vmem>>, vector<1x2x128xf32>,
    %c0_56 = arith.constant 0 : index
    %c0_57 = arith.constant 0 : index
    %255 = vector.load %arg17[%c0_56, %c0_57] : memref<16x128xf32, #tpu.memory_space<vmem>>, vector<16x128xf32>
    %c0_58 = arith.constant 0 : index
    %c0_59 = arith.constant 0 : index
    %256 = vector.load %arg6[%c0_58, %c0_59] : memref<128x384xf32, #tpu.memory_space<vmem>>, vector<128x384xf32>
    %c0_60 = arith.constant 0 : index
    %c0_61 = arith.constant 0 : index
    %257 = vector.load %arg7[%c0_60, %c0_61] : memref<128x384xf32, #tpu.memory_space<vmem>>, vector<128x384xf32>
    %c0_62 = arith.constant 0 : index
    %c0_63 = arith.constant 0 : index
    %258 = vector.load %arg8[%c0_62, %c0_63] : memref<1x384xf32, #tpu.memory_space<vmem>>, vector<1x384xf32>
    %c0_64 = arith.constant 0 : index
    %c0_65 = arith.constant 0 : index
    %259 = vector.load %arg9[%c0_64, %c0_65] : memref<1x128xf32, #tpu.memory_space<vmem>>, vector<1x128xf32>
    %cst_66 = arith.constant dense<0.000000e+00> : vector<16x384xf32>
    %260 = tpu.matmul %255, %256, %cst_66 {dimension_numbers = #tpu.dot_dimension_numbers<[1], [0], [0], [1], [0, 0, 1, 1], [], []>} : vector<16x128xf32>, vector<128x384xf32>, vector<16x384xf32> -> vector<16x384xf32>
    %261 = vector.broadcast %258 : vector<1x384xf32> to vector<16x384xf32>
    %262 = arith.addf %260, %261 : vector<16x384xf32>
    %263 = vector.shape_cast %259 : vector<1x128xf32> to vector<1x128xf32>
    %264 = vector.broadcast %263 : vector<1x128xf32> to vector<2x128xf32>
    %c1 = arith.constant 1 : index
    %c0_67 = arith.constant 0 : index
    %c0_68 = arith.constant 0 : index
    %265 = vector.load %arg1[%c1, %c0_67, %c0_68] : memref<2x2x128xf32, #tpu.memory_space<vmem>>, vector<1x2x128xf32>
    %266 = vector.shape_cast %265 : vector<1x2x128xf32> to vector<2x128xf32>
    %267 = vector.extract_strided_slice %262 {offsets = [0, 0], sizes = [2, 384], strides = [1, 1]} : vector<16x384xf32> to vector<2x384xf32>
    %cst_69 = arith.constant dense<0.000000e+00> : vector<2x384xf32>
    %268 = tpu.matmul %266, %257, %cst_69 {dimension_numbers = #tpu.dot_dimension_numbers<[1], [0], [0], [1], [0, 0, 1, 1], [], []>} : vector<2x128xf32>, vector<128x384xf32>, vector<2x384xf32> -> vector<2x384xf32>
    %269 = vector.extract_strided_slice %267 {offsets = [0, 0], sizes = [2, 128], strides = [1, 1]} : vector<2x384xf32> to vector<2x128xf32>
    %270 = vector.extract_strided_slice %268 {offsets = [0, 0], sizes = [2, 128], strides = [1, 1]} : vector<2x384xf32> to vector<2x128xf32>
    %271 = arith.addf %269, %270 : vector<2x128xf32>
    %272 = arith.negf %271 : vector<2x128xf32>
    %273 = math.exp %272 : vector<2x128xf32>
    %cst_70 = arith.constant 1.000000e+00 : f32
    %274 = vector.broadcast %cst_70 : f32 to vector<2x128xf32>
    %275 = arith.addf %274, %273 : vector<2x128xf32>
    %276 = arith.divf %274, %275 : vector<2x128xf32>
    %277 = vector.extract_strided_slice %267 {offsets = [0, 128], sizes = [2, 128], strides = [1, 1]} : vector<2x384xf32> to vector<2x128xf32>
    %278 = vector.extract_strided_slice %268 {offsets = [0, 128], sizes = [2, 128], strides = [1, 1]} : vector<2x384xf32> to vector<2x128xf32>
    %279 = arith.addf %277, %278 : vector<2x128xf32>
    %280 = arith.negf %279 : vector<2x128xf32>
    %281 = math.exp %280 : vector<2x128xf32>
    %cst_71 = arith.constant 1.000000e+00 : f32
    %282 = vector.broadcast %cst_71 : f32 to vector<2x128xf32>
    %283 = arith.addf %282, %281 : vector<2x128xf32>
    %284 = arith.divf %282, %283 : vector<2x128xf32>
    %285 = vector.extract_strided_slice %267 {offsets = [0, 256], sizes = [2, 128], strides = [1, 1]} : vector<2x384xf32> to vector<2x128xf32>
    %286 = vector.extract_strided_slice %268 {offsets = [0, 256], sizes = [2, 128], strides = [1, 1]} : vector<2x384xf32> to vector<2x128xf32>
    %287 = arith.addf %286, %264 : vector<2x128xf32>
    %288 = arith.mulf %276, %287 : vector<2x128xf32>
    %289 = arith.addf %285, %288 : vector<2x128xf32>
    %290 = math.tanh %289 : vector<2x128xf32>
    %cst_72 = arith.constant 1.000000e+00 : f32
    %291 = vector.broadcast %cst_72 : f32 to vector<2x128xf32>
    %292 = arith.subf %291, %284 : vector<2x128xf32>
    %293 = arith.mulf %292, %290 : vector<2x128xf32>
    %294 = arith.mulf %284, %266 : vector<2x128xf32>
    %295 = arith.addf %293, %294 : vector<2x128xf32>
    %296 = vector.extract_strided_slice %262 {offsets = [2, 0], sizes = [2, 384], strides = [1, 1]} : vector<16x384xf32> to vector<2x384xf32>
    %cst_73 = arith.constant dense<0.000000e+00> : vector<2x384xf32>
    %297 = tpu.matmul %295, %257, %cst_73 {dimension_numbers = #tpu.dot_dimension_numbers<[1], [0], [0], [1], [0, 0, 1, 1], [], []>} : vector<2x128xf32>, vector<128x384xf32>, vector<2x384xf32> -> vector<2x384xf32>
    %298 = vector.extract_strided_slice %296 {offsets = [0, 0], sizes = [2, 128], strides = [1, 1]} : vector<2x384xf32> to vector<2x128xf32>
    %299 = vector.extract_strided_slice %297 {offsets = [0, 0], sizes = [2, 128], strides = [1, 1]} : vector<2x384xf32> to vector<2x128xf32>
    %300 = arith.addf %298, %299 : vector<2x128xf32>
    %301 = arith.negf %300 : vector<2x128xf32>
    %302 = math.exp %301 : vector<2x128xf32>
    %cst_74 = arith.constant 1.000000e+00 : f32
    %303 = vector.broadcast %cst_74 : f32 to vector<2x128xf32>
    %304 = arith.addf %303, %302 : vector<2x128xf32>
    %305 = arith.divf %303, %304 : vector<2x128xf32>
    %306 = vector.extract_strided_slice %296 {offsets = [0, 128], sizes = [2, 128], strides = [1, 1]} : vector<2x384xf32> to vector<2x128xf32>
    %307 = vector.extract_strided_slice %297 {offsets = [0, 128], sizes = [2, 128], strides = [1, 1]} : vector<2x384xf32> to vector<2x128xf32>
    %308 = arith.addf %306, %307 : vector<2x128xf32>
    %309 = arith.negf %308 : vector<2x128xf32>
    %310 = math.exp %309 : vector<2x128xf32>
    %cst_75 = arith.constant 1.000000e+00 : f32
    %311 = vector.broadcast %cst_75 : f32 to vector<2x128xf32>
    %312 = arith.addf %311, %310 : vector<2x128xf32>
    %313 = arith.divf %311, %312 : vector<2x128xf32>
    %314 = vector.extract_strided_slice %296 {offsets = [0, 256], sizes = [2, 128], strides = [1, 1]} : vector<2x384xf32> to vector<2x128xf32>
    %315 = vector.extract_strided_slice %297 {offsets = [0, 256], sizes = [2, 128], strides = [1, 1]} : vector<2x384xf32> to vector<2x128xf32>
    %316 = arith.addf %315, %264 : vector<2x128xf32>
    %317 = arith.mulf %305, %316 : vector<2x128xf32>
    %318 = arith.addf %314, %317 : vector<2x128xf32>
    %319 = math.tanh %318 : vector<2x128xf32>
    %cst_76 = arith.constant 1.000000e+00 : f32
    %320 = vector.broadcast %cst_76 : f32 to vector<2x128xf32>
    %321 = arith.subf %320, %313 : vector<2x128xf32>
    %322 = arith.mulf %321, %319 : vector<2x128xf32>
    %323 = arith.mulf %313, %295 : vector<2x128xf32>
    %324 = arith.addf %322, %323 : vector<2x128xf32>
    %325 = vector.extract_strided_slice %262 {offsets = [4, 0], sizes = [2, 384], strides = [1, 1]} : vector<16x384xf32> to vector<2x384xf32>
    %cst_77 = arith.constant dense<0.000000e+00> : vector<2x384xf32>
    %326 = tpu.matmul %324, %257, %cst_77 {dimension_numbers = #tpu.dot_dimension_numbers<[1], [0], [0], [1], [0, 0, 1, 1], [], []>} : vector<2x128xf32>, vector<128x384xf32>, vector<2x384xf32> -> vector<2x384xf32>
    %327 = vector.extract_strided_slice %325 {offsets = [0, 0], sizes = [2, 128], strides = [1, 1]} : vector<2x384xf32> to vector<2x128xf32>
    %328 = vector.extract_strided_slice %326 {offsets = [0, 0], sizes = [2, 128], strides = [1, 1]} : vector<2x384xf32> to vector<2x128xf32>
    %329 = arith.addf %327, %328 : vector<2x128xf32>
    %330 = arith.negf %329 : vector<2x128xf32>
    %331 = math.exp %330 : vector<2x128xf32>
    %cst_78 = arith.constant 1.000000e+00 : f32
    %332 = vector.broadcast %cst_78 : f32 to vector<2x128xf32>
    %333 = arith.addf %332, %331 : vector<2x128xf32>
    %334 = arith.divf %332, %333 : vector<2x128xf32>
    %335 = vector.extract_strided_slice %325 {offsets = [0, 128], sizes = [2, 128], strides = [1, 1]} : vector<2x384xf32> to vector<2x128xf32>
    %336 = vector.extract_strided_slice %326 {offsets = [0, 128], sizes = [2, 128], strides = [1, 1]} : vector<2x384xf32> to vector<2x128xf32>
    %337 = arith.addf %335, %336 : vector<2x128xf32>
    %338 = arith.negf %337 : vector<2x128xf32>
    %339 = math.exp %338 : vector<2x128xf32>
    %cst_79 = arith.constant 1.000000e+00 : f32
    %340 = vector.broadcast %cst_79 : f32 to vector<2x128xf32>
    %341 = arith.addf %340, %339 : vector<2x128xf32>
    %342 = arith.divf %340, %341 : vector<2x128xf32>
    %343 = vector.extract_strided_slice %325 {offsets = [0, 256], sizes = [2, 128], strides = [1, 1]} : vector<2x384xf32> to vector<2x128xf32>
    %344 = vector.extract_strided_slice %326 {offsets = [0, 256], sizes = [2, 128], strides = [1, 1]} : vector<2x384xf32> to vector<2x128xf32>
    %345 = arith.addf %344, %264 : vector<2x128xf32>
    %346 = arith.mulf %334, %345 : vector<2x128xf32>
    %347 = arith.addf %343, %346 : vector<2x128xf32>
    %348 = math.tanh %347 : vector<2x128xf32>
    %cst_80 = arith.constant 1.000000e+00 : f32
    %349 = vector.broadcast %cst_80 : f32 to vector<2x128xf32>
    %350 = arith.subf %349, %342 : vector<2x128xf32>
    %351 = arith.mulf %350, %348 : vector<2x128xf32>
    %352 = arith.mulf %342, %324 : vector<2x128xf32>
    %353 = arith.addf %351, %352 : vector<2x128xf32>
    %354 = vector.extract_strided_slice %262 {offsets = [6, 0], sizes = [2, 384], strides = [1, 1]} : vector<16x384xf32> to vector<2x384xf32>
    %cst_81 = arith.constant dense<0.000000e+00> : vector<2x384xf32>
    %355 = tpu.matmul %353, %257, %cst_81 {dimension_numbers = #tpu.dot_dimension_numbers<[1], [0], [0], [1], [0, 0, 1, 1], [], []>} : vector<2x128xf32>, vector<128x384xf32>, vector<2x384xf32> -> vector<2x384xf32>
    %356 = vector.extract_strided_slice %354 {offsets = [0, 0], sizes = [2, 128], strides = [1, 1]} : vector<2x384xf32> to vector<2x128xf32>
    %357 = vector.extract_strided_slice %355 {offsets = [0, 0], sizes = [2, 128], strides = [1, 1]} : vector<2x384xf32> to vector<2x128xf32>
    %358 = arith.addf %356, %357 : vector<2x128xf32>
    %359 = arith.negf %358 : vector<2x128xf32>
    %360 = math.exp %359 : vector<2x128xf32>
    %cst_82 = arith.constant 1.000000e+00 : f32
    %361 = vector.broadcast %cst_82 : f32 to vector<2x128xf32>
    %362 = arith.addf %361, %360 : vector<2x128xf32>
    %363 = arith.divf %361, %362 : vector<2x128xf32>
    %364 = vector.extract_strided_slice %354 {offsets = [0, 128], sizes = [2, 128], strides = [1, 1]} : vector<2x384xf32> to vector<2x128xf32>
    %365 = vector.extract_strided_slice %355 {offsets = [0, 128], sizes = [2, 128], strides = [1, 1]} : vector<2x384xf32> to vector<2x128xf32>
    %366 = arith.addf %364, %365 : vector<2x128xf32>
    %367 = arith.negf %366 : vector<2x128xf32>
    %368 = math.exp %367 : vector<2x128xf32>
    %cst_83 = arith.constant 1.000000e+00 : f32
    %369 = vector.broadcast %cst_83 : f32 to vector<2x128xf32>
    %370 = arith.addf %369, %368 : vector<2x128xf32>
    %371 = arith.divf %369, %370 : vector<2x128xf32>
    %372 = vector.extract_strided_slice %354 {offsets = [0, 256], sizes = [2, 128], strides = [1, 1]} : vector<2x384xf32> to vector<2x128xf32>
    %373 = vector.extract_strided_slice %355 {offsets = [0, 256], sizes = [2, 128], strides = [1, 1]} : vector<2x384xf32> to vector<2x128xf32>
    %374 = arith.addf %373, %264 : vector<2x128xf32>
    %375 = arith.mulf %363, %374 : vector<2x128xf32>
    %376 = arith.addf %372, %375 : vector<2x128xf32>
    %377 = math.tanh %376 : vector<2x128xf32>
    %cst_84 = arith.constant 1.000000e+00 : f32
    %378 = vector.broadcast %cst_84 : f32 to vector<2x128xf32>
    %379 = arith.subf %378, %371 : vector<2x128xf32>
    %380 = arith.mulf %379, %377 : vector<2x128xf32>
    %381 = arith.mulf %371, %353 : vector<2x128xf32>
    %382 = arith.addf %380, %381 : vector<2x128xf32>
    %383 = vector.extract_strided_slice %262 {offsets = [8, 0], sizes = [2, 384], strides = [1, 1]} : vector<16x384xf32> to vector<2x384xf32>
    %cst_85 = arith.constant dense<0.000000e+00> : vector<2x384xf32>
    %384 = tpu.matmul %382, %257, %cst_85 {dimension_numbers = #tpu.dot_dimension_numbers<[1], [0], [0], [1], [0, 0, 1, 1], [], []>} : vector<2x128xf32>, vector<128x384xf32>, vector<2x384xf32> -> vector<2x384xf32>
    %385 = vector.extract_strided_slice %383 {offsets = [0, 0], sizes = [2, 128], strides = [1, 1]} : vector<2x384xf32> to vector<2x128xf32>
    %386 = vector.extract_strided_slice %384 {offsets = [0, 0], sizes = [2, 128], strides = [1, 1]} : vector<2x384xf32> to vector<2x128xf32>
    %387 = arith.addf %385, %386 : vector<2x128xf32>
    %388 = arith.negf %387 : vector<2x128xf32>
    %389 = math.exp %388 : vector<2x128xf32>
    %cst_86 = arith.constant 1.000000e+00 : f32
    %390 = vector.broadcast %cst_86 : f32 to vector<2x128xf32>
    %391 = arith.addf %390, %389 : vector<2x128xf32>
    %392 = arith.divf %390, %391 : vector<2x128xf32>
    %393 = vector.extract_strided_slice %383 {offsets = [0, 128], sizes = [2, 128], strides = [1, 1]} : vector<2x384xf32> to vector<2x128xf32>
    %394 = vector.extract_strided_slice %384 {offsets = [0, 128], sizes = [2, 128], strides = [1, 1]} : vector<2x384xf32> to vector<2x128xf32>
    %395 = arith.addf %393, %394 : vector<2x128xf32>
    %396 = arith.negf %395 : vector<2x128xf32>
    %397 = math.exp %396 : vector<2x128xf32>
    %cst_87 = arith.constant 1.000000e+00 : f32
    %398 = vector.broadcast %cst_87 : f32 to vector<2x128xf32>
    %399 = arith.addf %398, %397 : vector<2x128xf32>
    %400 = arith.divf %398, %399 : vector<2x128xf32>
    %401 = vector.extract_strided_slice %383 {offsets = [0, 256], sizes = [2, 128], strides = [1, 1]} : vector<2x384xf32> to vector<2x128xf32>
    %402 = vector.extract_strided_slice %384 {offsets = [0, 256], sizes = [2, 128], strides = [1, 1]} : vector<2x384xf32> to vector<2x128xf32>
    %403 = arith.addf %402, %264 : vector<2x128xf32>
    %404 = arith.mulf %392, %403 : vector<2x128xf32>
    %405 = arith.addf %401, %404 : vector<2x128xf32>
    %406 = math.tanh %405 : vector<2x128xf32>
    %cst_88 = arith.constant 1.000000e+00 : f32
    %407 = vector.broadcast %cst_88 : f32 to vector<2x128xf32>
    %408 = arith.subf %407, %400 : vector<2x128xf32>
    %409 = arith.mulf %408, %406 : vector<2x128xf32>
    %410 = arith.mulf %400, %382 : vector<2x128xf32>
    %411 = arith.addf %409, %410 : vector<2x128xf32>
    %412 = vector.extract_strided_slice %262 {offsets = [10, 0], sizes = [2, 384], strides = [1, 1]} : vector<16x384xf32> to vector<2x384xf32>
    %cst_89 = arith.constant dense<0.000000e+00> : vector<2x384xf32>
    %413 = tpu.matmul %411, %257, %cst_89 {dimension_numbers = #tpu.dot_dimension_numbers<[1], [0], [0], [1], [0, 0, 1, 1], [], []>} : vector<2x128xf32>, vector<128x384xf32>, vector<2x384xf32> -> vector<2x384xf32>
    %414 = vector.extract_strided_slice %412 {offsets = [0, 0], sizes = [2, 128], strides = [1, 1]} : vector<2x384xf32> to vector<2x128xf32>
    %415 = vector.extract_strided_slice %413 {offsets = [0, 0], sizes = [2, 128], strides = [1, 1]} : vector<2x384xf32> to vector<2x128xf32>
    %416 = arith.addf %414, %415 : vector<2x128xf32>
    %417 = arith.negf %416 : vector<2x128xf32>
    %418 = math.exp %417 : vector<2x128xf32>
    %cst_90 = arith.constant 1.000000e+00 : f32
    %419 = vector.broadcast %cst_90 : f32 to vector<2x128xf32>
    %420 = arith.addf %419, %418 : vector<2x128xf32>
    %421 = arith.divf %419, %420 : vector<2x128xf32>
    %422 = vector.extract_strided_slice %412 {offsets = [0, 128], sizes = [2, 128], strides = [1, 1]} : vector<2x384xf32> to vector<2x128xf32>
    %423 = vector.extract_strided_slice %413 {offsets = [0, 128], sizes = [2, 128], strides = [1, 1]} : vector<2x384xf32> to vector<2x128xf32>
    %424 = arith.addf %422, %423 : vector<2x128xf32>
    %425 = arith.negf %424 : vector<2x128xf32>
    %426 = math.exp %425 : vector<2x128xf32>
    %cst_91 = arith.constant 1.000000e+00 : f32
    %427 = vector.broadcast %cst_91 : f32 to vector<2x128xf32>
    %428 = arith.addf %427, %426 : vector<2x128xf32>
    %429 = arith.divf %427, %428 : vector<2x128xf32>
    %430 = vector.extract_strided_slice %412 {offsets = [0, 256], sizes = [2, 128], strides = [1, 1]} : vector<2x384xf32> to vector<2x128xf32>
    %431 = vector.extract_strided_slice %413 {offsets = [0, 256], sizes = [2, 128], strides = [1, 1]} : vector<2x384xf32> to vector<2x128xf32>
    %432 = arith.addf %431, %264 : vector<2x128xf32>
    %433 = arith.mulf %421, %432 : vector<2x128xf32>
    %434 = arith.addf %430, %433 : vector<2x128xf32>
    %435 = math.tanh %434 : vector<2x128xf32>
    %cst_92 = arith.constant 1.000000e+00 : f32
    %436 = vector.broadcast %cst_92 : f32 to vector<2x128xf32>
    %437 = arith.subf %436, %429 : vector<2x128xf32>
    %438 = arith.mulf %437, %435 : vector<2x128xf32>
    %439 = arith.mulf %429, %411 : vector<2x128xf32>
    %440 = arith.addf %438, %439 : vector<2x128xf32>
    %441 = vector.extract_strided_slice %262 {offsets = [12, 0], sizes = [2, 384], strides = [1, 1]} : vector<16x384xf32> to vector<2x384xf32>
    %cst_93 = arith.constant dense<0.000000e+00> : vector<2x384xf32>
    %442 = tpu.matmul %440, %257, %cst_93 {dimension_numbers = #tpu.dot_dimension_numbers<[1], [0], [0], [1], [0, 0, 1, 1], [], []>} : vector<2x128xf32>, vector<128x384xf32>, vector<2x384xf32> -> vector<2x384xf32>
    %443 = vector.extract_strided_slice %441 {offsets = [0, 0], sizes = [2, 128], strides = [1, 1]} : vector<2x384xf32> to vector<2x128xf32>
    %444 = vector.extract_strided_slice %442 {offsets = [0, 0], sizes = [2, 128], strides = [1, 1]} : vector<2x384xf32> to vector<2x128xf32>
    %445 = arith.addf %443, %444 : vector<2x128xf32>
    %446 = arith.negf %445 : vector<2x128xf32>
    %447 = math.exp %446 : vector<2x128xf32>
    %cst_94 = arith.constant 1.000000e+00 : f32
    %448 = vector.broadcast %cst_94 : f32 to vector<2x128xf32>
    %449 = arith.addf %448, %447 : vector<2x128xf32>
    %450 = arith.divf %448, %449 : vector<2x128xf32>
    %451 = vector.extract_strided_slice %441 {offsets = [0, 128], sizes = [2, 128], strides = [1, 1]} : vector<2x384xf32> to vector<2x128xf32>
    %452 = vector.extract_strided_slice %442 {offsets = [0, 128], sizes = [2, 128], strides = [1, 1]} : vector<2x384xf32> to vector<2x128xf32>
    %453 = arith.addf %451, %452 : vector<2x128xf32>
    %454 = arith.negf %453 : vector<2x128xf32>
    %455 = math.exp %454 : vector<2x128xf32>
    %cst_95 = arith.constant 1.000000e+00 : f32
    %456 = vector.broadcast %cst_95 : f32 to vector<2x128xf32>
    %457 = arith.addf %456, %455 : vector<2x128xf32>
    %458 = arith.divf %456, %457 : vector<2x128xf32>
    %459 = vector.extract_strided_slice %441 {offsets = [0, 256], sizes = [2, 128], strides = [1, 1]} : vector<2x384xf32> to vector<2x128xf32>
    %460 = vector.extract_strided_slice %442 {offsets = [0, 256], sizes = [2, 128], strides = [1, 1]} : vector<2x384xf32> to vector<2x128xf32>
    %461 = arith.addf %460, %264 : vector<2x128xf32>
    %462 = arith.mulf %450, %461 : vector<2x128xf32>
    %463 = arith.addf %459, %462 : vector<2x128xf32>
    %464 = math.tanh %463 : vector<2x128xf32>
    %cst_96 = arith.constant 1.000000e+00 : f32
    %465 = vector.broadcast %cst_96 : f32 to vector<2x128xf32>
    %466 = arith.subf %465, %458 : vector<2x128xf32>
    %467 = arith.mulf %466, %464 : vector<2x128xf32>
    %468 = arith.mulf %458, %440 : vector<2x128xf32>
    %469 = arith.addf %467, %468 : vector<2x128xf32>
    %470 = vector.extract_strided_slice %262 {offsets = [14, 0], sizes = [2, 384], strides = [1, 1]} : vector<16x384xf32> to vector<2x384xf32>
    %cst_97 = arith.constant dense<0.000000e+00> : vector<2x384xf32>
    %471 = tpu.matmul %469, %257, %cst_97 {dimension_numbers = #tpu.dot_dimension_numbers<[1], [0], [0], [1], [0, 0, 1, 1], [], []>} : vector<2x128xf32>, vector<128x384xf32>, vector<2x384xf32> -> vector<2x384xf32>
    %472 = vector.extract_strided_slice %470 {offsets = [0, 0], sizes = [2, 128], strides = [1, 1]} : vector<2x384xf32> to vector<2x128xf32>
    %473 = vector.extract_strided_slice %471 {offsets = [0, 0], sizes = [2, 128], strides = [1, 1]} : vector<2x384xf32> to vector<2x128xf32>
    %474 = arith.addf %472, %473 : vector<2x128xf32>
    %475 = arith.negf %474 : vector<2x128xf32>
    %476 = math.exp %475 : vector<2x128xf32>
    %cst_98 = arith.constant 1.000000e+00 : f32
    %477 = vector.broadcast %cst_98 : f32 to vector<2x128xf32>
    %478 = arith.addf %477, %476 : vector<2x128xf32>
    %479 = arith.divf %477, %478 : vector<2x128xf32>
    %480 = vector.extract_strided_slice %470 {offsets = [0, 128], sizes = [2, 128], strides = [1, 1]} : vector<2x384xf32> to vector<2x128xf32>
    %481 = vector.extract_strided_slice %471 {offsets = [0, 128], sizes = [2, 128], strides = [1, 1]} : vector<2x384xf32> to vector<2x128xf32>
    %482 = arith.addf %480, %481 : vector<2x128xf32>
    %483 = arith.negf %482 : vector<2x128xf32>
    %484 = math.exp %483 : vector<2x128xf32>
    %cst_99 = arith.constant 1.000000e+00 : f32
    %485 = vector.broadcast %cst_99 : f32 to vector<2x128xf32>
    %486 = arith.addf %485, %484 : vector<2x128xf32>
    %487 = arith.divf %485, %486 : vector<2x128xf32>
    %488 = vector.extract_strided_slice %470 {offsets = [0, 256], sizes = [2, 128], strides = [1, 1]} : vector<2x384xf32> to vector<2x128xf32>
    %489 = vector.extract_strided_slice %471 {offsets = [0, 256], sizes = [2, 128], strides = [1, 1]} : vector<2x384xf32> to vector<2x128xf32>
    %490 = arith.addf %489, %264 : vector<2x128xf32>
    %491 = arith.mulf %479, %490 : vector<2x128xf32>
    %492 = arith.addf %488, %491 : vector<2x128xf32>
    %493 = math.tanh %492 : vector<2x128xf32>
    %cst_100 = arith.constant 1.000000e+00 : f32
    %494 = vector.broadcast %cst_100 : f32 to vector<2x128xf32>
    %495 = arith.subf %494, %487 : vector<2x128xf32>
    %496 = arith.mulf %495, %493 : vector<2x128xf32>
    %497 = arith.mulf %487, %469 : vector<2x128xf32>
    %498 = arith.addf %496, %497 : vector<2x128xf32>
    %c1_101 = arith.constant 1 : index
    %c0_102 = arith.constant 0 : index
    %c0_103 = arith.constant 0 : index
    %499 = vector.load %arg16[%c1_101, %c0_102, %c0_103] : memref<2x2x128xf32, #tpu.memory_space<vmem>>, vector<1x2x128xf32>
    %500 = vector.shape_cast %499 : vector<1x2x128xf32> to vector<2x128xf32>
    %501 = vector.shape_cast %498 : vector<2x128xf32> to vector<1x2x128xf32>
    tpu.vector_store %arg16[%c1_101, %c0_102, %c0_103], %501 {strides = array<i32>} : memref<2x2x128xf32, #tpu.memory_space<vmem>>, vector<1x2x128xf32>,
    %502 = arith.negf %498 : vector<2x128xf32>
    %503 = math.exp %502 : vector<2x128xf32>
    %cst_104 = arith.constant 1.000000e+00 : f32
    %504 = vector.broadcast %cst_104 : f32 to vector<2x128xf32>
    %505 = arith.addf %504, %503 : vector<2x128xf32>
    %506 = arith.divf %504, %505 : vector<2x128xf32>
    %c0_105 = arith.constant 0 : index
    %c0_106 = arith.constant 0 : index
    %507 = vector.load %arg10[%c0_105, %c0_106] : memref<128x128xf32, #tpu.memory_space<vmem>>, vector<128x128xf32>
    %cst_107 = arith.constant dense<0.000000e+00> : vector<2x128xf32>
    %508 = tpu.matmul %506, %507, %cst_107 {dimension_numbers = #tpu.dot_dimension_numbers<[1], [0], [0], [1], [0, 0, 1, 1], [], []>} : vector<2x128xf32>, vector<128x128xf32>, vector<2x128xf32> -> vector<2x128xf32>
    %c0_108 = arith.constant 0 : index
    %c0_109 = arith.constant 0 : index
    %509 = vector.load %arg11[%c0_108, %c0_109] : memref<1x128xf32, #tpu.memory_space<vmem>>, vector<1x128xf32>
    %510 = vector.broadcast %509 : vector<1x128xf32> to vector<2x128xf32>
    %511 = arith.addf %508, %510 : vector<2x128xf32>
    %512 = arith.negf %511 : vector<2x128xf32>
    %513 = math.exp %512 : vector<2x128xf32>
    %cst_110 = arith.constant 1.000000e+00 : f32
    %514 = vector.broadcast %cst_110 : f32 to vector<2x128xf32>
    %515 = arith.addf %514, %513 : vector<2x128xf32>
    %516 = arith.divf %514, %515 : vector<2x128xf32>
    %c0_111 = arith.constant 0 : index
    %c0_112 = arith.constant 0 : index
    %517 = vector.load %arg12[%c0_111, %c0_112] : memref<128x128xf32, #tpu.memory_space<vmem>>, vector<128x128xf32>
    %cst_113 = arith.constant dense<0.000000e+00> : vector<2x128xf32>
    %518 = tpu.matmul %516, %517, %cst_113 {dimension_numbers = #tpu.dot_dimension_numbers<[1], [0], [0], [1], [0, 0, 1, 1], [], []>} : vector<2x128xf32>, vector<128x128xf32>, vector<2x128xf32> -> vector<2x128xf32>
    %519 = arith.negf %518 : vector<2x128xf32>
    %520 = math.exp %519 : vector<2x128xf32>
    %cst_114 = arith.constant 1.000000e+00 : f32
    %521 = vector.broadcast %cst_114 : f32 to vector<2x128xf32>
    %522 = arith.addf %521, %520 : vector<2x128xf32>
    %523 = arith.divf %521, %522 : vector<2x128xf32>
    %c0_115 = arith.constant 0 : index
    %c0_116 = arith.constant 0 : index
    %524 = vector.load %arg13[%c0_115, %c0_116] : memref<128x128xf32, #tpu.memory_space<vmem>>, vector<128x128xf32>
    %cst_117 = arith.constant dense<0.000000e+00> : vector<2x128xf32>
    %525 = tpu.matmul %523, %524, %cst_117 {dimension_numbers = #tpu.dot_dimension_numbers<[1], [0], [0], [1], [0, 0, 1, 1], [], []>} : vector<2x128xf32>, vector<128x128xf32>, vector<2x128xf32> -> vector<2x128xf32>
    %526 = arith.negf %525 : vector<2x128xf32>
    %527 = math.exp %526 : vector<2x128xf32>
    %cst_118 = arith.constant 1.000000e+00 : f32
    %528 = vector.broadcast %cst_118 : f32 to vector<2x128xf32>
    %529 = arith.addf %528, %527 : vector<2x128xf32>
    %530 = arith.divf %528, %529 : vector<2x128xf32>
    %c0_119 = arith.constant 0 : index
    %c0_120 = arith.constant 0 : index
    %531 = vector.load %arg14[%c0_119, %c0_120] : memref<128x128xf32, #tpu.memory_space<vmem>>, vector<128x128xf32>
    %cst_121 = arith.constant dense<0.000000e+00> : vector<2x128xf32>
    %532 = tpu.matmul %530, %531, %cst_121 {dimension_numbers = #tpu.dot_dimension_numbers<[1], [0], [0], [1], [0, 0, 1, 1], [], []>} : vector<2x128xf32>, vector<128x128xf32>, vector<2x128xf32> -> vector<2x128xf32>
    %c0_122 = arith.constant 0 : index
    %c0_123 = arith.constant 0 : index
    %533 = vector.load %arg15[%c0_122, %c0_123] : memref<2x128xf32, #tpu.memory_space<vmem>>, vector<2x128xf32>
    tpu.vector_store %arg15[%c0_122, %c0_123], %532 {strides = array<i32>} : memref<2x128xf32, #tpu.memory_space<vmem>>, vector<2x128xf32>,
    return
  }
}

</mosaic_0001>

<llo_original>
// kernel: mynet_forward.1
$region0: #{mynet_forward.1}
  #allocation0 [shape = 'u32[]', space=smem, size = 0x4, offset = 0x4, fixed_abs, tag = 'smem constant byte address 0x4 - core index']
  #allocation1 [shape = 'u32[144,128]{1,0:T(1,128)}', space=vmem, size = 0x12000, scoped, tag = 'internal scratch']
  #allocation2 [shape = 'f32[16,128]{1,0:T(8,128)}', space=vmem, size = 0x2000, scoped, tag = 'scratch operand']
  %s0 = inlined_call_operand.vmem [shape: f32[16,16], index: 0, kind: input, shape index: {}]
  %s1 = inlined_call_operand.vmem [shape: f32[2,2,128], index: 1, kind: input, shape index: {}]
  %s2 = inlined_call_operand.vmem [shape: f32[16,384], index: 2, kind: input, shape index: {}]
  %s3 = inlined_call_operand.vmem [shape: f32[128,384], index: 3, kind: input, shape index: {}]
  %s4 = inlined_call_operand.vmem [shape: f32[1,384], index: 4, kind: input, shape index: {}]
  %s5 = inlined_call_operand.vmem [shape: f32[1,128], index: 5, kind: input, shape index: {}]
  %s6 = inlined_call_operand.vmem [shape: f32[128,384], index: 6, kind: input, shape index: {}]
  %s7 = inlined_call_operand.vmem [shape: f32[128,384], index: 7, kind: input, shape index: {}]
  %s8 = inlined_call_operand.vmem [shape: f32[1,384], index: 8, kind: input, shape index: {}]
  %s9 = inlined_call_operand.vmem [shape: f32[1,128], index: 9, kind: input, shape index: {}]
  %s10 = inlined_call_operand.vmem [shape: f32[128,128], index: 10, kind: input, shape index: {}]
  %s11 = inlined_call_operand.vmem [shape: f32[1,128], index: 11, kind: input, shape index: {}]
  %s12 = inlined_call_operand.vmem [shape: f32[128,128], index: 12, kind: input, shape index: {}]
  %s13 = inlined_call_operand.vmem [shape: f32[128,128], index: 13, kind: input, shape index: {}]
  %s14 = inlined_call_operand.vmem [shape: f32[128,128], index: 14, kind: input, shape index: {}]
  %s15 = inlined_call_operand.hbm [shape: f32[2,128], index: 15, kind: output, shape index: {0}]
  %s16 = inlined_call_operand.hbm [shape: f32[2,2,128], index: 16, kind: output, shape index: {1}]
  %17 = xla_tuple %s15, %s16
  %s18 = sld [smem:[#allocation0]]
  $region78: #{mynet_forward.1} parent=0
    _
  %s20 = ssub.s32 1, %s18
  %s21 = scalar_select 0, %s20, %s18
  $region1: #{mynet_forward.1} parent=0
    #allocation3 [shape = 'u8[1024]{0}', space=vmem, size = 0x400, scoped, tag = 'output window, operand 0, single buffered']
    #allocation4 [shape = 's32[1]{0}', space=sflag, size = 0x4, scoped, tag = 'scoped memory for mynet_forward.1']
    #allocation5 [shape = 'u8[2048]{0}', space=vmem, size = 0x800, scoped, tag = 'output window, operand 1, single buffered']
    #allocation6 [shape = 's32[1]{0}', space=sflag, size = 0x4, scoped, tag = 'scoped memory for mynet_forward.1']
    %22 = vsyncpa [#allocation4], 0
    %23 = vsyncpa [#allocation6], 0
    // Predicated region
    $region2: #{mynet_forward.1} parent=1 // pred_check
      _
    $region3: #{mynet_forward.1} parent=1 // pred_check_branch
      %25 = sbr.rel (0) target = $region5
    $region4: #{mynet_forward.1} parent=1 // pred_region
      _
    $region5: #{mynet_forward.1} parent=1 // pred_fallthru
      _
    // Predicated region
    $region6: #{mynet_forward.1} parent=1 // pred_check
      _
    $region7: #{mynet_forward.1} parent=1 // pred_check_branch
      %27 = sbr.rel (0) target = $region9
    $region8: #{mynet_forward.1} parent=1 // pred_region
      _
    $region9: #{mynet_forward.1} parent=1 // pred_fallthru
      _
    // Predicated region
    $region10: #{mynet_forward.1} parent=1 // pred_check
      _
    $region11: #{mynet_forward.1} parent=1 // pred_check_branch
      %29 = sbr.rel (0) target = $region13
    $region12: #{mynet_forward.1} parent=1 // pred_region
      _
    $region13: #{mynet_forward.1} parent=1 // pred_fallthru
      _
    // Predicated region
    $region14: #{mynet_forward.1} parent=1 // pred_check
      _
    $region15: #{mynet_forward.1} parent=1 // pred_check_branch
      %31 = sbr.rel (0) target = $region17
    $region16: #{mynet_forward.1} parent=1 // pred_region
      _
    $region17: #{mynet_forward.1} parent=1 // pred_fallthru
      _
    // Predicated region
    $region18: #{mynet_forward.1} parent=1 // pred_check
      _
    $region19: #{mynet_forward.1} parent=1 // pred_check_branch
      %33 = sbr.rel (0) target = $region21
    $region20: #{mynet_forward.1} parent=1 // pred_region
      _
    $region21: #{mynet_forward.1} parent=1 // pred_fallthru
      _
    // Predicated region
    $region22: #{mynet_forward.1} parent=1 // pred_check
      _
    $region23: #{mynet_forward.1} parent=1 // pred_check_branch
      %35 = sbr.rel (0) target = $region25
    $region24: #{mynet_forward.1} parent=1 // pred_region
      _
    $region25: #{mynet_forward.1} parent=1 // pred_fallthru
      _
    // Predicated region
    $region26: #{mynet_forward.1} parent=1 // pred_check
      _
    $region27: #{mynet_forward.1} parent=1 // pred_check_branch
      %37 = sbr.rel (0) target = $region29
    $region28: #{mynet_forward.1} parent=1 // pred_region
      _
    $region29: #{mynet_forward.1} parent=1 // pred_fallthru
      _
    // Predicated region
    $region30: #{mynet_forward.1} parent=1 // pred_check
      _
    $region31: #{mynet_forward.1} parent=1 // pred_check_branch
      %39 = sbr.rel (0) target = $region33
    $region32: #{mynet_forward.1} parent=1 // pred_region
      _
    $region33: #{mynet_forward.1} parent=1 // pred_fallthru
      _
    // Predicated region
    $region34: #{mynet_forward.1} parent=1 // pred_check
      _
    $region35: #{mynet_forward.1} parent=1 // pred_check_branch
      %41 = sbr.rel (0) target = $region37
    $region36: #{mynet_forward.1} parent=1 // pred_region
      _
    $region37: #{mynet_forward.1} parent=1 // pred_fallthru
      _
    // Predicated region
    $region38: #{mynet_forward.1} parent=1 // pred_check
      _
    $region39: #{mynet_forward.1} parent=1 // pred_check_branch
      %43 = sbr.rel (0) target = $region41
    $region40: #{mynet_forward.1} parent=1 // pred_region
      _
    $region41: #{mynet_forward.1} parent=1 // pred_fallthru
      _
    // Predicated region
    $region42: #{mynet_forward.1} parent=1 // pred_check
      _
    $region43: #{mynet_forward.1} parent=1 // pred_check_branch
      %45 = sbr.rel (0) target = $region45
    $region44: #{mynet_forward.1} parent=1 // pred_region
      _
    $region45: #{mynet_forward.1} parent=1 // pred_fallthru
      _
    // Predicated region
    $region46: #{mynet_forward.1} parent=1 // pred_check
      _
    $region47: #{mynet_forward.1} parent=1 // pred_check_branch
      %47 = sbr.rel (0) target = $region49
    $region48: #{mynet_forward.1} parent=1 // pred_region
      _
    $region49: #{mynet_forward.1} parent=1 // pred_fallthru
      _
    // Predicated region
    $region50: #{mynet_forward.1} parent=1 // pred_check
      _
    $region51: #{mynet_forward.1} parent=1 // pred_check_branch
      %49 = sbr.rel (0) target = $region53
    $region52: #{mynet_forward.1} parent=1 // pred_region
      _
    $region53: #{mynet_forward.1} parent=1 // pred_fallthru
      _
    // Predicated region
    $region54: #{mynet_forward.1} parent=1 // pred_check
      _
    $region55: #{mynet_forward.1} parent=1 // pred_check_branch
      %51 = sbr.rel (0) target = $region57
    $region56: #{mynet_forward.1} parent=1 // pred_region
      _
    $region57: #{mynet_forward.1} parent=1 // pred_fallthru
      _
    // Predicated region
    $region58: #{mynet_forward.1} parent=1 // pred_check
      _
    $region59: #{mynet_forward.1} parent=1 // pred_check_branch
      %53 = sbr.rel (0) target = $region61
    $region60: #{mynet_forward.1} parent=1 // pred_region
      _
    $region61: #{mynet_forward.1} parent=1 // pred_fallthru
      _
    %v54 = vld [vmem:[%s0] sm:$0xff]
    %v55 = vld [vmem:[%s0 + $0x8] sm:$0xff]
    %v56 = vld [vmem:[%s2] sm:$0xff]
    %v57 = vld [vmem:[%s2 + $0x8] sm:$0xff]
    %v58 = vld [vmem:[%s2 + $0x10] sm:$0xff]
    %v59 = vld [vmem:[%s2 + $0x18] sm:$0xff]
    %v60 = vld [vmem:[%s2 + $0x20] sm:$0xff]
    %v61 = vld [vmem:[%s2 + $0x28] sm:$0xff]
    %v62 = vld [vmem:[%s3] sm:$0xff]
    %v63 = vld [vmem:[%s3 + $0x8] sm:$0xff]
    %v64 = vld [vmem:[%s3 + $0x10] sm:$0xff]
    %v65 = vld [vmem:[%s3 + $0x18] sm:$0xff]
    %v66 = vld [vmem:[%s3 + $0x20] sm:$0xff]
    %v67 = vld [vmem:[%s3 + $0x28] sm:$0xff]
    %v68 = vld [vmem:[%s3 + $0x30] sm:$0xff]
    %v69 = vld [vmem:[%s3 + $0x38] sm:$0xff]
    %v70 = vld [vmem:[%s3 + $0x40] sm:$0xff]
    %v71 = vld [vmem:[%s3 + $0x48] sm:$0xff]
    %v72 = vld [vmem:[%s3 + $0x50] sm:$0xff]
    %v73 = vld [vmem:[%s3 + $0x58] sm:$0xff]
    %v74 = vld [vmem:[%s3 + $0x60] sm:$0xff]
    %v75 = vld [vmem:[%s3 + $0x68] sm:$0xff]
    %v76 = vld [vmem:[%s3 + $0x70] sm:$0xff]
    %v77 = vld [vmem:[%s3 + $0x78] sm:$0xff]
    %v78 = vld [vmem:[%s3 + $0x80] sm:$0xff]
    %v79 = vld [vmem:[%s3 + $0x88] sm:$0xff]
    %v80 = vld [vmem:[%s3 + $0x90] sm:$0xff]
    %v81 = vld [vmem:[%s3 + $0x98] sm:$0xff]
    %v82 = vld [vmem:[%s3 + $0xa0] sm:$0xff]
    %v83 = vld [vmem:[%s3 + $0xa8] sm:$0xff]
    %v84 = vld [vmem:[%s3 + $0xb0] sm:$0xff]
    %v85 = vld [vmem:[%s3 + $0xb8] sm:$0xff]
    %v86 = vld [vmem:[%s3 + $0xc0] sm:$0xff]
    %v87 = vld [vmem:[%s3 + $0xc8] sm:$0xff]
    %v88 = vld [vmem:[%s3 + $0xd0] sm:$0xff]
    %v89 = vld [vmem:[%s3 + $0xd8] sm:$0xff]
    %v90 = vld [vmem:[%s3 + $0xe0] sm:$0xff]
    %v91 = vld [vmem:[%s3 + $0xe8] sm:$0xff]
    %v92 = vld [vmem:[%s3 + $0xf0] sm:$0xff]
    %v93 = vld [vmem:[%s3 + $0xf8] sm:$0xff]
    %v94 = vld [vmem:[%s3 + $0x100] sm:$0xff]
    %v95 = vld [vmem:[%s3 + $0x108] sm:$0xff]
    %v96 = vld [vmem:[%s3 + $0x110] sm:$0xff]
    %v97 = vld [vmem:[%s3 + $0x118] sm:$0xff]
    %v98 = vld [vmem:[%s3 + $0x120] sm:$0xff]
    %v99 = vld [vmem:[%s3 + $0x128] sm:$0xff]
    %v100 = vld [vmem:[%s3 + $0x130] sm:$0xff]
    %v101 = vld [vmem:[%s3 + $0x138] sm:$0xff]
    %v102 = vld [vmem:[%s3 + $0x140] sm:$0xff]
    %v103 = vld [vmem:[%s3 + $0x148] sm:$0xff]
    %v104 = vld [vmem:[%s3 + $0x150] sm:$0xff]
    %v105 = vld [vmem:[%s3 + $0x158] sm:$0xff]
    %v106 = vld [vmem:[%s3 + $0x160] sm:$0xff]
    %v107 = vld [vmem:[%s3 + $0x168] sm:$0xff]
    %v108 = vld [vmem:[%s3 + $0x170] sm:$0xff]
    %v109 = vld [vmem:[%s3 + $0x178] sm:$0xff]
    %v110 = vld [vmem:[%s4] sm:$0x7]
    %v111 = vld [vmem:[%s5] sm:$0x1]
    %v113 = vlaneseq
    %v114 = vshrl.u32 %v113, 7
    %v115 = vsub.s32 0, %v114
    %v116 = vrot.slane %v110, %v115
    %v117 = vlaneseq
    %v118 = vshrl.u32 %v117, 7
    %v119 = vsub.s32 1, %v118
    %v120 = vrot.slane %v110, %v119
    %v121 = vlaneseq
    %v122 = vshrl.u32 %v121, 7
    %v123 = vsub.s32 2, %v122
    %v124 = vrot.slane %v110, %v123
    %vm128 = vcmask 130048
    %v130 = vsel %vm128, %v54, 0
    %v133 = vsel %vm128, %v55, 0
    %135 = vmatprep.subr.mxu0 %v57
    %136 = vmatpush1.msra.mxu0 %v56
    %137 = vmatprep.subr.mxu0 %v60
    %138 = vmatpush1.msra.mxu0 %v59
    %139 = vmatprep.subr.mxu0 0.0
    %140 = vmatpush1.msra.mxu0 0.0
    %141 = vmatprep.subr.mxu0 0.0
    %142 = vmatpush1.msra.mxu0 0.0
    %143 = vmatprep.subr.mxu0 0.0
    %144 = vmatpush1.msra.mxu0 0.0
    %145 = vmatprep.subr.mxu0 0.0
    %146 = vmatpush1.msra.mxu0 0.0
    %147 = vmatprep.subr.mxu0 0.0
    %148 = vmatpush1.msra.mxu0 0.0
    %149 = vmatprep.subr.mxu0 0.0
    %150 = vmatpush1.msra.mxu0 0.0
    %151 = vmatprep.subr.mxu0 0.0
    %152 = vmatpush1.msra.mxu0 0.0
    %153 = vmatprep.subr.mxu0 0.0
    %154 = vmatpush1.msra.mxu0 0.0
    %155 = vmatprep.subr.mxu0 0.0
    %156 = vmatpush1.msra.mxu0 0.0
    %157 = vmatprep.subr.mxu0 0.0
    %158 = vmatpush1.msra.mxu0 0.0
    %159 = vmatprep.subr.mxu0 0.0
    %160 = vmatpush1.msra.mxu0 0.0
    %161 = vmatprep.subr.mxu0 0.0
    %162 = vmatpush1.msra.mxu0 0.0
    %163 = vmatprep.subr.mxu0 0.0
    %164 = vmatpush1.msra.mxu0 0.0
    %165 = vmatprep.subr.mxu0 0.0
    %166 = vmatpush1.msra.mxu0 0.0
    %167 = vmatprep.subr.mxu0 0.0
    %168 = vmatpush1.msra.mxu0 0.0
    %169 = vmatprep.subr.mxu0 0.0
    %170 = vmatpush1.msra.mxu0 0.0
    %171 = vmatprep.subr.mxu0 0.0
    %172 = vmatpush1.msra.mxu0 0.0
    %173 = vmatprep.subr.mxu0 0.0
    %174 = vmatpush1.msra.mxu0 0.0
    %175 = vmatprep.subr.mxu0 0.0
    %176 = vmatpush1.msra.mxu0 0.0
    %177 = vmatprep.subr.mxu0 0.0
    %178 = vmatpush1.msra.mxu0 0.0
    %179 = vmatprep.subr.mxu0 0.0
    %180 = vmatpush1.msra.mxu0 0.0
    %181 = vmatprep.subr.mxu0 0.0
    %182 = vmatpush1.msra.mxu0 0.0
    %183 = vmatprep.subr.mxu0 0.0
    %184 = vmatpush1.msra.mxu0 0.0
    %185 = vmatprep.subr.mxu0 0.0
    %186 = vmatpush1.msra.mxu0 0.0
    %187 = vmatprep.subr.mxu0 0.0
    %188 = vmatpush1.msra.mxu0 0.0
    %189 = vmatprep.subr.mxu0 0.0
    %190 = vmatpush1.msra.mxu0 0.0
    %191 = vmatprep.subr.mxu0 0.0
    %192 = vmatpush1.msra.mxu0 0.0
    %193 = vmatprep.subr.mxu0 0.0
    %194 = vmatpush1.msra.mxu0 0.0
    %195 = vmatprep.subr.mxu0 0.0
    %196 = vmatpush1.msra.mxu0 0.0
    %197 = vmatprep.subr.mxu0 0.0
    %198 = vmatpush1.msra.mxu0 0.0
    %199 = vmatprep.mubr.f32.mxu0 0.0
    %200 = vmatmul.mubr.f32.gmra.mrb[0].mxu0 %v130
    %v201 = vpop.f32.mrb[0].mxu0
    %v202 = vadd.f32 %v116, %v201
    %v203 = vpop.f32.mrb[0].mxu0
    %v204 = vadd.f32 %v120, %v203
    %205 = vmatprep.mubr.f32.mxu0 0.0
    %206 = vmatmul.mubr.f32.gmra.mrb[0].mxu0 %v133
    %v207 = vpop.f32.mrb[0].mxu0
    %v208 = vadd.f32 %v116, %v207
    %v209 = vpop.f32.mrb[0].mxu0
    %v210 = vadd.f32 %v120, %v209
    %211 = vdwg.mxu0
    %212 = vmatprep.subr.mxu0 0.0
    %213 = vmatpush1.msra.mxu0 %v58
    %214 = vmatprep.subr.mxu0 0.0
    %215 = vmatpush1.msra.mxu0 %v61
    %216 = vmatprep.subr.mxu0 0.0
    %217 = vmatpush1.msra.mxu0 0.0
    %218 = vmatprep.subr.mxu0 0.0
    %219 = vmatpush1.msra.mxu0 0.0
    %220 = vmatprep.subr.mxu0 0.0
    %221 = vmatpush1.msra.mxu0 0.0
    %222 = vmatprep.subr.mxu0 0.0
    %223 = vmatpush1.msra.mxu0 0.0
    %224 = vmatprep.subr.mxu0 0.0
    %225 = vmatpush1.msra.mxu0 0.0
    %226 = vmatprep.subr.mxu0 0.0
    %227 = vmatpush1.msra.mxu0 0.0
    %228 = vmatprep.subr.mxu0 0.0
    %229 = vmatpush1.msra.mxu0 0.0
    %230 = vmatprep.subr.mxu0 0.0
    %231 = vmatpush1.msra.mxu0 0.0
    %232 = vmatprep.subr.mxu0 0.0
    %233 = vmatpush1.msra.mxu0 0.0
    %234 = vmatprep.subr.mxu0 0.0
    %235 = vmatpush1.msra.mxu0 0.0
    %236 = vmatprep.subr.mxu0 0.0
    %237 = vmatpush1.msra.mxu0 0.0
    %238 = vmatprep.subr.mxu0 0.0
    %239 = vmatpush1.msra.mxu0 0.0
    %240 = vmatprep.subr.mxu0 0.0
    %241 = vmatpush1.msra.mxu0 0.0
    %242 = vmatprep.subr.mxu0 0.0
    %243 = vmatpush1.msra.mxu0 0.0
    %244 = vmatprep.subr.mxu0 0.0
    %245 = vmatpush1.msra.mxu0 0.0
    %246 = vmatprep.subr.mxu0 0.0
    %247 = vmatpush1.msra.mxu0 0.0
    %248 = vmatprep.subr.mxu0 0.0
    %249 = vmatpush1.msra.mxu0 0.0
    %250 = vmatprep.subr.mxu0 0.0
    %251 = vmatpush1.msra.mxu0 0.0
    %252 = vmatprep.subr.mxu0 0.0
    %253 = vmatpush1.msra.mxu0 0.0
    %254 = vmatprep.subr.mxu0 0.0
    %255 = vmatpush1.msra.mxu0 0.0
    %256 = vmatprep.subr.mxu0 0.0
    %257 = vmatpush1.msra.mxu0 0.0
    %258 = vmatprep.subr.mxu0 0.0
    %259 = vmatpush1.msra.mxu0 0.0
    %260 = vmatprep.subr.mxu0 0.0
    %261 = vmatpush1.msra.mxu0 0.0
    %262 = vmatprep.subr.mxu0 0.0
    %263 = vmatpush1.msra.mxu0 0.0
    %264 = vmatprep.subr.mxu0 0.0
    %265 = vmatpush1.msra.mxu0 0.0
    %266 = vmatprep.subr.mxu0 0.0
    %267 = vmatpush1.msra.mxu0 0.0
    %268 = vmatprep.subr.mxu0 0.0
    %269 = vmatpush1.msra.mxu0 0.0
    %270 = vmatprep.subr.mxu0 0.0
    %271 = vmatpush1.msra.mxu0 0.0
    %272 = vmatprep.subr.mxu0 0.0
    %273 = vmatpush1.msra.mxu0 0.0
    %274 = vmatprep.subr.mxu0 0.0
    %275 = vmatpush1.msra.mxu0 0.0
    %276 = vmatprep.mubr.f32.mxu0 0.0
    %277 = vmatmul.mubr.f32.gmra.mrb[0].mxu0 %v130
    %v278 = vpop.f32.mrb[0].mxu0
    %v279 = vadd.f32 %v124, %v278
    %v280 = vpop.f32.mrb[0].mxu0
    %281 = vmatprep.mubr.f32.mxu0 0.0
    %282 = vmatmul.mubr.f32.gmra.mrb[0].mxu0 %v133
    %v283 = vpop.f32.mrb[0].mxu0
    %v284 = vadd.f32 %v124, %v283
    %v285 = vpop.f32.mrb[0].mxu0
    %286 = vdwg.mxu0
    %v288 = vlaneseq
    %v289 = vshrl.u32 %v288, 7
    %v290 = vsub.s32 0, %v289
    %v291 = vrot.slane %v111, %v290
    %v293 = vld [vmem:[%s1] sm:$0x3]
    %294 = vmatprep.subr.mxu0 %v63
    %295 = vmatpush1.msra.mxu0 %v62
    %296 = vmatprep.subr.mxu0 %v66
    %297 = vmatpush1.msra.mxu0 %v65
    %298 = vmatprep.subr.mxu0 %v69
    %299 = vmatpush1.msra.mxu0 %v68
    %300 = vmatprep.subr.mxu0 %v72
    %301 = vmatpush1.msra.mxu0 %v71
    %302 = vmatprep.subr.mxu0 %v75
    %303 = vmatpush1.msra.mxu0 %v74
    %304 = vmatprep.subr.mxu0 %v78
    %305 = vmatpush1.msra.mxu0 %v77
    %306 = vmatprep.subr.mxu0 %v81
    %307 = vmatpush1.msra.mxu0 %v80
    %308 = vmatprep.subr.mxu0 %v84
    %309 = vmatpush1.msra.mxu0 %v83
    %310 = vmatprep.subr.mxu0 %v87
    %311 = vmatpush1.msra.mxu0 %v86
    %312 = vmatprep.subr.mxu0 %v90
    %313 = vmatpush1.msra.mxu0 %v89
    %314 = vmatprep.subr.mxu0 %v93
    %315 = vmatpush1.msra.mxu0 %v92
    %316 = vmatprep.subr.mxu0 %v96
    %317 = vmatpush1.msra.mxu0 %v95
    %318 = vmatprep.subr.mxu0 %v99
    %319 = vmatpush1.msra.mxu0 %v98
    %320 = vmatprep.subr.mxu0 %v102
    %321 = vmatpush1.msra.mxu0 %v101
    %322 = vmatprep.subr.mxu0 %v105
    %323 = vmatpush1.msra.mxu0 %v104
    %324 = vmatprep.subr.mxu0 %v108
    %325 = vmatpush1.msra.mxu0 %v107
    %326 = vmatprep.subr.mxu0 0.0
    %327 = vmatpush1.msra.mxu0 0.0
    %328 = vmatprep.subr.mxu0 0.0
    %329 = vmatpush1.msra.mxu0 0.0
    %330 = vmatprep.subr.mxu0 0.0
    %331 = vmatpush1.msra.mxu0 0.0
    %332 = vmatprep.subr.mxu0 0.0
    %333 = vmatpush1.msra.mxu0 0.0
    %334 = vmatprep.subr.mxu0 0.0
    %335 = vmatpush1.msra.mxu0 0.0
    %336 = vmatprep.subr.mxu0 0.0
    %337 = vmatpush1.msra.mxu0 0.0
    %338 = vmatprep.subr.mxu0 0.0
    %339 = vmatpush1.msra.mxu0 0.0
    %340 = vmatprep.subr.mxu0 0.0
    %341 = vmatpush1.msra.mxu0 0.0
    %342 = vmatprep.subr.mxu0 0.0
    %343 = vmatpush1.msra.mxu0 0.0
    %344 = vmatprep.subr.mxu0 0.0
    %345 = vmatpush1.msra.mxu0 0.0
    %346 = vmatprep.subr.mxu0 0.0
    %347 = vmatpush1.msra.mxu0 0.0
    %348 = vmatprep.subr.mxu0 0.0
    %349 = vmatpush1.msra.mxu0 0.0
    %350 = vmatprep.subr.mxu0 0.0
    %351 = vmatpush1.msra.mxu0 0.0
    %352 = vmatprep.subr.mxu0 0.0
    %353 = vmatpush1.msra.mxu0 0.0
    %354 = vmatprep.subr.mxu0 0.0
    %355 = vmatpush1.msra.mxu0 0.0
    %356 = vmatprep.subr.mxu0 0.0
    %357 = vmatpush1.msra.mxu0 0.0
    %358 = vmatprep.mubr.f32.mxu0 0.0
    %359 = vmatmul.mubr.f32.gmra.mrb[0].mxu0 %v293
    %v360 = vpop.f32.mrb[0].mxu0
    %v361 = vadd.f32 0.0, %v360
    %v362 = vpop.f32.mrb[0].mxu0
    %v363 = vadd.f32 0.0, %v362
    %364 = vdwg.mxu0
    %365 = vmatprep.subr.mxu0 0.0
    %366 = vmatpush1.msra.mxu0 %v64
    %367 = vmatprep.subr.mxu0 0.0
    %368 = vmatpush1.msra.mxu0 %v67
    %369 = vmatprep.subr.mxu0 0.0
    %370 = vmatpush1.msra.mxu0 %v70
    %371 = vmatprep.subr.mxu0 0.0
    %372 = vmatpush1.msra.mxu0 %v73
    %373 = vmatprep.subr.mxu0 0.0
    %374 = vmatpush1.msra.mxu0 %v76
    %375 = vmatprep.subr.mxu0 0.0
    %376 = vmatpush1.msra.mxu0 %v79
    %377 = vmatprep.subr.mxu0 0.0
    %378 = vmatpush1.msra.mxu0 %v82
    %379 = vmatprep.subr.mxu0 0.0
    %380 = vmatpush1.msra.mxu0 %v85
    %381 = vmatprep.subr.mxu0 0.0
    %382 = vmatpush1.msra.mxu0 %v88
    %383 = vmatprep.subr.mxu0 0.0
    %384 = vmatpush1.msra.mxu0 %v91
    %385 = vmatprep.subr.mxu0 0.0
    %386 = vmatpush1.msra.mxu0 %v94
    %387 = vmatprep.subr.mxu0 0.0
    %388 = vmatpush1.msra.mxu0 %v97
    %389 = vmatprep.subr.mxu0 0.0
    %390 = vmatpush1.msra.mxu0 %v100
    %391 = vmatprep.subr.mxu0 0.0
    %392 = vmatpush1.msra.mxu0 %v103
    %393 = vmatprep.subr.mxu0 0.0
    %394 = vmatpush1.msra.mxu0 %v106
    %395 = vmatprep.subr.mxu0 0.0
    %396 = vmatpush1.msra.mxu0 %v109
    %397 = vmatprep.subr.mxu0 0.0
    %398 = vmatpush1.msra.mxu0 0.0
    %399 = vmatprep.subr.mxu0 0.0
    %400 = vmatpush1.msra.mxu0 0.0
    %401 = vmatprep.subr.mxu0 0.0
    %402 = vmatpush1.msra.mxu0 0.0
    %403 = vmatprep.subr.mxu0 0.0
    %404 = vmatpush1.msra.mxu0 0.0
    %405 = vmatprep.subr.mxu0 0.0
    %406 = vmatpush1.msra.mxu0 0.0
    %407 = vmatprep.subr.mxu0 0.0
    %408 = vmatpush1.msra.mxu0 0.0
    %409 = vmatprep.subr.mxu0 0.0
    %410 = vmatpush1.msra.mxu0 0.0
    %411 = vmatprep.subr.mxu0 0.0
    %412 = vmatpush1.msra.mxu0 0.0
    %413 = vmatprep.subr.mxu0 0.0
    %414 = vmatpush1.msra.mxu0 0.0
    %415 = vmatprep.subr.mxu0 0.0
    %416 = vmatpush1.msra.mxu0 0.0
    %417 = vmatprep.subr.mxu0 0.0
    %418 = vmatpush1.msra.mxu0 0.0
    %419 = vmatprep.subr.mxu0 0.0
    %420 = vmatpush1.msra.mxu0 0.0
    %421 = vmatprep.subr.mxu0 0.0
    %422 = vmatpush1.msra.mxu0 0.0
    %423 = vmatprep.subr.mxu0 0.0
    %424 = vmatpush1.msra.mxu0 0.0
    %425 = vmatprep.subr.mxu0 0.0
    %426 = vmatpush1.msra.mxu0 0.0
    %427 = vmatprep.subr.mxu0 0.0
    %428 = vmatpush1.msra.mxu0 0.0
    %429 = vmatprep.mubr.f32.mxu0 0.0
    %430 = vmatmul.mubr.f32.gmra.mrb[0].mxu0 %v293
    %v431 = vpop.f32.mrb[0].mxu0
    %v432 = vadd.f32 0.0, %v431
    %v433 = vpop.f32.mrb[0].mxu0
    %434 = vdwg.mxu0
    %v435 = vadd.f32 %v202, %v361
    %v436 = vxor.u32 %v435, 2147483648
    %v437 = vmul.f32 %v436, 1.442695
    %v438 = vpow.pop %v437
    %v439 = vadd.f32 %v438, 1.0
    %v440 = vrcp.pop %v439
    %v441 = vmul.f32 1.0, %v440
    %v442 = vadd.f32 %v204, %v363
    %v443 = vxor.u32 %v442, 2147483648
    %v444 = vmul.f32 %v443, 1.442695
    %v445 = vpow.pop %v444
    %v446 = vadd.f32 %v445, 1.0
    %v447 = vrcp.pop %v446
    %v448 = vmul.f32 1.0, %v447
    %v449 = vadd.f32 %v432, %v291
    %v450 = vmul.f32 %v441, %v449
    %v451 = vadd.f32 %v279, %v450
    %v452 = vtanh.pop %v451
    %v453 = vsub.f32 1.0, %v448
    %v454 = vmul.f32 %v453, %v452
    %v455 = vmul.f32 %v448, %v293
    %v456 = vadd.f32 %v454, %v455
    %457 = vst [vmem:[#allocation2] sm:$0x3] %v456
    %458 = vmatprep.subr.mxu0 %v63
    %459 = vmatpush1.msra.mxu0 %v62
    %460 = vmatprep.subr.mxu0 %v66
    %461 = vmatpush1.msra.mxu0 %v65
    %462 = vmatprep.subr.mxu0 %v69
    %463 = vmatpush1.msra.mxu0 %v68
    %464 = vmatprep.subr.mxu0 %v72
    %465 = vmatpush1.msra.mxu0 %v71
    %466 = vmatprep.subr.mxu0 %v75
    %467 = vmatpush1.msra.mxu0 %v74
    %468 = vmatprep.subr.mxu0 %v78
    %469 = vmatpush1.msra.mxu0 %v77
    %470 = vmatprep.subr.mxu0 %v81
    %471 = vmatpush1.msra.mxu0 %v80
    %472 = vmatprep.subr.mxu0 %v84
    %473 = vmatpush1.msra.mxu0 %v83
    %474 = vmatprep.subr.mxu0 %v87
    %475 = vmatpush1.msra.mxu0 %v86
    %476 = vmatprep.subr.mxu0 %v90
    %477 = vmatpush1.msra.mxu0 %v89
    %478 = vmatprep.subr.mxu0 %v93
    %479 = vmatpush1.msra.mxu0 %v92
    %480 = vmatprep.subr.mxu0 %v96
    %481 = vmatpush1.msra.mxu0 %v95
    %482 = vmatprep.subr.mxu0 %v99
    %483 = vmatpush1.msra.mxu0 %v98
    %484 = vmatprep.subr.mxu0 %v102
    %485 = vmatpush1.msra.mxu0 %v101
    %486 = vmatprep.subr.mxu0 %v105
    %487 = vmatpush1.msra.mxu0 %v104
    %488 = vmatprep.subr.mxu0 %v108
    %489 = vmatpush1.msra.mxu0 %v107
    %490 = vmatprep.subr.mxu0 0.0
    %491 = vmatpush1.msra.mxu0 0.0
    %492 = vmatprep.subr.mxu0 0.0
    %493 = vmatpush1.msra.mxu0 0.0
    %494 = vmatprep.subr.mxu0 0.0
    %495 = vmatpush1.msra.mxu0 0.0
    %496 = vmatprep.subr.mxu0 0.0
    %497 = vmatpush1.msra.mxu0 0.0
    %498 = vmatprep.subr.mxu0 0.0
    %499 = vmatpush1.msra.mxu0 0.0
    %500 = vmatprep.subr.mxu0 0.0
    %501 = vmatpush1.msra.mxu0 0.0
    %502 = vmatprep.subr.mxu0 0.0
    %503 = vmatpush1.msra.mxu0 0.0
    %504 = vmatprep.subr.mxu0 0.0
    %505 = vmatpush1.msra.mxu0 0.0
    %506 = vmatprep.subr.mxu0 0.0
    %507 = vmatpush1.msra.mxu0 0.0
    %508 = vmatprep.subr.mxu0 0.0
    %509 = vmatpush1.msra.mxu0 0.0
    %510 = vmatprep.subr.mxu0 0.0
    %511 = vmatpush1.msra.mxu0 0.0
    %512 = vmatprep.subr.mxu0 0.0
    %513 = vmatpush1.msra.mxu0 0.0
    %514 = vmatprep.subr.mxu0 0.0
    %515 = vmatpush1.msra.mxu0 0.0
    %516 = vmatprep.subr.mxu0 0.0
    %517 = vmatpush1.msra.mxu0 0.0
    %518 = vmatprep.subr.mxu0 0.0
    %519 = vmatpush1.msra.mxu0 0.0
    %520 = vmatprep.subr.mxu0 0.0
    %521 = vmatpush1.msra.mxu0 0.0
    %522 = vmatprep.mubr.f32.mxu0 0.0
    %523 = vmatmul.mubr.f32.gmra.mrb[0].mxu0 %v456
    %v524 = vpop.f32.mrb[0].mxu0
    %v525 = vadd.f32 0.0, %v524
    %v526 = vpop.f32.mrb[0].mxu0
    %v527 = vadd.f32 0.0, %v526
    %528 = vdwg.mxu0
    %529 = vmatprep.subr.mxu0 0.0
    %530 = vmatpush1.msra.mxu0 %v64
    %531 = vmatprep.subr.mxu0 0.0
    %532 = vmatpush1.msra.mxu0 %v67
    %533 = vmatprep.subr.mxu0 0.0
    %534 = vmatpush1.msra.mxu0 %v70
    %535 = vmatprep.subr.mxu0 0.0
    %536 = vmatpush1.msra.mxu0 %v73
    %537 = vmatprep.subr.mxu0 0.0
    %538 = vmatpush1.msra.mxu0 %v76
    %539 = vmatprep.subr.mxu0 0.0
    %540 = vmatpush1.msra.mxu0 %v79
    %541 = vmatprep.subr.mxu0 0.0
    %542 = vmatpush1.msra.mxu0 %v82
    %543 = vmatprep.subr.mxu0 0.0
    %544 = vmatpush1.msra.mxu0 %v85
    %545 = vmatprep.subr.mxu0 0.0
    %546 = vmatpush1.msra.mxu0 %v88
    %547 = vmatprep.subr.mxu0 0.0
    %548 = vmatpush1.msra.mxu0 %v91
    %549 = vmatprep.subr.mxu0 0.0
    %550 = vmatpush1.msra.mxu0 %v94
    %551 = vmatprep.subr.mxu0 0.0
    %552 = vmatpush1.msra.mxu0 %v97
    %553 = vmatprep.subr.mxu0 0.0
    %554 = vmatpush1.msra.mxu0 %v100
    %555 = vmatprep.subr.mxu0 0.0
    %556 = vmatpush1.msra.mxu0 %v103
    %557 = vmatprep.subr.mxu0 0.0
    %558 = vmatpush1.msra.mxu0 %v106
    %559 = vmatprep.subr.mxu0 0.0
    %560 = vmatpush1.msra.mxu0 %v109
    %561 = vmatprep.subr.mxu0 0.0
    %562 = vmatpush1.msra.mxu0 0.0
    %563 = vmatprep.subr.mxu0 0.0
    %564 = vmatpush1.msra.mxu0 0.0
    %565 = vmatprep.subr.mxu0 0.0
    %566 = vmatpush1.msra.mxu0 0.0
    %567 = vmatprep.subr.mxu0 0.0
    %568 = vmatpush1.msra.mxu0 0.0
    %569 = vmatprep.subr.mxu0 0.0
    %570 = vmatpush1.msra.mxu0 0.0
    %571 = vmatprep.subr.mxu0 0.0
    %572 = vmatpush1.msra.mxu0 0.0
    %573 = vmatprep.subr.mxu0 0.0
    %574 = vmatpush1.msra.mxu0 0.0
    %575 = vmatprep.subr.mxu0 0.0
    %576 = vmatpush1.msra.mxu0 0.0
    %577 = vmatprep.subr.mxu0 0.0
    %578 = vmatpush1.msra.mxu0 0.0
    %579 = vmatprep.subr.mxu0 0.0
    %580 = vmatpush1.msra.mxu0 0.0
    %581 = vmatprep.subr.mxu0 0.0
    %582 = vmatpush1.msra.mxu0 0.0
    %583 = vmatprep.subr.mxu0 0.0
    %584 = vmatpush1.msra.mxu0 0.0
    %585 = vmatprep.subr.mxu0 0.0
    %586 = vmatpush1.msra.mxu0 0.0
    %587 = vmatprep.subr.mxu0 0.0
    %588 = vmatpush1.msra.mxu0 0.0
    %589 = vmatprep.subr.mxu0 0.0
    %590 = vmatpush1.msra.mxu0 0.0
    %591 = vmatprep.subr.mxu0 0.0
    %592 = vmatpush1.msra.mxu0 0.0
    %593 = vmatprep.mubr.f32.mxu0 0.0
    %594 = vmatmul.mubr.f32.gmra.mrb[0].mxu0 %v456
    %v595 = vpop.f32.mrb[0].mxu0
    %v596 = vadd.f32 0.0, %v595
    %v597 = vpop.f32.mrb[0].mxu0
    %598 = vdwg.mxu0
    %v600 = vrot.slane %v525, 6
    %v602 = vadd.f32 %v202, %v600
    %v603 = vxor.u32 %v602, 2147483648
    %v604 = vmul.f32 %v603, 1.442695
    %v605 = vpow.pop %v604
    %v606 = vadd.f32 %v605, 1.0
    %v607 = vrcp.pop %v606
    %v608 = vmul.f32 1.0, %v607
    %v610 = vrot.slane %v527, 6
    %v612 = vadd.f32 %v204, %v610
    %v613 = vxor.u32 %v612, 2147483648
    %v614 = vmul.f32 %v613, 1.442695
    %v615 = vpow.pop %v614
    %v616 = vadd.f32 %v615, 1.0
    %v617 = vrcp.pop %v616
    %v618 = vmul.f32 1.0, %v617
    %v619 = vadd.f32 %v596, %v291
    %v621 = vrot.slane %v619, 6
    %v623 = vmul.f32 %v608, %v621
    %v624 = vadd.f32 %v279, %v623
    %v625 = vtanh.pop %v624
    %v626 = vsub.f32 1.0, %v618
    %v627 = vmul.f32 %v626, %v625
    %v629 = vrot.slane %v456, 6
    %v631 = vmul.f32 %v618, %v629
    %v632 = vadd.f32 %v627, %v631
    %633 = vst [vmem:[#allocation2] sm:$0xc] %v632
    %v635 = vrot.slane %v632, 2
    %637 = vmatprep.subr.mxu0 %v63
    %638 = vmatpush1.msra.mxu0 %v62
    %639 = vmatprep.subr.mxu0 %v66
    %640 = vmatpush1.msra.mxu0 %v65
    %641 = vmatprep.subr.mxu0 %v69
    %642 = vmatpush1.msra.mxu0 %v68
    %643 = vmatprep.subr.mxu0 %v72
    %644 = vmatpush1.msra.mxu0 %v71
    %645 = vmatprep.subr.mxu0 %v75
    %646 = vmatpush1.msra.mxu0 %v74
    %647 = vmatprep.subr.mxu0 %v78
    %648 = vmatpush1.msra.mxu0 %v77
    %649 = vmatprep.subr.mxu0 %v81
    %650 = vmatpush1.msra.mxu0 %v80
    %651 = vmatprep.subr.mxu0 %v84
    %652 = vmatpush1.msra.mxu0 %v83
    %653 = vmatprep.subr.mxu0 %v87
    %654 = vmatpush1.msra.mxu0 %v86
    %655 = vmatprep.subr.mxu0 %v90
    %656 = vmatpush1.msra.mxu0 %v89
    %657 = vmatprep.subr.mxu0 %v93
    %658 = vmatpush1.msra.mxu0 %v92
    %659 = vmatprep.subr.mxu0 %v96
    %660 = vmatpush1.msra.mxu0 %v95
    %661 = vmatprep.subr.mxu0 %v99
    %662 = vmatpush1.msra.mxu0 %v98
    %663 = vmatprep.subr.mxu0 %v102
    %664 = vmatpush1.msra.mxu0 %v101
    %665 = vmatprep.subr.mxu0 %v105
    %666 = vmatpush1.msra.mxu0 %v104
    %667 = vmatprep.subr.mxu0 %v108
    %668 = vmatpush1.msra.mxu0 %v107
    %669 = vmatprep.subr.mxu0 0.0
    %670 = vmatpush1.msra.mxu0 0.0
    %671 = vmatprep.subr.mxu0 0.0
    %672 = vmatpush1.msra.mxu0 0.0
    %673 = vmatprep.subr.mxu0 0.0
    %674 = vmatpush1.msra.mxu0 0.0
    %675 = vmatprep.subr.mxu0 0.0
    %676 = vmatpush1.msra.mxu0 0.0
    %677 = vmatprep.subr.mxu0 0.0
    %678 = vmatpush1.msra.mxu0 0.0
    %679 = vmatprep.subr.mxu0 0.0
    %680 = vmatpush1.msra.mxu0 0.0
    %681 = vmatprep.subr.mxu0 0.0
    %682 = vmatpush1.msra.mxu0 0.0
    %683 = vmatprep.subr.mxu0 0.0
    %684 = vmatpush1.msra.mxu0 0.0
    %685 = vmatprep.subr.mxu0 0.0
    %686 = vmatpush1.msra.mxu0 0.0
    %687 = vmatprep.subr.mxu0 0.0
    %688 = vmatpush1.msra.mxu0 0.0
    %689 = vmatprep.subr.mxu0 0.0
    %690 = vmatpush1.msra.mxu0 0.0
    %691 = vmatprep.subr.mxu0 0.0
    %692 = vmatpush1.msra.mxu0 0.0
    %693 = vmatprep.subr.mxu0 0.0
    %694 = vmatpush1.msra.mxu0 0.0
    %695 = vmatprep.subr.mxu0 0.0
    %696 = vmatpush1.msra.mxu0 0.0
    %697 = vmatprep.subr.mxu0 0.0
    %698 = vmatpush1.msra.mxu0 0.0
    %699 = vmatprep.subr.mxu0 0.0
    %700 = vmatpush1.msra.mxu0 0.0
    %701 = vmatprep.mubr.f32.mxu0 0.0
    %702 = vmatmul.mubr.f32.gmra.mrb[0].mxu0 %v635
    %v703 = vpop.f32.mrb[0].mxu0
    %v704 = vadd.f32 0.0, %v703
    %v705 = vpop.f32.mrb[0].mxu0
    %v706 = vadd.f32 0.0, %v705
    %707 = vdwg.mxu0
    %708 = vmatprep.subr.mxu0 0.0
    %709 = vmatpush1.msra.mxu0 %v64
    %710 = vmatprep.subr.mxu0 0.0
    %711 = vmatpush1.msra.mxu0 %v67
    %712 = vmatprep.subr.mxu0 0.0
    %713 = vmatpush1.msra.mxu0 %v70
    %714 = vmatprep.subr.mxu0 0.0
    %715 = vmatpush1.msra.mxu0 %v73
    %716 = vmatprep.subr.mxu0 0.0
    %717 = vmatpush1.msra.mxu0 %v76
    %718 = vmatprep.subr.mxu0 0.0
    %719 = vmatpush1.msra.mxu0 %v79
    %720 = vmatprep.subr.mxu0 0.0
    %721 = vmatpush1.msra.mxu0 %v82
    %722 = vmatprep.subr.mxu0 0.0
    %723 = vmatpush1.msra.mxu0 %v85
    %724 = vmatprep.subr.mxu0 0.0
    %725 = vmatpush1.msra.mxu0 %v88
    %726 = vmatprep.subr.mxu0 0.0
    %727 = vmatpush1.msra.mxu0 %v91
    %728 = vmatprep.subr.mxu0 0.0
    %729 = vmatpush1.msra.mxu0 %v94
    %730 = vmatprep.subr.mxu0 0.0
    %731 = vmatpush1.msra.mxu0 %v97
    %732 = vmatprep.subr.mxu0 0.0
    %733 = vmatpush1.msra.mxu0 %v100
    %734 = vmatprep.subr.mxu0 0.0
    %735 = vmatpush1.msra.mxu0 %v103
    %736 = vmatprep.subr.mxu0 0.0
    %737 = vmatpush1.msra.mxu0 %v106
    %738 = vmatprep.subr.mxu0 0.0
    %739 = vmatpush1.msra.mxu0 %v109
    %740 = vmatprep.subr.mxu0 0.0
    %741 = vmatpush1.msra.mxu0 0.0
    %742 = vmatprep.subr.mxu0 0.0
    %743 = vmatpush1.msra.mxu0 0.0
    %744 = vmatprep.subr.mxu0 0.0
    %745 = vmatpush1.msra.mxu0 0.0
    %746 = vmatprep.subr.mxu0 0.0
    %747 = vmatpush1.msra.mxu0 0.0
    %748 = vmatprep.subr.mxu0 0.0
    %749 = vmatpush1.msra.mxu0 0.0
    %750 = vmatprep.subr.mxu0 0.0
    %751 = vmatpush1.msra.mxu0 0.0
    %752 = vmatprep.subr.mxu0 0.0
    %753 = vmatpush1.msra.mxu0 0.0
    %754 = vmatprep.subr.mxu0 0.0
    %755 = vmatpush1.msra.mxu0 0.0
    %756 = vmatprep.subr.mxu0 0.0
    %757 = vmatpush1.msra.mxu0 0.0
    %758 = vmatprep.subr.mxu0 0.0
    %759 = vmatpush1.msra.mxu0 0.0
    %760 = vmatprep.subr.mxu0 0.0
    %761 = vmatpush1.msra.mxu0 0.0
    %762 = vmatprep.subr.mxu0 0.0
    %763 = vmatpush1.msra.mxu0 0.0
    %764 = vmatprep.subr.mxu0 0.0
    %765 = vmatpush1.msra.mxu0 0.0
    %766 = vmatprep.subr.mxu0 0.0
    %767 = vmatpush1.msra.mxu0 0.0
    %768 = vmatprep.subr.mxu0 0.0
    %769 = vmatpush1.msra.mxu0 0.0
    %770 = vmatprep.subr.mxu0 0.0
    %771 = vmatpush1.msra.mxu0 0.0
    %772 = vmatprep.mubr.f32.mxu0 0.0
    %773 = vmatmul.mubr.f32.gmra.mrb[0].mxu0 %v635
    %v774 = vpop.f32.mrb[0].mxu0
    %v775 = vadd.f32 0.0, %v774
    %v776 = vpop.f32.mrb[0].mxu0
    %777 = vdwg.mxu0
    %v779 = vrot.slane %v704, 4
    %v781 = vadd.f32 %v202, %v779
    %v782 = vxor.u32 %v781, 2147483648
    %v783 = vmul.f32 %v782, 1.442695
    %v784 = vpow.pop %v783
    %v785 = vadd.f32 %v784, 1.0
    %v786 = vrcp.pop %v785
    %v787 = vmul.f32 1.0, %v786
    %v789 = vrot.slane %v706, 4
    %v791 = vadd.f32 %v204, %v789
    %v792 = vxor.u32 %v791, 2147483648
    %v793 = vmul.f32 %v792, 1.442695
    %v794 = vpow.pop %v793
    %v795 = vadd.f32 %v794, 1.0
    %v796 = vrcp.pop %v795
    %v797 = vmul.f32 1.0, %v796
    %v798 = vadd.f32 %v775, %v291
    %v800 = vrot.slane %v798, 4
    %v802 = vmul.f32 %v787, %v800
    %v803 = vadd.f32 %v279, %v802
    %v804 = vtanh.pop %v803
    %v805 = vsub.f32 1.0, %v797
    %v806 = vmul.f32 %v805, %v804
    %v807 = vrot.slane %v632, 6
    %v809 = vmul.f32 %v797, %v807
    %v810 = vadd.f32 %v806, %v809
    %811 = vst [vmem:[#allocation2] sm:$0x30] %v810
    %v813 = vrot.slane %v810, 4
    %815 = vmatprep.subr.mxu0 %v63
    %816 = vmatpush1.msra.mxu0 %v62
    %817 = vmatprep.subr.mxu0 %v66
    %818 = vmatpush1.msra.mxu0 %v65
    %819 = vmatprep.subr.mxu0 %v69
    %820 = vmatpush1.msra.mxu0 %v68
    %821 = vmatprep.subr.mxu0 %v72
    %822 = vmatpush1.msra.mxu0 %v71
    %823 = vmatprep.subr.mxu0 %v75
    %824 = vmatpush1.msra.mxu0 %v74
    %825 = vmatprep.subr.mxu0 %v78
    %826 = vmatpush1.msra.mxu0 %v77
    %827 = vmatprep.subr.mxu0 %v81
    %828 = vmatpush1.msra.mxu0 %v80
    %829 = vmatprep.subr.mxu0 %v84
    %830 = vmatpush1.msra.mxu0 %v83
    %831 = vmatprep.subr.mxu0 %v87
    %832 = vmatpush1.msra.mxu0 %v86
    %833 = vmatprep.subr.mxu0 %v90
    %834 = vmatpush1.msra.mxu0 %v89
    %835 = vmatprep.subr.mxu0 %v93
    %836 = vmatpush1.msra.mxu0 %v92
    %837 = vmatprep.subr.mxu0 %v96
    %838 = vmatpush1.msra.mxu0 %v95
    %839 = vmatprep.subr.mxu0 %v99
    %840 = vmatpush1.msra.mxu0 %v98
    %841 = vmatprep.subr.mxu0 %v102
    %842 = vmatpush1.msra.mxu0 %v101
    %843 = vmatprep.subr.mxu0 %v105
    %844 = vmatpush1.msra.mxu0 %v104
    %845 = vmatprep.subr.mxu0 %v108
    %846 = vmatpush1.msra.mxu0 %v107
    %847 = vmatprep.subr.mxu0 0.0
    %848 = vmatpush1.msra.mxu0 0.0
    %849 = vmatprep.subr.mxu0 0.0
    %850 = vmatpush1.msra.mxu0 0.0
    %851 = vmatprep.subr.mxu0 0.0
    %852 = vmatpush1.msra.mxu0 0.0
    %853 = vmatprep.subr.mxu0 0.0
    %854 = vmatpush1.msra.mxu0 0.0
    %855 = vmatprep.subr.mxu0 0.0
    %856 = vmatpush1.msra.mxu0 0.0
    %857 = vmatprep.subr.mxu0 0.0
    %858 = vmatpush1.msra.mxu0 0.0
    %859 = vmatprep.subr.mxu0 0.0
    %860 = vmatpush1.msra.mxu0 0.0
    %861 = vmatprep.subr.mxu0 0.0
    %862 = vmatpush1.msra.mxu0 0.0
    %863 = vmatprep.subr.mxu0 0.0
    %864 = vmatpush1.msra.mxu0 0.0
    %865 = vmatprep.subr.mxu0 0.0
    %866 = vmatpush1.msra.mxu0 0.0
    %867 = vmatprep.subr.mxu0 0.0
    %868 = vmatpush1.msra.mxu0 0.0
    %869 = vmatprep.subr.mxu0 0.0
    %870 = vmatpush1.msra.mxu0 0.0
    %871 = vmatprep.subr.mxu0 0.0
    %872 = vmatpush1.msra.mxu0 0.0
    %873 = vmatprep.subr.mxu0 0.0
    %874 = vmatpush1.msra.mxu0 0.0
    %875 = vmatprep.subr.mxu0 0.0
    %876 = vmatpush1.msra.mxu0 0.0
    %877 = vmatprep.subr.mxu0 0.0
    %878 = vmatpush1.msra.mxu0 0.0
    %879 = vmatprep.mubr.f32.mxu0 0.0
    %880 = vmatmul.mubr.f32.gmra.mrb[0].mxu0 %v813
    %v881 = vpop.f32.mrb[0].mxu0
    %v882 = vadd.f32 0.0, %v881
    %v883 = vpop.f32.mrb[0].mxu0
    %v884 = vadd.f32 0.0, %v883
    %885 = vdwg.mxu0
    %886 = vmatprep.subr.mxu0 0.0
    %887 = vmatpush1.msra.mxu0 %v64
    %888 = vmatprep.subr.mxu0 0.0
    %889 = vmatpush1.msra.mxu0 %v67
    %890 = vmatprep.subr.mxu0 0.0
    %891 = vmatpush1.msra.mxu0 %v70
    %892 = vmatprep.subr.mxu0 0.0
    %893 = vmatpush1.msra.mxu0 %v73
    %894 = vmatprep.subr.mxu0 0.0
    %895 = vmatpush1.msra.mxu0 %v76
    %896 = vmatprep.subr.mxu0 0.0
    %897 = vmatpush1.msra.mxu0 %v79
    %898 = vmatprep.subr.mxu0 0.0
    %899 = vmatpush1.msra.mxu0 %v82
    %900 = vmatprep.subr.mxu0 0.0
    %901 = vmatpush1.msra.mxu0 %v85
    %902 = vmatprep.subr.mxu0 0.0
    %903 = vmatpush1.msra.mxu0 %v88
    %904 = vmatprep.subr.mxu0 0.0
    %905 = vmatpush1.msra.mxu0 %v91
    %906 = vmatprep.subr.mxu0 0.0
    %907 = vmatpush1.msra.mxu0 %v94
    %908 = vmatprep.subr.mxu0 0.0
    %909 = vmatpush1.msra.mxu0 %v97
    %910 = vmatprep.subr.mxu0 0.0
    %911 = vmatpush1.msra.mxu0 %v100
    %912 = vmatprep.subr.mxu0 0.0
    %913 = vmatpush1.msra.mxu0 %v103
    %914 = vmatprep.subr.mxu0 0.0
    %915 = vmatpush1.msra.mxu0 %v106
    %916 = vmatprep.subr.mxu0 0.0
    %917 = vmatpush1.msra.mxu0 %v109
    %918 = vmatprep.subr.mxu0 0.0
    %919 = vmatpush1.msra.mxu0 0.0
    %920 = vmatprep.subr.mxu0 0.0
    %921 = vmatpush1.msra.mxu0 0.0
    %922 = vmatprep.subr.mxu0 0.0
    %923 = vmatpush1.msra.mxu0 0.0
    %924 = vmatprep.subr.mxu0 0.0
    %925 = vmatpush1.msra.mxu0 0.0
    %926 = vmatprep.subr.mxu0 0.0
    %927 = vmatpush1.msra.mxu0 0.0
    %928 = vmatprep.subr.mxu0 0.0
    %929 = vmatpush1.msra.mxu0 0.0
    %930 = vmatprep.subr.mxu0 0.0
    %931 = vmatpush1.msra.mxu0 0.0
    %932 = vmatprep.subr.mxu0 0.0
    %933 = vmatpush1.msra.mxu0 0.0
    %934 = vmatprep.subr.mxu0 0.0
    %935 = vmatpush1.msra.mxu0 0.0
    %936 = vmatprep.subr.mxu0 0.0
    %937 = vmatpush1.msra.mxu0 0.0
    %938 = vmatprep.subr.mxu0 0.0
    %939 = vmatpush1.msra.mxu0 0.0
    %940 = vmatprep.subr.mxu0 0.0
    %941 = vmatpush1.msra.mxu0 0.0
    %942 = vmatprep.subr.mxu0 0.0
    %943 = vmatpush1.msra.mxu0 0.0
    %944 = vmatprep.subr.mxu0 0.0
    %945 = vmatpush1.msra.mxu0 0.0
    %946 = vmatprep.subr.mxu0 0.0
    %947 = vmatpush1.msra.mxu0 0.0
    %948 = vmatprep.subr.mxu0 0.0
    %949 = vmatpush1.msra.mxu0 0.0
    %950 = vmatprep.mubr.f32.mxu0 0.0
    %951 = vmatmul.mubr.f32.gmra.mrb[0].mxu0 %v813
    %v952 = vpop.f32.mrb[0].mxu0
    %v953 = vadd.f32 0.0, %v952
    %v954 = vpop.f32.mrb[0].mxu0
    %955 = vdwg.mxu0
    %v957 = vrot.slane %v882, 2
    %v959 = vadd.f32 %v202, %v957
    %v960 = vxor.u32 %v959, 2147483648
    %v961 = vmul.f32 %v960, 1.442695
    %v962 = vpow.pop %v961
    %v963 = vadd.f32 %v962, 1.0
    %v964 = vrcp.pop %v963
    %v965 = vmul.f32 1.0, %v964
    %v967 = vrot.slane %v884, 2
    %v969 = vadd.f32 %v204, %v967
    %v970 = vxor.u32 %v969, 2147483648
    %v971 = vmul.f32 %v970, 1.442695
    %v972 = vpow.pop %v971
    %v973 = vadd.f32 %v972, 1.0
    %v974 = vrcp.pop %v973
    %v975 = vmul.f32 1.0, %v974
    %v976 = vadd.f32 %v953, %v291
    %v978 = vrot.slane %v976, 2
    %v980 = vmul.f32 %v965, %v978
    %v981 = vadd.f32 %v279, %v980
    %v982 = vtanh.pop %v981
    %v983 = vsub.f32 1.0, %v975
    %v984 = vmul.f32 %v983, %v982
    %v985 = vrot.slane %v810, 6
    %v987 = vmul.f32 %v975, %v985
    %v988 = vadd.f32 %v984, %v987
    %989 = vst [vmem:[#allocation2] sm:$0xc0] %v988
    %v991 = vrot.slane %v988, 6
    %993 = vmatprep.subr.mxu0 %v63
    %994 = vmatpush1.msra.mxu0 %v62
    %995 = vmatprep.subr.mxu0 %v66
    %996 = vmatpush1.msra.mxu0 %v65
    %997 = vmatprep.subr.mxu0 %v69
    %998 = vmatpush1.msra.mxu0 %v68
    %999 = vmatprep.subr.mxu0 %v72
    %1000 = vmatpush1.msra.mxu0 %v71
    %1001 = vmatprep.subr.mxu0 %v75
    %1002 = vmatpush1.msra.mxu0 %v74
    %1003 = vmatprep.subr.mxu0 %v78
    %1004 = vmatpush1.msra.mxu0 %v77
    %1005 = vmatprep.subr.mxu0 %v81
    %1006 = vmatpush1.msra.mxu0 %v80
    %1007 = vmatprep.subr.mxu0 %v84
    %1008 = vmatpush1.msra.mxu0 %v83
    %1009 = vmatprep.subr.mxu0 %v87
    %1010 = vmatpush1.msra.mxu0 %v86
    %1011 = vmatprep.subr.mxu0 %v90
    %1012 = vmatpush1.msra.mxu0 %v89
    %1013 = vmatprep.subr.mxu0 %v93
    %1014 = vmatpush1.msra.mxu0 %v92
    %1015 = vmatprep.subr.mxu0 %v96
    %1016 = vmatpush1.msra.mxu0 %v95
    %1017 = vmatprep.subr.mxu0 %v99
    %1018 = vmatpush1.msra.mxu0 %v98
    %1019 = vmatprep.subr.mxu0 %v102
    %1020 = vmatpush1.msra.mxu0 %v101
    %1021 = vmatprep.subr.mxu0 %v105
    %1022 = vmatpush1.msra.mxu0 %v104
    %1023 = vmatprep.subr.mxu0 %v108
    %1024 = vmatpush1.msra.mxu0 %v107
    %1025 = vmatprep.subr.mxu0 0.0
    %1026 = vmatpush1.msra.mxu0 0.0
    %1027 = vmatprep.subr.mxu0 0.0
    %1028 = vmatpush1.msra.mxu0 0.0
    %1029 = vmatprep.subr.mxu0 0.0
    %1030 = vmatpush1.msra.mxu0 0.0
    %1031 = vmatprep.subr.mxu0 0.0
    %1032 = vmatpush1.msra.mxu0 0.0
    %1033 = vmatprep.subr.mxu0 0.0
    %1034 = vmatpush1.msra.mxu0 0.0
    %1035 = vmatprep.subr.mxu0 0.0
    %1036 = vmatpush1.msra.mxu0 0.0
    %1037 = vmatprep.subr.mxu0 0.0
    %1038 = vmatpush1.msra.mxu0 0.0
    %1039 = vmatprep.subr.mxu0 0.0
    %1040 = vmatpush1.msra.mxu0 0.0
    %1041 = vmatprep.subr.mxu0 0.0
    %1042 = vmatpush1.msra.mxu0 0.0
    %1043 = vmatprep.subr.mxu0 0.0
    %1044 = vmatpush1.msra.mxu0 0.0
    %1045 = vmatprep.subr.mxu0 0.0
    %1046 = vmatpush1.msra.mxu0 0.0
    %1047 = vmatprep.subr.mxu0 0.0
    %1048 = vmatpush1.msra.mxu0 0.0
    %1049 = vmatprep.subr.mxu0 0.0
    %1050 = vmatpush1.msra.mxu0 0.0
    %1051 = vmatprep.subr.mxu0 0.0
    %1052 = vmatpush1.msra.mxu0 0.0
    %1053 = vmatprep.subr.mxu0 0.0
    %1054 = vmatpush1.msra.mxu0 0.0
    %1055 = vmatprep.subr.mxu0 0.0
    %1056 = vmatpush1.msra.mxu0 0.0
    %1057 = vmatprep.mubr.f32.mxu0 0.0
    %1058 = vmatmul.mubr.f32.gmra.mrb[0].mxu0 %v991
    %v1059 = vpop.f32.mrb[0].mxu0
    %v1060 = vadd.f32 0.0, %v1059
    %v1061 = vpop.f32.mrb[0].mxu0
    %v1062 = vadd.f32 0.0, %v1061
    %1063 = vdwg.mxu0
    %1064 = vmatprep.subr.mxu0 0.0
    %1065 = vmatpush1.msra.mxu0 %v64
    %1066 = vmatprep.subr.mxu0 0.0
    %1067 = vmatpush1.msra.mxu0 %v67
    %1068 = vmatprep.subr.mxu0 0.0
    %1069 = vmatpush1.msra.mxu0 %v70
    %1070 = vmatprep.subr.mxu0 0.0
    %1071 = vmatpush1.msra.mxu0 %v73
    %1072 = vmatprep.subr.mxu0 0.0
    %1073 = vmatpush1.msra.mxu0 %v76
    %1074 = vmatprep.subr.mxu0 0.0
    %1075 = vmatpush1.msra.mxu0 %v79
    %1076 = vmatprep.subr.mxu0 0.0
    %1077 = vmatpush1.msra.mxu0 %v82
    %1078 = vmatprep.subr.mxu0 0.0
    %1079 = vmatpush1.msra.mxu0 %v85
    %1080 = vmatprep.subr.mxu0 0.0
    %1081 = vmatpush1.msra.mxu0 %v88
    %1082 = vmatprep.subr.mxu0 0.0
    %1083 = vmatpush1.msra.mxu0 %v91
    %1084 = vmatprep.subr.mxu0 0.0
    %1085 = vmatpush1.msra.mxu0 %v94
    %1086 = vmatprep.subr.mxu0 0.0
    %1087 = vmatpush1.msra.mxu0 %v97
    %1088 = vmatprep.subr.mxu0 0.0
    %1089 = vmatpush1.msra.mxu0 %v100
    %1090 = vmatprep.subr.mxu0 0.0
    %1091 = vmatpush1.msra.mxu0 %v103
    %1092 = vmatprep.subr.mxu0 0.0
    %1093 = vmatpush1.msra.mxu0 %v106
    %1094 = vmatprep.subr.mxu0 0.0
    %1095 = vmatpush1.msra.mxu0 %v109
    %1096 = vmatprep.subr.mxu0 0.0
    %1097 = vmatpush1.msra.mxu0 0.0
    %1098 = vmatprep.subr.mxu0 0.0
    %1099 = vmatpush1.msra.mxu0 0.0
    %1100 = vmatprep.subr.mxu0 0.0
    %1101 = vmatpush1.msra.mxu0 0.0
    %1102 = vmatprep.subr.mxu0 0.0
    %1103 = vmatpush1.msra.mxu0 0.0
    %1104 = vmatprep.subr.mxu0 0.0
    %1105 = vmatpush1.msra.mxu0 0.0
    %1106 = vmatprep.subr.mxu0 0.0
    %1107 = vmatpush1.msra.mxu0 0.0
    %1108 = vmatprep.subr.mxu0 0.0
    %1109 = vmatpush1.msra.mxu0 0.0
    %1110 = vmatprep.subr.mxu0 0.0
    %1111 = vmatpush1.msra.mxu0 0.0
    %1112 = vmatprep.subr.mxu0 0.0
    %1113 = vmatpush1.msra.mxu0 0.0
    %1114 = vmatprep.subr.mxu0 0.0
    %1115 = vmatpush1.msra.mxu0 0.0
    %1116 = vmatprep.subr.mxu0 0.0
    %1117 = vmatpush1.msra.mxu0 0.0
    %1118 = vmatprep.subr.mxu0 0.0
    %1119 = vmatpush1.msra.mxu0 0.0
    %1120 = vmatprep.subr.mxu0 0.0
    %1121 = vmatpush1.msra.mxu0 0.0
    %1122 = vmatprep.subr.mxu0 0.0
    %1123 = vmatpush1.msra.mxu0 0.0
    %1124 = vmatprep.subr.mxu0 0.0
    %1125 = vmatpush1.msra.mxu0 0.0
    %1126 = vmatprep.subr.mxu0 0.0
    %1127 = vmatpush1.msra.mxu0 0.0
    %1128 = vmatprep.mubr.f32.mxu0 0.0
    %1129 = vmatmul.mubr.f32.gmra.mrb[0].mxu0 %v991
    %v1130 = vpop.f32.mrb[0].mxu0
    %v1131 = vadd.f32 0.0, %v1130
    %v1132 = vpop.f32.mrb[0].mxu0
    %1133 = vdwg.mxu0
    %v1134 = vadd.f32 %v208, %v1060
    %v1135 = vxor.u32 %v1134, 2147483648
    %v1136 = vmul.f32 %v1135, 1.442695
    %v1137 = vpow.pop %v1136
    %v1138 = vadd.f32 %v1137, 1.0
    %v1139 = vrcp.pop %v1138
    %v1140 = vmul.f32 1.0, %v1139
    %v1141 = vadd.f32 %v210, %v1062
    %v1142 = vxor.u32 %v1141, 2147483648
    %v1143 = vmul.f32 %v1142, 1.442695
    %v1144 = vpow.pop %v1143
    %v1145 = vadd.f32 %v1144, 1.0
    %v1146 = vrcp.pop %v1145
    %v1147 = vmul.f32 1.0, %v1146
    %v1148 = vadd.f32 %v1131, %v291
    %v1149 = vmul.f32 %v1140, %v1148
    %v1150 = vadd.f32 %v284, %v1149
    %v1151 = vtanh.pop %v1150
    %v1152 = vsub.f32 1.0, %v1147
    %v1153 = vmul.f32 %v1152, %v1151
    %v1154 = vmul.f32 %v1147, %v991
    %v1155 = vadd.f32 %v1153, %v1154
    %1156 = vst [vmem:[#allocation2 + $0x8] sm:$0x3] %v1155
    %1157 = vmatprep.subr.mxu0 %v63
    %1158 = vmatpush1.msra.mxu0 %v62
    %1159 = vmatprep.subr.mxu0 %v66
    %1160 = vmatpush1.msra.mxu0 %v65
    %1161 = vmatprep.subr.mxu0 %v69
    %1162 = vmatpush1.msra.mxu0 %v68
    %1163 = vmatprep.subr.mxu0 %v72
    %1164 = vmatpush1.msra.mxu0 %v71
    %1165 = vmatprep.subr.mxu0 %v75
    %1166 = vmatpush1.msra.mxu0 %v74
    %1167 = vmatprep.subr.mxu0 %v78
    %1168 = vmatpush1.msra.mxu0 %v77
    %1169 = vmatprep.subr.mxu0 %v81
    %1170 = vmatpush1.msra.mxu0 %v80
    %1171 = vmatprep.subr.mxu0 %v84
    %1172 = vmatpush1.msra.mxu0 %v83
    %1173 = vmatprep.subr.mxu0 %v87
    %1174 = vmatpush1.msra.mxu0 %v86
    %1175 = vmatprep.subr.mxu0 %v90
    %1176 = vmatpush1.msra.mxu0 %v89
    %1177 = vmatprep.subr.mxu0 %v93
    %1178 = vmatpush1.msra.mxu0 %v92
    %1179 = vmatprep.subr.mxu0 %v96
    %1180 = vmatpush1.msra.mxu0 %v95
    %1181 = vmatprep.subr.mxu0 %v99
    %1182 = vmatpush1.msra.mxu0 %v98
    %1183 = vmatprep.subr.mxu0 %v102
    %1184 = vmatpush1.msra.mxu0 %v101
    %1185 = vmatprep.subr.mxu0 %v105
    %1186 = vmatpush1.msra.mxu0 %v104
    %1187 = vmatprep.subr.mxu0 %v108
    %1188 = vmatpush1.msra.mxu0 %v107
    %1189 = vmatprep.subr.mxu0 0.0
    %1190 = vmatpush1.msra.mxu0 0.0
    %1191 = vmatprep.subr.mxu0 0.0
    %1192 = vmatpush1.msra.mxu0 0.0
    %1193 = vmatprep.subr.mxu0 0.0
    %1194 = vmatpush1.msra.mxu0 0.0
    %1195 = vmatprep.subr.mxu0 0.0
    %1196 = vmatpush1.msra.mxu0 0.0
    %1197 = vmatprep.subr.mxu0 0.0
    %1198 = vmatpush1.msra.mxu0 0.0
    %1199 = vmatprep.subr.mxu0 0.0
    %1200 = vmatpush1.msra.mxu0 0.0
    %1201 = vmatprep.subr.mxu0 0.0
    %1202 = vmatpush1.msra.mxu0 0.0
    %1203 = vmatprep.subr.mxu0 0.0
    %1204 = vmatpush1.msra.mxu0 0.0
    %1205 = vmatprep.subr.mxu0 0.0
    %1206 = vmatpush1.msra.mxu0 0.0
    %1207 = vmatprep.subr.mxu0 0.0
    %1208 = vmatpush1.msra.mxu0 0.0
    %1209 = vmatprep.subr.mxu0 0.0
    %1210 = vmatpush1.msra.mxu0 0.0
    %1211 = vmatprep.subr.mxu0 0.0
    %1212 = vmatpush1.msra.mxu0 0.0
    %1213 = vmatprep.subr.mxu0 0.0
    %1214 = vmatpush1.msra.mxu0 0.0
    %1215 = vmatprep.subr.mxu0 0.0
    %1216 = vmatpush1.msra.mxu0 0.0
    %1217 = vmatprep.subr.mxu0 0.0
    %1218 = vmatpush1.msra.mxu0 0.0
    %1219 = vmatprep.subr.mxu0 0.0
    %1220 = vmatpush1.msra.mxu0 0.0
    %1221 = vmatprep.mubr.f32.mxu0 0.0
    %1222 = vmatmul.mubr.f32.gmra.mrb[0].mxu0 %v1155
    %v1223 = vpop.f32.mrb[0].mxu0
    %v1224 = vadd.f32 0.0, %v1223
    %v1225 = vpop.f32.mrb[0].mxu0
    %v1226 = vadd.f32 0.0, %v1225
    %1227 = vdwg.mxu0
    %1228 = vmatprep.subr.mxu0 0.0
    %1229 = vmatpush1.msra.mxu0 %v64
    %1230 = vmatprep.subr.mxu0 0.0
    %1231 = vmatpush1.msra.mxu0 %v67
    %1232 = vmatprep.subr.mxu0 0.0
    %1233 = vmatpush1.msra.mxu0 %v70
    %1234 = vmatprep.subr.mxu0 0.0
    %1235 = vmatpush1.msra.mxu0 %v73
    %1236 = vmatprep.subr.mxu0 0.0
    %1237 = vmatpush1.msra.mxu0 %v76
    %1238 = vmatprep.subr.mxu0 0.0
    %1239 = vmatpush1.msra.mxu0 %v79
    %1240 = vmatprep.subr.mxu0 0.0
    %1241 = vmatpush1.msra.mxu0 %v82
    %1242 = vmatprep.subr.mxu0 0.0
    %1243 = vmatpush1.msra.mxu0 %v85
    %1244 = vmatprep.subr.mxu0 0.0
    %1245 = vmatpush1.msra.mxu0 %v88
    %1246 = vmatprep.subr.mxu0 0.0
    %1247 = vmatpush1.msra.mxu0 %v91
    %1248 = vmatprep.subr.mxu0 0.0
    %1249 = vmatpush1.msra.mxu0 %v94
    %1250 = vmatprep.subr.mxu0 0.0
    %1251 = vmatpush1.msra.mxu0 %v97
    %1252 = vmatprep.subr.mxu0 0.0
    %1253 = vmatpush1.msra.mxu0 %v100
    %1254 = vmatprep.subr.mxu0 0.0
    %1255 = vmatpush1.msra.mxu0 %v103
    %1256 = vmatprep.subr.mxu0 0.0
    %1257 = vmatpush1.msra.mxu0 %v106
    %1258 = vmatprep.subr.mxu0 0.0
    %1259 = vmatpush1.msra.mxu0 %v109
    %1260 = vmatprep.subr.mxu0 0.0
    %1261 = vmatpush1.msra.mxu0 0.0
    %1262 = vmatprep.subr.mxu0 0.0
    %1263 = vmatpush1.msra.mxu0 0.0
    %1264 = vmatprep.subr.mxu0 0.0
    %1265 = vmatpush1.msra.mxu0 0.0
    %1266 = vmatprep.subr.mxu0 0.0
    %1267 = vmatpush1.msra.mxu0 0.0
    %1268 = vmatprep.subr.mxu0 0.0
    %1269 = vmatpush1.msra.mxu0 0.0
    %1270 = vmatprep.subr.mxu0 0.0
    %1271 = vmatpush1.msra.mxu0 0.0
    %1272 = vmatprep.subr.mxu0 0.0
    %1273 = vmatpush1.msra.mxu0 0.0
    %1274 = vmatprep.subr.mxu0 0.0
    %1275 = vmatpush1.msra.mxu0 0.0
    %1276 = vmatprep.subr.mxu0 0.0
    %1277 = vmatpush1.msra.mxu0 0.0
    %1278 = vmatprep.subr.mxu0 0.0
    %1279 = vmatpush1.msra.mxu0 0.0
    %1280 = vmatprep.subr.mxu0 0.0
    %1281 = vmatpush1.msra.mxu0 0.0
    %1282 = vmatprep.subr.mxu0 0.0
    %1283 = vmatpush1.msra.mxu0 0.0
    %1284 = vmatprep.subr.mxu0 0.0
    %1285 = vmatpush1.msra.mxu0 0.0
    %1286 = vmatprep.subr.mxu0 0.0
    %1287 = vmatpush1.msra.mxu0 0.0
    %1288 = vmatprep.subr.mxu0 0.0
    %1289 = vmatpush1.msra.mxu0 0.0
    %1290 = vmatprep.subr.mxu0 0.0
    %1291 = vmatpush1.msra.mxu0 0.0
    %1292 = vmatprep.mubr.f32.mxu0 0.0
    %1293 = vmatmul.mubr.f32.gmra.mrb[0].mxu0 %v1155
    %v1294 = vpop.f32.mrb[0].mxu0
    %v1295 = vadd.f32 0.0, %v1294
    %v1296 = vpop.f32.mrb[0].mxu0
    %1297 = vdwg.mxu0
    %v1299 = vrot.slane %v1224, 6
    %v1301 = vadd.f32 %v208, %v1299
    %v1302 = vxor.u32 %v1301, 2147483648
    %v1303 = vmul.f32 %v1302, 1.442695
    %v1304 = vpow.pop %v1303
    %v1305 = vadd.f32 %v1304, 1.0
    %v1306 = vrcp.pop %v1305
    %v1307 = vmul.f32 1.0, %v1306
    %v1309 = vrot.slane %v1226, 6
    %v1311 = vadd.f32 %v210, %v1309
    %v1312 = vxor.u32 %v1311, 2147483648
    %v1313 = vmul.f32 %v1312, 1.442695
    %v1314 = vpow.pop %v1313
    %v1315 = vadd.f32 %v1314, 1.0
    %v1316 = vrcp.pop %v1315
    %v1317 = vmul.f32 1.0, %v1316
    %v1318 = vadd.f32 %v1295, %v291
    %v1320 = vrot.slane %v1318, 6
    %v1322 = vmul.f32 %v1307, %v1320
    %v1323 = vadd.f32 %v284, %v1322
    %v1324 = vtanh.pop %v1323
    %v1325 = vsub.f32 1.0, %v1317
    %v1326 = vmul.f32 %v1325, %v1324
    %v1328 = vrot.slane %v1155, 6
    %v1330 = vmul.f32 %v1317, %v1328
    %v1331 = vadd.f32 %v1326, %v1330
    %1332 = vst [vmem:[#allocation2 + $0x8] sm:$0xc] %v1331
    %v1334 = vrot.slane %v1331, 2
    %1336 = vmatprep.subr.mxu0 %v63
    %1337 = vmatpush1.msra.mxu0 %v62
    %1338 = vmatprep.subr.mxu0 %v66
    %1339 = vmatpush1.msra.mxu0 %v65
    %1340 = vmatprep.subr.mxu0 %v69
    %1341 = vmatpush1.msra.mxu0 %v68
    %1342 = vmatprep.subr.mxu0 %v72
    %1343 = vmatpush1.msra.mxu0 %v71
    %1344 = vmatprep.subr.mxu0 %v75
    %1345 = vmatpush1.msra.mxu0 %v74
    %1346 = vmatprep.subr.mxu0 %v78
    %1347 = vmatpush1.msra.mxu0 %v77
    %1348 = vmatprep.subr.mxu0 %v81
    %1349 = vmatpush1.msra.mxu0 %v80
    %1350 = vmatprep.subr.mxu0 %v84
    %1351 = vmatpush1.msra.mxu0 %v83
    %1352 = vmatprep.subr.mxu0 %v87
    %1353 = vmatpush1.msra.mxu0 %v86
    %1354 = vmatprep.subr.mxu0 %v90
    %1355 = vmatpush1.msra.mxu0 %v89
    %1356 = vmatprep.subr.mxu0 %v93
    %1357 = vmatpush1.msra.mxu0 %v92
    %1358 = vmatprep.subr.mxu0 %v96
    %1359 = vmatpush1.msra.mxu0 %v95
    %1360 = vmatprep.subr.mxu0 %v99
    %1361 = vmatpush1.msra.mxu0 %v98
    %1362 = vmatprep.subr.mxu0 %v102
    %1363 = vmatpush1.msra.mxu0 %v101
    %1364 = vmatprep.subr.mxu0 %v105
    %1365 = vmatpush1.msra.mxu0 %v104
    %1366 = vmatprep.subr.mxu0 %v108
    %1367 = vmatpush1.msra.mxu0 %v107
    %1368 = vmatprep.subr.mxu0 0.0
    %1369 = vmatpush1.msra.mxu0 0.0
    %1370 = vmatprep.subr.mxu0 0.0
    %1371 = vmatpush1.msra.mxu0 0.0
    %1372 = vmatprep.subr.mxu0 0.0
    %1373 = vmatpush1.msra.mxu0 0.0
    %1374 = vmatprep.subr.mxu0 0.0
    %1375 = vmatpush1.msra.mxu0 0.0
    %1376 = vmatprep.subr.mxu0 0.0
    %1377 = vmatpush1.msra.mxu0 0.0
    %1378 = vmatprep.subr.mxu0 0.0
    %1379 = vmatpush1.msra.mxu0 0.0
    %1380 = vmatprep.subr.mxu0 0.0
    %1381 = vmatpush1.msra.mxu0 0.0
    %1382 = vmatprep.subr.mxu0 0.0
    %1383 = vmatpush1.msra.mxu0 0.0
    %1384 = vmatprep.subr.mxu0 0.0
    %1385 = vmatpush1.msra.mxu0 0.0
    %1386 = vmatprep.subr.mxu0 0.0
    %1387 = vmatpush1.msra.mxu0 0.0
    %1388 = vmatprep.subr.mxu0 0.0
    %1389 = vmatpush1.msra.mxu0 0.0
    %1390 = vmatprep.subr.mxu0 0.0
    %1391 = vmatpush1.msra.mxu0 0.0
    %1392 = vmatprep.subr.mxu0 0.0
    %1393 = vmatpush1.msra.mxu0 0.0
    %1394 = vmatprep.subr.mxu0 0.0
    %1395 = vmatpush1.msra.mxu0 0.0
    %1396 = vmatprep.subr.mxu0 0.0
    %1397 = vmatpush1.msra.mxu0 0.0
    %1398 = vmatprep.subr.mxu0 0.0
    %1399 = vmatpush1.msra.mxu0 0.0
    %1400 = vmatprep.mubr.f32.mxu0 0.0
    %1401 = vmatmul.mubr.f32.gmra.mrb[0].mxu0 %v1334
    %v1402 = vpop.f32.mrb[0].mxu0
    %v1403 = vadd.f32 0.0, %v1402
    %v1404 = vpop.f32.mrb[0].mxu0
    %v1405 = vadd.f32 0.0, %v1404
    %1406 = vdwg.mxu0
    %1407 = vmatprep.subr.mxu0 0.0
    %1408 = vmatpush1.msra.mxu0 %v64
    %1409 = vmatprep.subr.mxu0 0.0
    %1410 = vmatpush1.msra.mxu0 %v67
    %1411 = vmatprep.subr.mxu0 0.0
    %1412 = vmatpush1.msra.mxu0 %v70
    %1413 = vmatprep.subr.mxu0 0.0
    %1414 = vmatpush1.msra.mxu0 %v73
    %1415 = vmatprep.subr.mxu0 0.0
    %1416 = vmatpush1.msra.mxu0 %v76
    %1417 = vmatprep.subr.mxu0 0.0
    %1418 = vmatpush1.msra.mxu0 %v79
    %1419 = vmatprep.subr.mxu0 0.0
    %1420 = vmatpush1.msra.mxu0 %v82
    %1421 = vmatprep.subr.mxu0 0.0
    %1422 = vmatpush1.msra.mxu0 %v85
    %1423 = vmatprep.subr.mxu0 0.0
    %1424 = vmatpush1.msra.mxu0 %v88
    %1425 = vmatprep.subr.mxu0 0.0
    %1426 = vmatpush1.msra.mxu0 %v91
    %1427 = vmatprep.subr.mxu0 0.0
    %1428 = vmatpush1.msra.mxu0 %v94
    %1429 = vmatprep.subr.mxu0 0.0
    %1430 = vmatpush1.msra.mxu0 %v97
    %1431 = vmatprep.subr.mxu0 0.0
    %1432 = vmatpush1.msra.mxu0 %v100
    %1433 = vmatprep.subr.mxu0 0.0
    %1434 = vmatpush1.msra.mxu0 %v103
    %1435 = vmatprep.subr.mxu0 0.0
    %1436 = vmatpush1.msra.mxu0 %v106
    %1437 = vmatprep.subr.mxu0 0.0
    %1438 = vmatpush1.msra.mxu0 %v109
    %1439 = vmatprep.subr.mxu0 0.0
    %1440 = vmatpush1.msra.mxu0 0.0
    %1441 = vmatprep.subr.mxu0 0.0
    %1442 = vmatpush1.msra.mxu0 0.0
    %1443 = vmatprep.subr.mxu0 0.0
    %1444 = vmatpush1.msra.mxu0 0.0
    %1445 = vmatprep.subr.mxu0 0.0
    %1446 = vmatpush1.msra.mxu0 0.0
    %1447 = vmatprep.subr.mxu0 0.0
    %1448 = vmatpush1.msra.mxu0 0.0
    %1449 = vmatprep.subr.mxu0 0.0
    %1450 = vmatpush1.msra.mxu0 0.0
    %1451 = vmatprep.subr.mxu0 0.0
    %1452 = vmatpush1.msra.mxu0 0.0
    %1453 = vmatprep.subr.mxu0 0.0
    %1454 = vmatpush1.msra.mxu0 0.0
    %1455 = vmatprep.subr.mxu0 0.0
    %1456 = vmatpush1.msra.mxu0 0.0
    %1457 = vmatprep.subr.mxu0 0.0
    %1458 = vmatpush1.msra.mxu0 0.0
    %1459 = vmatprep.subr.mxu0 0.0
    %1460 = vmatpush1.msra.mxu0 0.0
    %1461 = vmatprep.subr.mxu0 0.0
    %1462 = vmatpush1.msra.mxu0 0.0
    %1463 = vmatprep.subr.mxu0 0.0
    %1464 = vmatpush1.msra.mxu0 0.0
    %1465 = vmatprep.subr.mxu0 0.0
    %1466 = vmatpush1.msra.mxu0 0.0
    %1467 = vmatprep.subr.mxu0 0.0
    %1468 = vmatpush1.msra.mxu0 0.0
    %1469 = vmatprep.subr.mxu0 0.0
    %1470 = vmatpush1.msra.mxu0 0.0
    %1471 = vmatprep.mubr.f32.mxu0 0.0
    %1472 = vmatmul.mubr.f32.gmra.mrb[0].mxu0 %v1334
    %v1473 = vpop.f32.mrb[0].mxu0
    %v1474 = vadd.f32 0.0, %v1473
    %v1475 = vpop.f32.mrb[0].mxu0
    %1476 = vdwg.mxu0
    %v1478 = vrot.slane %v1403, 4
    %v1480 = vadd.f32 %v208, %v1478
    %v1481 = vxor.u32 %v1480, 2147483648
    %v1482 = vmul.f32 %v1481, 1.442695
    %v1483 = vpow.pop %v1482
    %v1484 = vadd.f32 %v1483, 1.0
    %v1485 = vrcp.pop %v1484
    %v1486 = vmul.f32 1.0, %v1485
    %v1488 = vrot.slane %v1405, 4
    %v1490 = vadd.f32 %v210, %v1488
    %v1491 = vxor.u32 %v1490, 2147483648
    %v1492 = vmul.f32 %v1491, 1.442695
    %v1493 = vpow.pop %v1492
    %v1494 = vadd.f32 %v1493, 1.0
    %v1495 = vrcp.pop %v1494
    %v1496 = vmul.f32 1.0, %v1495
    %v1497 = vadd.f32 %v1474, %v291
    %v1499 = vrot.slane %v1497, 4
    %v1501 = vmul.f32 %v1486, %v1499
    %v1502 = vadd.f32 %v284, %v1501
    %v1503 = vtanh.pop %v1502
    %v1504 = vsub.f32 1.0, %v1496
    %v1505 = vmul.f32 %v1504, %v1503
    %v1506 = vrot.slane %v1331, 6
    %v1508 = vmul.f32 %v1496, %v1506
    %v1509 = vadd.f32 %v1505, %v1508
    %1510 = vst [vmem:[#allocation2 + $0x8] sm:$0x30] %v1509
    %v1512 = vrot.slane %v1509, 4
    %1514 = vmatprep.subr.mxu0 %v63
    %1515 = vmatpush1.msra.mxu0 %v62
    %1516 = vmatprep.subr.mxu0 %v66
    %1517 = vmatpush1.msra.mxu0 %v65
    %1518 = vmatprep.subr.mxu0 %v69
    %1519 = vmatpush1.msra.mxu0 %v68
    %1520 = vmatprep.subr.mxu0 %v72
    %1521 = vmatpush1.msra.mxu0 %v71
    %1522 = vmatprep.subr.mxu0 %v75
    %1523 = vmatpush1.msra.mxu0 %v74
    %1524 = vmatprep.subr.mxu0 %v78
    %1525 = vmatpush1.msra.mxu0 %v77
    %1526 = vmatprep.subr.mxu0 %v81
    %1527 = vmatpush1.msra.mxu0 %v80
    %1528 = vmatprep.subr.mxu0 %v84
    %1529 = vmatpush1.msra.mxu0 %v83
    %1530 = vmatprep.subr.mxu0 %v87
    %1531 = vmatpush1.msra.mxu0 %v86
    %1532 = vmatprep.subr.mxu0 %v90
    %1533 = vmatpush1.msra.mxu0 %v89
    %1534 = vmatprep.subr.mxu0 %v93
    %1535 = vmatpush1.msra.mxu0 %v92
    %1536 = vmatprep.subr.mxu0 %v96
    %1537 = vmatpush1.msra.mxu0 %v95
    %1538 = vmatprep.subr.mxu0 %v99
    %1539 = vmatpush1.msra.mxu0 %v98
    %1540 = vmatprep.subr.mxu0 %v102
    %1541 = vmatpush1.msra.mxu0 %v101
    %1542 = vmatprep.subr.mxu0 %v105
    %1543 = vmatpush1.msra.mxu0 %v104
    %1544 = vmatprep.subr.mxu0 %v108
    %1545 = vmatpush1.msra.mxu0 %v107
    %1546 = vmatprep.subr.mxu0 0.0
    %1547 = vmatpush1.msra.mxu0 0.0
    %1548 = vmatprep.subr.mxu0 0.0
    %1549 = vmatpush1.msra.mxu0 0.0
    %1550 = vmatprep.subr.mxu0 0.0
    %1551 = vmatpush1.msra.mxu0 0.0
    %1552 = vmatprep.subr.mxu0 0.0
    %1553 = vmatpush1.msra.mxu0 0.0
    %1554 = vmatprep.subr.mxu0 0.0
    %1555 = vmatpush1.msra.mxu0 0.0
    %1556 = vmatprep.subr.mxu0 0.0
    %1557 = vmatpush1.msra.mxu0 0.0
    %1558 = vmatprep.subr.mxu0 0.0
    %1559 = vmatpush1.msra.mxu0 0.0
    %1560 = vmatprep.subr.mxu0 0.0
    %1561 = vmatpush1.msra.mxu0 0.0
    %1562 = vmatprep.subr.mxu0 0.0
    %1563 = vmatpush1.msra.mxu0 0.0
    %1564 = vmatprep.subr.mxu0 0.0
    %1565 = vmatpush1.msra.mxu0 0.0
    %1566 = vmatprep.subr.mxu0 0.0
    %1567 = vmatpush1.msra.mxu0 0.0
    %1568 = vmatprep.subr.mxu0 0.0
    %1569 = vmatpush1.msra.mxu0 0.0
    %1570 = vmatprep.subr.mxu0 0.0
    %1571 = vmatpush1.msra.mxu0 0.0
    %1572 = vmatprep.subr.mxu0 0.0
    %1573 = vmatpush1.msra.mxu0 0.0
    %1574 = vmatprep.subr.mxu0 0.0
    %1575 = vmatpush1.msra.mxu0 0.0
    %1576 = vmatprep.subr.mxu0 0.0
    %1577 = vmatpush1.msra.mxu0 0.0
    %1578 = vmatprep.mubr.f32.mxu0 0.0
    %1579 = vmatmul.mubr.f32.gmra.mrb[0].mxu0 %v1512
    %v1580 = vpop.f32.mrb[0].mxu0
    %v1581 = vadd.f32 0.0, %v1580
    %v1582 = vpop.f32.mrb[0].mxu0
    %v1583 = vadd.f32 0.0, %v1582
    %1584 = vdwg.mxu0
    %1585 = vmatprep.subr.mxu0 0.0
    %1586 = vmatpush1.msra.mxu0 %v64
    %1587 = vmatprep.subr.mxu0 0.0
    %1588 = vmatpush1.msra.mxu0 %v67
    %1589 = vmatprep.subr.mxu0 0.0
    %1590 = vmatpush1.msra.mxu0 %v70
    %1591 = vmatprep.subr.mxu0 0.0
    %1592 = vmatpush1.msra.mxu0 %v73
    %1593 = vmatprep.subr.mxu0 0.0
    %1594 = vmatpush1.msra.mxu0 %v76
    %1595 = vmatprep.subr.mxu0 0.0
    %1596 = vmatpush1.msra.mxu0 %v79
    %1597 = vmatprep.subr.mxu0 0.0
    %1598 = vmatpush1.msra.mxu0 %v82
    %1599 = vmatprep.subr.mxu0 0.0
    %1600 = vmatpush1.msra.mxu0 %v85
    %1601 = vmatprep.subr.mxu0 0.0
    %1602 = vmatpush1.msra.mxu0 %v88
    %1603 = vmatprep.subr.mxu0 0.0
    %1604 = vmatpush1.msra.mxu0 %v91
    %1605 = vmatprep.subr.mxu0 0.0
    %1606 = vmatpush1.msra.mxu0 %v94
    %1607 = vmatprep.subr.mxu0 0.0
    %1608 = vmatpush1.msra.mxu0 %v97
    %1609 = vmatprep.subr.mxu0 0.0
    %1610 = vmatpush1.msra.mxu0 %v100
    %1611 = vmatprep.subr.mxu0 0.0
    %1612 = vmatpush1.msra.mxu0 %v103
    %1613 = vmatprep.subr.mxu0 0.0
    %1614 = vmatpush1.msra.mxu0 %v106
    %1615 = vmatprep.subr.mxu0 0.0
    %1616 = vmatpush1.msra.mxu0 %v109
    %1617 = vmatprep.subr.mxu0 0.0
    %1618 = vmatpush1.msra.mxu0 0.0
    %1619 = vmatprep.subr.mxu0 0.0
    %1620 = vmatpush1.msra.mxu0 0.0
    %1621 = vmatprep.subr.mxu0 0.0
    %1622 = vmatpush1.msra.mxu0 0.0
    %1623 = vmatprep.subr.mxu0 0.0
    %1624 = vmatpush1.msra.mxu0 0.0
    %1625 = vmatprep.subr.mxu0 0.0
    %1626 = vmatpush1.msra.mxu0 0.0
    %1627 = vmatprep.subr.mxu0 0.0
    %1628 = vmatpush1.msra.mxu0 0.0
    %1629 = vmatprep.subr.mxu0 0.0
    %1630 = vmatpush1.msra.mxu0 0.0
    %1631 = vmatprep.subr.mxu0 0.0
    %1632 = vmatpush1.msra.mxu0 0.0
    %1633 = vmatprep.subr.mxu0 0.0
    %1634 = vmatpush1.msra.mxu0 0.0
    %1635 = vmatprep.subr.mxu0 0.0
    %1636 = vmatpush1.msra.mxu0 0.0
    %1637 = vmatprep.subr.mxu0 0.0
    %1638 = vmatpush1.msra.mxu0 0.0
    %1639 = vmatprep.subr.mxu0 0.0
    %1640 = vmatpush1.msra.mxu0 0.0
    %1641 = vmatprep.subr.mxu0 0.0
    %1642 = vmatpush1.msra.mxu0 0.0
    %1643 = vmatprep.subr.mxu0 0.0
    %1644 = vmatpush1.msra.mxu0 0.0
    %1645 = vmatprep.subr.mxu0 0.0
    %1646 = vmatpush1.msra.mxu0 0.0
    %1647 = vmatprep.subr.mxu0 0.0
    %1648 = vmatpush1.msra.mxu0 0.0
    %1649 = vmatprep.mubr.f32.mxu0 0.0
    %1650 = vmatmul.mubr.f32.gmra.mrb[0].mxu0 %v1512
    %v1651 = vpop.f32.mrb[0].mxu0
    %v1652 = vadd.f32 0.0, %v1651
    %v1653 = vpop.f32.mrb[0].mxu0
    %1654 = vdwg.mxu0
    %v1656 = vrot.slane %v1581, 2
    %v1658 = vadd.f32 %v208, %v1656
    %v1659 = vxor.u32 %v1658, 2147483648
    %v1660 = vmul.f32 %v1659, 1.442695
    %v1661 = vpow.pop %v1660
    %v1662 = vadd.f32 %v1661, 1.0
    %v1663 = vrcp.pop %v1662
    %v1664 = vmul.f32 1.0, %v1663
    %v1666 = vrot.slane %v1583, 2
    %v1668 = vadd.f32 %v210, %v1666
    %v1669 = vxor.u32 %v1668, 2147483648
    %v1670 = vmul.f32 %v1669, 1.442695
    %v1671 = vpow.pop %v1670
    %v1672 = vadd.f32 %v1671, 1.0
    %v1673 = vrcp.pop %v1672
    %v1674 = vmul.f32 1.0, %v1673
    %v1675 = vadd.f32 %v1652, %v291
    %v1677 = vrot.slane %v1675, 2
    %v1679 = vmul.f32 %v1664, %v1677
    %v1680 = vadd.f32 %v284, %v1679
    %v1681 = vtanh.pop %v1680
    %v1682 = vsub.f32 1.0, %v1674
    %v1683 = vmul.f32 %v1682, %v1681
    %v1684 = vrot.slane %v1509, 6
    %v1686 = vmul.f32 %v1674, %v1684
    %v1687 = vadd.f32 %v1683, %v1686
    %1688 = vst [vmem:[#allocation2 + $0x8] sm:$0xc0] %v1687
    %1689 = vst [vmem:[#allocation5 - $0x6] sm:$0xc0] %v1687
    %v1690 = vld [vmem:[#allocation2] sm:$0xff]
    %v1691 = vld [vmem:[#allocation2 + $0x8] sm:$0xff]
    %v1692 = vld [vmem:[%s6] sm:$0xff]
    %v1693 = vld [vmem:[%s6 + $0x8] sm:$0xff]
    %v1694 = vld [vmem:[%s6 + $0x10] sm:$0xff]
    %v1695 = vld [vmem:[%s6 + $0x18] sm:$0xff]
    %v1696 = vld [vmem:[%s6 + $0x20] sm:$0xff]
    %v1697 = vld [vmem:[%s6 + $0x28] sm:$0xff]
    %v1698 = vld [vmem:[%s6 + $0x30] sm:$0xff]
    %v1699 = vld [vmem:[%s6 + $0x38] sm:$0xff]
    %v1700 = vld [vmem:[%s6 + $0x40] sm:$0xff]
    %v1701 = vld [vmem:[%s6 + $0x48] sm:$0xff]
    %v1702 = vld [vmem:[%s6 + $0x50] sm:$0xff]
    %v1703 = vld [vmem:[%s6 + $0x58] sm:$0xff]
    %v1704 = vld [vmem:[%s6 + $0x60] sm:$0xff]
    %v1705 = vld [vmem:[%s6 + $0x68] sm:$0xff]
    %v1706 = vld [vmem:[%s6 + $0x70] sm:$0xff]
    %v1707 = vld [vmem:[%s6 + $0x78] sm:$0xff]
    %v1708 = vld [vmem:[%s6 + $0x80] sm:$0xff]
    %v1709 = vld [vmem:[%s6 + $0x88] sm:$0xff]
    %v1710 = vld [vmem:[%s6 + $0x90] sm:$0xff]
    %v1711 = vld [vmem:[%s6 + $0x98] sm:$0xff]
    %v1712 = vld [vmem:[%s6 + $0xa0] sm:$0xff]
    %v1713 = vld [vmem:[%s6 + $0xa8] sm:$0xff]
    %v1714 = vld [vmem:[%s6 + $0xb0] sm:$0xff]
    %v1715 = vld [vmem:[%s6 + $0xb8] sm:$0xff]
    %v1716 = vld [vmem:[%s6 + $0xc0] sm:$0xff]
    %v1717 = vld [vmem:[%s6 + $0xc8] sm:$0xff]
    %v1718 = vld [vmem:[%s6 + $0xd0] sm:$0xff]
    %v1719 = vld [vmem:[%s6 + $0xd8] sm:$0xff]
    %v1720 = vld [vmem:[%s6 + $0xe0] sm:$0xff]
    %v1721 = vld [vmem:[%s6 + $0xe8] sm:$0xff]
    %v1722 = vld [vmem:[%s6 + $0xf0] sm:$0xff]
    %v1723 = vld [vmem:[%s6 + $0xf8] sm:$0xff]
    %v1724 = vld [vmem:[%s6 + $0x100] sm:$0xff]
    %v1725 = vld [vmem:[%s6 + $0x108] sm:$0xff]
    %v1726 = vld [vmem:[%s6 + $0x110] sm:$0xff]
    %v1727 = vld [vmem:[%s6 + $0x118] sm:$0xff]
    %v1728 = vld [vmem:[%s6 + $0x120] sm:$0xff]
    %v1729 = vld [vmem:[%s6 + $0x128] sm:$0xff]
    %v1730 = vld [vmem:[%s6 + $0x130] sm:$0xff]
    %v1731 = vld [vmem:[%s6 + $0x138] sm:$0xff]
    %v1732 = vld [vmem:[%s6 + $0x140] sm:$0xff]
    %v1733 = vld [vmem:[%s6 + $0x148] sm:$0xff]
    %v1734 = vld [vmem:[%s6 + $0x150] sm:$0xff]
    %v1735 = vld [vmem:[%s6 + $0x158] sm:$0xff]
    %v1736 = vld [vmem:[%s6 + $0x160] sm:$0xff]
    %v1737 = vld [vmem:[%s6 + $0x168] sm:$0xff]
    %v1738 = vld [vmem:[%s6 + $0x170] sm:$0xff]
    %v1739 = vld [vmem:[%s6 + $0x178] sm:$0xff]
    %v1740 = vld [vmem:[%s7] sm:$0xff]
    %v1741 = vld [vmem:[%s7 + $0x8] sm:$0xff]
    %v1742 = vld [vmem:[%s7 + $0x10] sm:$0xff]
    %v1743 = vld [vmem:[%s7 + $0x18] sm:$0xff]
    %v1744 = vld [vmem:[%s7 + $0x20] sm:$0xff]
    %v1745 = vld [vmem:[%s7 + $0x28] sm:$0xff]
    %v1746 = vld [vmem:[%s7 + $0x30] sm:$0xff]
    %v1747 = vld [vmem:[%s7 + $0x38] sm:$0xff]
    %v1748 = vld [vmem:[%s7 + $0x40] sm:$0xff]
    %v1749 = vld [vmem:[%s7 + $0x48] sm:$0xff]
    %v1750 = vld [vmem:[%s7 + $0x50] sm:$0xff]
    %v1751 = vld [vmem:[%s7 + $0x58] sm:$0xff]
    %v1752 = vld [vmem:[%s7 + $0x60] sm:$0xff]
    %v1753 = vld [vmem:[%s7 + $0x68] sm:$0xff]
    %v1754 = vld [vmem:[%s7 + $0x70] sm:$0xff]
    %v1755 = vld [vmem:[%s7 + $0x78] sm:$0xff]
    %v1756 = vld [vmem:[%s7 + $0x80] sm:$0xff]
    %v1757 = vld [vmem:[%s7 + $0x88] sm:$0xff]
    %v1758 = vld [vmem:[%s7 + $0x90] sm:$0xff]
    %v1759 = vld [vmem:[%s7 + $0x98] sm:$0xff]
    %v1760 = vld [vmem:[%s7 + $0xa0] sm:$0xff]
    %v1761 = vld [vmem:[%s7 + $0xa8] sm:$0xff]
    %v1762 = vld [vmem:[%s7 + $0xb0] sm:$0xff]
    %v1763 = vld [vmem:[%s7 + $0xb8] sm:$0xff]
    %v1764 = vld [vmem:[%s7 + $0xc0] sm:$0xff]
    %v1765 = vld [vmem:[%s7 + $0xc8] sm:$0xff]
    %v1766 = vld [vmem:[%s7 + $0xd0] sm:$0xff]
    %v1767 = vld [vmem:[%s7 + $0xd8] sm:$0xff]
    %v1768 = vld [vmem:[%s7 + $0xe0] sm:$0xff]
    %v1769 = vld [vmem:[%s7 + $0xe8] sm:$0xff]
    %v1770 = vld [vmem:[%s7 + $0xf0] sm:$0xff]
    %v1771 = vld [vmem:[%s7 + $0xf8] sm:$0xff]
    %v1772 = vld [vmem:[%s7 + $0x100] sm:$0xff]
    %v1773 = vld [vmem:[%s7 + $0x108] sm:$0xff]
    %v1774 = vld [vmem:[%s7 + $0x110] sm:$0xff]
    %v1775 = vld [vmem:[%s7 + $0x118] sm:$0xff]
    %v1776 = vld [vmem:[%s7 + $0x120] sm:$0xff]
    %v1777 = vld [vmem:[%s7 + $0x128] sm:$0xff]
    %v1778 = vld [vmem:[%s7 + $0x130] sm:$0xff]
    %v1779 = vld [vmem:[%s7 + $0x138] sm:$0xff]
    %v1780 = vld [vmem:[%s7 + $0x140] sm:$0xff]
    %v1781 = vld [vmem:[%s7 + $0x148] sm:$0xff]
    %v1782 = vld [vmem:[%s7 + $0x150] sm:$0xff]
    %v1783 = vld [vmem:[%s7 + $0x158] sm:$0xff]
    %v1784 = vld [vmem:[%s7 + $0x160] sm:$0xff]
    %v1785 = vld [vmem:[%s7 + $0x168] sm:$0xff]
    %v1786 = vld [vmem:[%s7 + $0x170] sm:$0xff]
    %v1787 = vld [vmem:[%s7 + $0x178] sm:$0xff]
    %v1788 = vld [vmem:[%s8] sm:$0x7]
    %v1789 = vld [vmem:[%s9] sm:$0x1]
    %v1791 = vlaneseq
    %v1792 = vshrl.u32 %v1791, 7
    %v1793 = vsub.s32 0, %v1792
    %v1794 = vrot.slane %v1788, %v1793
    %v1795 = vlaneseq
    %v1796 = vshrl.u32 %v1795, 7
    %v1797 = vsub.s32 1, %v1796
    %v1798 = vrot.slane %v1788, %v1797
    %v1799 = vlaneseq
    %v1800 = vshrl.u32 %v1799, 7
    %v1801 = vsub.s32 2, %v1800
    %v1802 = vrot.slane %v1788, %v1801
    %1806 = vmatprep.subr.mxu0 %v1693
    %1807 = vmatpush1.msra.mxu0 %v1692
    %1808 = vmatprep.subr.mxu0 %v1696
    %1809 = vmatpush1.msra.mxu0 %v1695
    %1810 = vmatprep.subr.mxu0 %v1699
    %1811 = vmatpush1.msra.mxu0 %v1698
    %1812 = vmatprep.subr.mxu0 %v1702
    %1813 = vmatpush1.msra.mxu0 %v1701
    %1814 = vmatprep.subr.mxu0 %v1705
    %1815 = vmatpush1.msra.mxu0 %v1704
    %1816 = vmatprep.subr.mxu0 %v1708
    %1817 = vmatpush1.msra.mxu0 %v1707
    %1818 = vmatprep.subr.mxu0 %v1711
    %1819 = vmatpush1.msra.mxu0 %v1710
    %1820 = vmatprep.subr.mxu0 %v1714
    %1821 = vmatpush1.msra.mxu0 %v1713
    %1822 = vmatprep.subr.mxu0 %v1717
    %1823 = vmatpush1.msra.mxu0 %v1716
    %1824 = vmatprep.subr.mxu0 %v1720
    %1825 = vmatpush1.msra.mxu0 %v1719
    %1826 = vmatprep.subr.mxu0 %v1723
    %1827 = vmatpush1.msra.mxu0 %v1722
    %1828 = vmatprep.subr.mxu0 %v1726
    %1829 = vmatpush1.msra.mxu0 %v1725
    %1830 = vmatprep.subr.mxu0 %v1729
    %1831 = vmatpush1.msra.mxu0 %v1728
    %1832 = vmatprep.subr.mxu0 %v1732
    %1833 = vmatpush1.msra.mxu0 %v1731
    %1834 = vmatprep.subr.mxu0 %v1735
    %1835 = vmatpush1.msra.mxu0 %v1734
    %1836 = vmatprep.subr.mxu0 %v1738
    %1837 = vmatpush1.msra.mxu0 %v1737
    %1838 = vmatprep.subr.mxu0 0.0
    %1839 = vmatpush1.msra.mxu0 0.0
    %1840 = vmatprep.subr.mxu0 0.0
    %1841 = vmatpush1.msra.mxu0 0.0
    %1842 = vmatprep.subr.mxu0 0.0
    %1843 = vmatpush1.msra.mxu0 0.0
    %1844 = vmatprep.subr.mxu0 0.0
    %1845 = vmatpush1.msra.mxu0 0.0
    %1846 = vmatprep.subr.mxu0 0.0
    %1847 = vmatpush1.msra.mxu0 0.0
    %1848 = vmatprep.subr.mxu0 0.0
    %1849 = vmatpush1.msra.mxu0 0.0
    %1850 = vmatprep.subr.mxu0 0.0
    %1851 = vmatpush1.msra.mxu0 0.0
    %1852 = vmatprep.subr.mxu0 0.0
    %1853 = vmatpush1.msra.mxu0 0.0
    %1854 = vmatprep.subr.mxu0 0.0
    %1855 = vmatpush1.msra.mxu0 0.0
    %1856 = vmatprep.subr.mxu0 0.0
    %1857 = vmatpush1.msra.mxu0 0.0
    %1858 = vmatprep.subr.mxu0 0.0
    %1859 = vmatpush1.msra.mxu0 0.0
    %1860 = vmatprep.subr.mxu0 0.0
    %1861 = vmatpush1.msra.mxu0 0.0
    %1862 = vmatprep.subr.mxu0 0.0
    %1863 = vmatpush1.msra.mxu0 0.0
    %1864 = vmatprep.subr.mxu0 0.0
    %1865 = vmatpush1.msra.mxu0 0.0
    %1866 = vmatprep.subr.mxu0 0.0
    %1867 = vmatpush1.msra.mxu0 0.0
    %1868 = vmatprep.subr.mxu0 0.0
    %1869 = vmatpush1.msra.mxu0 0.0
    %1870 = vmatprep.mubr.f32.mxu0 0.0
    %1871 = vmatmul.mubr.f32.gmra.mrb[0].mxu0 %v1690
    %v1872 = vpop.f32.mrb[0].mxu0
    %v1873 = vadd.f32 %v1794, %v1872
    %v1874 = vpop.f32.mrb[0].mxu0
    %v1875 = vadd.f32 %v1798, %v1874
    %1876 = vmatprep.mubr.f32.mxu0 0.0
    %1877 = vmatmul.mubr.f32.gmra.mrb[0].mxu0 %v1691
    %v1878 = vpop.f32.mrb[0].mxu0
    %v1879 = vadd.f32 %v1794, %v1878
    %v1880 = vpop.f32.mrb[0].mxu0
    %v1881 = vadd.f32 %v1798, %v1880
    %1882 = vdwg.mxu0
    %1883 = vmatprep.subr.mxu0 0.0
    %1884 = vmatpush1.msra.mxu0 %v1694
    %1885 = vmatprep.subr.mxu0 0.0
    %1886 = vmatpush1.msra.mxu0 %v1697
    %1887 = vmatprep.subr.mxu0 0.0
    %1888 = vmatpush1.msra.mxu0 %v1700
    %1889 = vmatprep.subr.mxu0 0.0
    %1890 = vmatpush1.msra.mxu0 %v1703
    %1891 = vmatprep.subr.mxu0 0.0
    %1892 = vmatpush1.msra.mxu0 %v1706
    %1893 = vmatprep.subr.mxu0 0.0
    %1894 = vmatpush1.msra.mxu0 %v1709
    %1895 = vmatprep.subr.mxu0 0.0
    %1896 = vmatpush1.msra.mxu0 %v1712
    %1897 = vmatprep.subr.mxu0 0.0
    %1898 = vmatpush1.msra.mxu0 %v1715
    %1899 = vmatprep.subr.mxu0 0.0
    %1900 = vmatpush1.msra.mxu0 %v1718
    %1901 = vmatprep.subr.mxu0 0.0
    %1902 = vmatpush1.msra.mxu0 %v1721
    %1903 = vmatprep.subr.mxu0 0.0
    %1904 = vmatpush1.msra.mxu0 %v1724
    %1905 = vmatprep.subr.mxu0 0.0
    %1906 = vmatpush1.msra.mxu0 %v1727
    %1907 = vmatprep.subr.mxu0 0.0
    %1908 = vmatpush1.msra.mxu0 %v1730
    %1909 = vmatprep.subr.mxu0 0.0
    %1910 = vmatpush1.msra.mxu0 %v1733
    %1911 = vmatprep.subr.mxu0 0.0
    %1912 = vmatpush1.msra.mxu0 %v1736
    %1913 = vmatprep.subr.mxu0 0.0
    %1914 = vmatpush1.msra.mxu0 %v1739
    %1915 = vmatprep.subr.mxu0 0.0
    %1916 = vmatpush1.msra.mxu0 0.0
    %1917 = vmatprep.subr.mxu0 0.0
    %1918 = vmatpush1.msra.mxu0 0.0
    %1919 = vmatprep.subr.mxu0 0.0
    %1920 = vmatpush1.msra.mxu0 0.0
    %1921 = vmatprep.subr.mxu0 0.0
    %1922 = vmatpush1.msra.mxu0 0.0
    %1923 = vmatprep.subr.mxu0 0.0
    %1924 = vmatpush1.msra.mxu0 0.0
    %1925 = vmatprep.subr.mxu0 0.0
    %1926 = vmatpush1.msra.mxu0 0.0
    %1927 = vmatprep.subr.mxu0 0.0
    %1928 = vmatpush1.msra.mxu0 0.0
    %1929 = vmatprep.subr.mxu0 0.0
    %1930 = vmatpush1.msra.mxu0 0.0
    %1931 = vmatprep.subr.mxu0 0.0
    %1932 = vmatpush1.msra.mxu0 0.0
    %1933 = vmatprep.subr.mxu0 0.0
    %1934 = vmatpush1.msra.mxu0 0.0
    %1935 = vmatprep.subr.mxu0 0.0
    %1936 = vmatpush1.msra.mxu0 0.0
    %1937 = vmatprep.subr.mxu0 0.0
    %1938 = vmatpush1.msra.mxu0 0.0
    %1939 = vmatprep.subr.mxu0 0.0
    %1940 = vmatpush1.msra.mxu0 0.0
    %1941 = vmatprep.subr.mxu0 0.0
    %1942 = vmatpush1.msra.mxu0 0.0
    %1943 = vmatprep.subr.mxu0 0.0
    %1944 = vmatpush1.msra.mxu0 0.0
    %1945 = vmatprep.subr.mxu0 0.0
    %1946 = vmatpush1.msra.mxu0 0.0
    %1947 = vmatprep.mubr.f32.mxu0 0.0
    %1948 = vmatmul.mubr.f32.gmra.mrb[0].mxu0 %v1690
    %v1949 = vpop.f32.mrb[0].mxu0
    %v1950 = vadd.f32 %v1802, %v1949
    %v1951 = vpop.f32.mrb[0].mxu0
    %1952 = vmatprep.mubr.f32.mxu0 0.0
    %1953 = vmatmul.mubr.f32.gmra.mrb[0].mxu0 %v1691
    %v1954 = vpop.f32.mrb[0].mxu0
    %v1955 = vadd.f32 %v1802, %v1954
    %v1956 = vpop.f32.mrb[0].mxu0
    %1957 = vdwg.mxu0
    %v1959 = vlaneseq
    %v1960 = vshrl.u32 %v1959, 7
    %v1961 = vsub.s32 0, %v1960
    %v1962 = vrot.slane %v1789, %v1961
    %s1964 = scalar_lea.vmem %s1, 2
    %v1965 = vld [vmem:[%s1964] sm:$0x3]
    %1966 = vmatprep.subr.mxu0 %v1741
    %1967 = vmatpush1.msra.mxu0 %v1740
    %1968 = vmatprep.subr.mxu0 %v1744
    %1969 = vmatpush1.msra.mxu0 %v1743
    %1970 = vmatprep.subr.mxu0 %v1747
    %1971 = vmatpush1.msra.mxu0 %v1746
    %1972 = vmatprep.subr.mxu0 %v1750
    %1973 = vmatpush1.msra.mxu0 %v1749
    %1974 = vmatprep.subr.mxu0 %v1753
    %1975 = vmatpush1.msra.mxu0 %v1752
    %1976 = vmatprep.subr.mxu0 %v1756
    %1977 = vmatpush1.msra.mxu0 %v1755
    %1978 = vmatprep.subr.mxu0 %v1759
    %1979 = vmatpush1.msra.mxu0 %v1758
    %1980 = vmatprep.subr.mxu0 %v1762
    %1981 = vmatpush1.msra.mxu0 %v1761
    %1982 = vmatprep.subr.mxu0 %v1765
    %1983 = vmatpush1.msra.mxu0 %v1764
    %1984 = vmatprep.subr.mxu0 %v1768
    %1985 = vmatpush1.msra.mxu0 %v1767
    %1986 = vmatprep.subr.mxu0 %v1771
    %1987 = vmatpush1.msra.mxu0 %v1770
    %1988 = vmatprep.subr.mxu0 %v1774
    %1989 = vmatpush1.msra.mxu0 %v1773
    %1990 = vmatprep.subr.mxu0 %v1777
    %1991 = vmatpush1.msra.mxu0 %v1776
    %1992 = vmatprep.subr.mxu0 %v1780
    %1993 = vmatpush1.msra.mxu0 %v1779
    %1994 = vmatprep.subr.mxu0 %v1783
    %1995 = vmatpush1.msra.mxu0 %v1782
    %1996 = vmatprep.subr.mxu0 %v1786
    %1997 = vmatpush1.msra.mxu0 %v1785
    %1998 = vmatprep.subr.mxu0 0.0
    %1999 = vmatpush1.msra.mxu0 0.0
    %2000 = vmatprep.subr.mxu0 0.0
    %2001 = vmatpush1.msra.mxu0 0.0
    %2002 = vmatprep.subr.mxu0 0.0
    %2003 = vmatpush1.msra.mxu0 0.0
    %2004 = vmatprep.subr.mxu0 0.0
    %2005 = vmatpush1.msra.mxu0 0.0
    %2006 = vmatprep.subr.mxu0 0.0
    %2007 = vmatpush1.msra.mxu0 0.0
    %2008 = vmatprep.subr.mxu0 0.0
    %2009 = vmatpush1.msra.mxu0 0.0
    %2010 = vmatprep.subr.mxu0 0.0
    %2011 = vmatpush1.msra.mxu0 0.0
    %2012 = vmatprep.subr.mxu0 0.0
    %2013 = vmatpush1.msra.mxu0 0.0
    %2014 = vmatprep.subr.mxu0 0.0
    %2015 = vmatpush1.msra.mxu0 0.0
    %2016 = vmatprep.subr.mxu0 0.0
    %2017 = vmatpush1.msra.mxu0 0.0
    %2018 = vmatprep.subr.mxu0 0.0
    %2019 = vmatpush1.msra.mxu0 0.0
    %2020 = vmatprep.subr.mxu0 0.0
    %2021 = vmatpush1.msra.mxu0 0.0
    %2022 = vmatprep.subr.mxu0 0.0
    %2023 = vmatpush1.msra.mxu0 0.0
    %2024 = vmatprep.subr.mxu0 0.0
    %2025 = vmatpush1.msra.mxu0 0.0
    %2026 = vmatprep.subr.mxu0 0.0
    %2027 = vmatpush1.msra.mxu0 0.0
    %2028 = vmatprep.subr.mxu0 0.0
    %2029 = vmatpush1.msra.mxu0 0.0
    %2030 = vmatprep.mubr.f32.mxu0 0.0
    %2031 = vmatmul.mubr.f32.gmra.mrb[0].mxu0 %v1965
    %v2032 = vpop.f32.mrb[0].mxu0
    %v2033 = vadd.f32 0.0, %v2032
    %v2034 = vpop.f32.mrb[0].mxu0
    %v2035 = vadd.f32 0.0, %v2034
    %2036 = vdwg.mxu0
    %2037 = vmatprep.subr.mxu0 0.0
    %2038 = vmatpush1.msra.mxu0 %v1742
    %2039 = vmatprep.subr.mxu0 0.0
    %2040 = vmatpush1.msra.mxu0 %v1745
    %2041 = vmatprep.subr.mxu0 0.0
    %2042 = vmatpush1.msra.mxu0 %v1748
    %2043 = vmatprep.subr.mxu0 0.0
    %2044 = vmatpush1.msra.mxu0 %v1751
    %2045 = vmatprep.subr.mxu0 0.0
    %2046 = vmatpush1.msra.mxu0 %v1754
    %2047 = vmatprep.subr.mxu0 0.0
    %2048 = vmatpush1.msra.mxu0 %v1757
    %2049 = vmatprep.subr.mxu0 0.0
    %2050 = vmatpush1.msra.mxu0 %v1760
    %2051 = vmatprep.subr.mxu0 0.0
    %2052 = vmatpush1.msra.mxu0 %v1763
    %2053 = vmatprep.subr.mxu0 0.0
    %2054 = vmatpush1.msra.mxu0 %v1766
    %2055 = vmatprep.subr.mxu0 0.0
    %2056 = vmatpush1.msra.mxu0 %v1769
    %2057 = vmatprep.subr.mxu0 0.0
    %2058 = vmatpush1.msra.mxu0 %v1772
    %2059 = vmatprep.subr.mxu0 0.0
    %2060 = vmatpush1.msra.mxu0 %v1775
    %2061 = vmatprep.subr.mxu0 0.0
    %2062 = vmatpush1.msra.mxu0 %v1778
    %2063 = vmatprep.subr.mxu0 0.0
    %2064 = vmatpush1.msra.mxu0 %v1781
    %2065 = vmatprep.subr.mxu0 0.0
    %2066 = vmatpush1.msra.mxu0 %v1784
    %2067 = vmatprep.subr.mxu0 0.0
    %2068 = vmatpush1.msra.mxu0 %v1787
    %2069 = vmatprep.subr.mxu0 0.0
    %2070 = vmatpush1.msra.mxu0 0.0
    %2071 = vmatprep.subr.mxu0 0.0
    %2072 = vmatpush1.msra.mxu0 0.0
    %2073 = vmatprep.subr.mxu0 0.0
    %2074 = vmatpush1.msra.mxu0 0.0
    %2075 = vmatprep.subr.mxu0 0.0
    %2076 = vmatpush1.msra.mxu0 0.0
    %2077 = vmatprep.subr.mxu0 0.0
    %2078 = vmatpush1.msra.mxu0 0.0
    %2079 = vmatprep.subr.mxu0 0.0
    %2080 = vmatpush1.msra.mxu0 0.0
    %2081 = vmatprep.subr.mxu0 0.0
    %2082 = vmatpush1.msra.mxu0 0.0
    %2083 = vmatprep.subr.mxu0 0.0
    %2084 = vmatpush1.msra.mxu0 0.0
    %2085 = vmatprep.subr.mxu0 0.0
    %2086 = vmatpush1.msra.mxu0 0.0
    %2087 = vmatprep.subr.mxu0 0.0
    %2088 = vmatpush1.msra.mxu0 0.0
    %2089 = vmatprep.subr.mxu0 0.0
    %2090 = vmatpush1.msra.mxu0 0.0
    %2091 = vmatprep.subr.mxu0 0.0
    %2092 = vmatpush1.msra.mxu0 0.0
    %2093 = vmatprep.subr.mxu0 0.0
    %2094 = vmatpush1.msra.mxu0 0.0
    %2095 = vmatprep.subr.mxu0 0.0
    %2096 = vmatpush1.msra.mxu0 0.0
    %2097 = vmatprep.subr.mxu0 0.0
    %2098 = vmatpush1.msra.mxu0 0.0
    %2099 = vmatprep.subr.mxu0 0.0
    %2100 = vmatpush1.msra.mxu0 0.0
    %2101 = vmatprep.mubr.f32.mxu0 0.0
    %2102 = vmatmul.mubr.f32.gmra.mrb[0].mxu0 %v1965
    %v2103 = vpop.f32.mrb[0].mxu0
    %v2104 = vadd.f32 0.0, %v2103
    %v2105 = vpop.f32.mrb[0].mxu0
    %2106 = vdwg.mxu0
    %v2107 = vadd.f32 %v1873, %v2033
    %v2108 = vxor.u32 %v2107, 2147483648
    %v2109 = vmul.f32 %v2108, 1.442695
    %v2110 = vpow.pop %v2109
    %v2111 = vadd.f32 %v2110, 1.0
    %v2112 = vrcp.pop %v2111
    %v2113 = vmul.f32 1.0, %v2112
    %v2114 = vadd.f32 %v1875, %v2035
    %v2115 = vxor.u32 %v2114, 2147483648
    %v2116 = vmul.f32 %v2115, 1.442695
    %v2117 = vpow.pop %v2116
    %v2118 = vadd.f32 %v2117, 1.0
    %v2119 = vrcp.pop %v2118
    %v2120 = vmul.f32 1.0, %v2119
    %v2121 = vadd.f32 %v2104, %v1962
    %v2122 = vmul.f32 %v2113, %v2121
    %v2123 = vadd.f32 %v1950, %v2122
    %v2124 = vtanh.pop %v2123
    %v2125 = vsub.f32 1.0, %v2120
    %v2126 = vmul.f32 %v2125, %v2124
    %v2127 = vmul.f32 %v2120, %v1965
    %v2128 = vadd.f32 %v2126, %v2127
    %2129 = vmatprep.subr.mxu0 %v1741
    %2130 = vmatpush1.msra.mxu0 %v1740
    %2131 = vmatprep.subr.mxu0 %v1744
    %2132 = vmatpush1.msra.mxu0 %v1743
    %2133 = vmatprep.subr.mxu0 %v1747
    %2134 = vmatpush1.msra.mxu0 %v1746
    %2135 = vmatprep.subr.mxu0 %v1750
    %2136 = vmatpush1.msra.mxu0 %v1749
    %2137 = vmatprep.subr.mxu0 %v1753
    %2138 = vmatpush1.msra.mxu0 %v1752
    %2139 = vmatprep.subr.mxu0 %v1756
    %2140 = vmatpush1.msra.mxu0 %v1755
    %2141 = vmatprep.subr.mxu0 %v1759
    %2142 = vmatpush1.msra.mxu0 %v1758
    %2143 = vmatprep.subr.mxu0 %v1762
    %2144 = vmatpush1.msra.mxu0 %v1761
    %2145 = vmatprep.subr.mxu0 %v1765
    %2146 = vmatpush1.msra.mxu0 %v1764
    %2147 = vmatprep.subr.mxu0 %v1768
    %2148 = vmatpush1.msra.mxu0 %v1767
    %2149 = vmatprep.subr.mxu0 %v1771
    %2150 = vmatpush1.msra.mxu0 %v1770
    %2151 = vmatprep.subr.mxu0 %v1774
    %2152 = vmatpush1.msra.mxu0 %v1773
    %2153 = vmatprep.subr.mxu0 %v1777
    %2154 = vmatpush1.msra.mxu0 %v1776
    %2155 = vmatprep.subr.mxu0 %v1780
    %2156 = vmatpush1.msra.mxu0 %v1779
    %2157 = vmatprep.subr.mxu0 %v1783
    %2158 = vmatpush1.msra.mxu0 %v1782
    %2159 = vmatprep.subr.mxu0 %v1786
    %2160 = vmatpush1.msra.mxu0 %v1785
    %2161 = vmatprep.subr.mxu0 0.0
    %2162 = vmatpush1.msra.mxu0 0.0
    %2163 = vmatprep.subr.mxu0 0.0
    %2164 = vmatpush1.msra.mxu0 0.0
    %2165 = vmatprep.subr.mxu0 0.0
    %2166 = vmatpush1.msra.mxu0 0.0
    %2167 = vmatprep.subr.mxu0 0.0
    %2168 = vmatpush1.msra.mxu0 0.0
    %2169 = vmatprep.subr.mxu0 0.0
    %2170 = vmatpush1.msra.mxu0 0.0
    %2171 = vmatprep.subr.mxu0 0.0
    %2172 = vmatpush1.msra.mxu0 0.0
    %2173 = vmatprep.subr.mxu0 0.0
    %2174 = vmatpush1.msra.mxu0 0.0
    %2175 = vmatprep.subr.mxu0 0.0
    %2176 = vmatpush1.msra.mxu0 0.0
    %2177 = vmatprep.subr.mxu0 0.0
    %2178 = vmatpush1.msra.mxu0 0.0
    %2179 = vmatprep.subr.mxu0 0.0
    %2180 = vmatpush1.msra.mxu0 0.0
    %2181 = vmatprep.subr.mxu0 0.0
    %2182 = vmatpush1.msra.mxu0 0.0
    %2183 = vmatprep.subr.mxu0 0.0
    %2184 = vmatpush1.msra.mxu0 0.0
    %2185 = vmatprep.subr.mxu0 0.0
    %2186 = vmatpush1.msra.mxu0 0.0
    %2187 = vmatprep.subr.mxu0 0.0
    %2188 = vmatpush1.msra.mxu0 0.0
    %2189 = vmatprep.subr.mxu0 0.0
    %2190 = vmatpush1.msra.mxu0 0.0
    %2191 = vmatprep.subr.mxu0 0.0
    %2192 = vmatpush1.msra.mxu0 0.0
    %2193 = vmatprep.mubr.f32.mxu0 0.0
    %2194 = vmatmul.mubr.f32.gmra.mrb[0].mxu0 %v2128
    %v2195 = vpop.f32.mrb[0].mxu0
    %v2196 = vadd.f32 0.0, %v2195
    %v2197 = vpop.f32.mrb[0].mxu0
    %v2198 = vadd.f32 0.0, %v2197
    %2199 = vdwg.mxu0
    %2200 = vmatprep.subr.mxu0 0.0
    %2201 = vmatpush1.msra.mxu0 %v1742
    %2202 = vmatprep.subr.mxu0 0.0
    %2203 = vmatpush1.msra.mxu0 %v1745
    %2204 = vmatprep.subr.mxu0 0.0
    %2205 = vmatpush1.msra.mxu0 %v1748
    %2206 = vmatprep.subr.mxu0 0.0
    %2207 = vmatpush1.msra.mxu0 %v1751
    %2208 = vmatprep.subr.mxu0 0.0
    %2209 = vmatpush1.msra.mxu0 %v1754
    %2210 = vmatprep.subr.mxu0 0.0
    %2211 = vmatpush1.msra.mxu0 %v1757
    %2212 = vmatprep.subr.mxu0 0.0
    %2213 = vmatpush1.msra.mxu0 %v1760
    %2214 = vmatprep.subr.mxu0 0.0
    %2215 = vmatpush1.msra.mxu0 %v1763
    %2216 = vmatprep.subr.mxu0 0.0
    %2217 = vmatpush1.msra.mxu0 %v1766
    %2218 = vmatprep.subr.mxu0 0.0
    %2219 = vmatpush1.msra.mxu0 %v1769
    %2220 = vmatprep.subr.mxu0 0.0
    %2221 = vmatpush1.msra.mxu0 %v1772
    %2222 = vmatprep.subr.mxu0 0.0
    %2223 = vmatpush1.msra.mxu0 %v1775
    %2224 = vmatprep.subr.mxu0 0.0
    %2225 = vmatpush1.msra.mxu0 %v1778
    %2226 = vmatprep.subr.mxu0 0.0
    %2227 = vmatpush1.msra.mxu0 %v1781
    %2228 = vmatprep.subr.mxu0 0.0
    %2229 = vmatpush1.msra.mxu0 %v1784
    %2230 = vmatprep.subr.mxu0 0.0
    %2231 = vmatpush1.msra.mxu0 %v1787
    %2232 = vmatprep.subr.mxu0 0.0
    %2233 = vmatpush1.msra.mxu0 0.0
    %2234 = vmatprep.subr.mxu0 0.0
    %2235 = vmatpush1.msra.mxu0 0.0
    %2236 = vmatprep.subr.mxu0 0.0
    %2237 = vmatpush1.msra.mxu0 0.0
    %2238 = vmatprep.subr.mxu0 0.0
    %2239 = vmatpush1.msra.mxu0 0.0
    %2240 = vmatprep.subr.mxu0 0.0
    %2241 = vmatpush1.msra.mxu0 0.0
    %2242 = vmatprep.subr.mxu0 0.0
    %2243 = vmatpush1.msra.mxu0 0.0
    %2244 = vmatprep.subr.mxu0 0.0
    %2245 = vmatpush1.msra.mxu0 0.0
    %2246 = vmatprep.subr.mxu0 0.0
    %2247 = vmatpush1.msra.mxu0 0.0
    %2248 = vmatprep.subr.mxu0 0.0
    %2249 = vmatpush1.msra.mxu0 0.0
    %2250 = vmatprep.subr.mxu0 0.0
    %2251 = vmatpush1.msra.mxu0 0.0
    %2252 = vmatprep.subr.mxu0 0.0
    %2253 = vmatpush1.msra.mxu0 0.0
    %2254 = vmatprep.subr.mxu0 0.0
    %2255 = vmatpush1.msra.mxu0 0.0
    %2256 = vmatprep.subr.mxu0 0.0
    %2257 = vmatpush1.msra.mxu0 0.0
    %2258 = vmatprep.subr.mxu0 0.0
    %2259 = vmatpush1.msra.mxu0 0.0
    %2260 = vmatprep.subr.mxu0 0.0
    %2261 = vmatpush1.msra.mxu0 0.0
    %2262 = vmatprep.subr.mxu0 0.0
    %2263 = vmatpush1.msra.mxu0 0.0
    %2264 = vmatprep.mubr.f32.mxu0 0.0
    %2265 = vmatmul.mubr.f32.gmra.mrb[0].mxu0 %v2128
    %v2266 = vpop.f32.mrb[0].mxu0
    %v2267 = vadd.f32 0.0, %v2266
    %v2268 = vpop.f32.mrb[0].mxu0
    %2269 = vdwg.mxu0
    %v2271 = vrot.slane %v2196, 6
    %v2273 = vadd.f32 %v1873, %v2271
    %v2274 = vxor.u32 %v2273, 2147483648
    %v2275 = vmul.f32 %v2274, 1.442695
    %v2276 = vpow.pop %v2275
    %v2277 = vadd.f32 %v2276, 1.0
    %v2278 = vrcp.pop %v2277
    %v2279 = vmul.f32 1.0, %v2278
    %v2281 = vrot.slane %v2198, 6
    %v2283 = vadd.f32 %v1875, %v2281
    %v2284 = vxor.u32 %v2283, 2147483648
    %v2285 = vmul.f32 %v2284, 1.442695
    %v2286 = vpow.pop %v2285
    %v2287 = vadd.f32 %v2286, 1.0
    %v2288 = vrcp.pop %v2287
    %v2289 = vmul.f32 1.0, %v2288
    %v2290 = vadd.f32 %v2267, %v1962
    %v2292 = vrot.slane %v2290, 6
    %v2294 = vmul.f32 %v2279, %v2292
    %v2295 = vadd.f32 %v1950, %v2294
    %v2296 = vtanh.pop %v2295
    %v2297 = vsub.f32 1.0, %v2289
    %v2298 = vmul.f32 %v2297, %v2296
    %v2300 = vrot.slane %v2128, 6
    %v2302 = vmul.f32 %v2289, %v2300
    %v2303 = vadd.f32 %v2298, %v2302
    %v2305 = vrot.slane %v2303, 2
    %2307 = vmatprep.subr.mxu0 %v1741
    %2308 = vmatpush1.msra.mxu0 %v1740
    %2309 = vmatprep.subr.mxu0 %v1744
    %2310 = vmatpush1.msra.mxu0 %v1743
    %2311 = vmatprep.subr.mxu0 %v1747
    %2312 = vmatpush1.msra.mxu0 %v1746
    %2313 = vmatprep.subr.mxu0 %v1750
    %2314 = vmatpush1.msra.mxu0 %v1749
    %2315 = vmatprep.subr.mxu0 %v1753
    %2316 = vmatpush1.msra.mxu0 %v1752
    %2317 = vmatprep.subr.mxu0 %v1756
    %2318 = vmatpush1.msra.mxu0 %v1755
    %2319 = vmatprep.subr.mxu0 %v1759
    %2320 = vmatpush1.msra.mxu0 %v1758
    %2321 = vmatprep.subr.mxu0 %v1762
    %2322 = vmatpush1.msra.mxu0 %v1761
    %2323 = vmatprep.subr.mxu0 %v1765
    %2324 = vmatpush1.msra.mxu0 %v1764
    %2325 = vmatprep.subr.mxu0 %v1768
    %2326 = vmatpush1.msra.mxu0 %v1767
    %2327 = vmatprep.subr.mxu0 %v1771
    %2328 = vmatpush1.msra.mxu0 %v1770
    %2329 = vmatprep.subr.mxu0 %v1774
    %2330 = vmatpush1.msra.mxu0 %v1773
    %2331 = vmatprep.subr.mxu0 %v1777
    %2332 = vmatpush1.msra.mxu0 %v1776
    %2333 = vmatprep.subr.mxu0 %v1780
    %2334 = vmatpush1.msra.mxu0 %v1779
    %2335 = vmatprep.subr.mxu0 %v1783
    %2336 = vmatpush1.msra.mxu0 %v1782
    %2337 = vmatprep.subr.mxu0 %v1786
    %2338 = vmatpush1.msra.mxu0 %v1785
    %2339 = vmatprep.subr.mxu0 0.0
    %2340 = vmatpush1.msra.mxu0 0.0
    %2341 = vmatprep.subr.mxu0 0.0
    %2342 = vmatpush1.msra.mxu0 0.0
    %2343 = vmatprep.subr.mxu0 0.0
    %2344 = vmatpush1.msra.mxu0 0.0
    %2345 = vmatprep.subr.mxu0 0.0
    %2346 = vmatpush1.msra.mxu0 0.0
    %2347 = vmatprep.subr.mxu0 0.0
    %2348 = vmatpush1.msra.mxu0 0.0
    %2349 = vmatprep.subr.mxu0 0.0
    %2350 = vmatpush1.msra.mxu0 0.0
    %2351 = vmatprep.subr.mxu0 0.0
    %2352 = vmatpush1.msra.mxu0 0.0
    %2353 = vmatprep.subr.mxu0 0.0
    %2354 = vmatpush1.msra.mxu0 0.0
    %2355 = vmatprep.subr.mxu0 0.0
    %2356 = vmatpush1.msra.mxu0 0.0
    %2357 = vmatprep.subr.mxu0 0.0
    %2358 = vmatpush1.msra.mxu0 0.0
    %2359 = vmatprep.subr.mxu0 0.0
    %2360 = vmatpush1.msra.mxu0 0.0
    %2361 = vmatprep.subr.mxu0 0.0
    %2362 = vmatpush1.msra.mxu0 0.0
    %2363 = vmatprep.subr.mxu0 0.0
    %2364 = vmatpush1.msra.mxu0 0.0
    %2365 = vmatprep.subr.mxu0 0.0
    %2366 = vmatpush1.msra.mxu0 0.0
    %2367 = vmatprep.subr.mxu0 0.0
    %2368 = vmatpush1.msra.mxu0 0.0
    %2369 = vmatprep.subr.mxu0 0.0
    %2370 = vmatpush1.msra.mxu0 0.0
    %2371 = vmatprep.mubr.f32.mxu0 0.0
    %2372 = vmatmul.mubr.f32.gmra.mrb[0].mxu0 %v2305
    %v2373 = vpop.f32.mrb[0].mxu0
    %v2374 = vadd.f32 0.0, %v2373
    %v2375 = vpop.f32.mrb[0].mxu0
    %v2376 = vadd.f32 0.0, %v2375
    %2377 = vdwg.mxu0
    %2378 = vmatprep.subr.mxu0 0.0
    %2379 = vmatpush1.msra.mxu0 %v1742
    %2380 = vmatprep.subr.mxu0 0.0
    %2381 = vmatpush1.msra.mxu0 %v1745
    %2382 = vmatprep.subr.mxu0 0.0
    %2383 = vmatpush1.msra.mxu0 %v1748
    %2384 = vmatprep.subr.mxu0 0.0
    %2385 = vmatpush1.msra.mxu0 %v1751
    %2386 = vmatprep.subr.mxu0 0.0
    %2387 = vmatpush1.msra.mxu0 %v1754
    %2388 = vmatprep.subr.mxu0 0.0
    %2389 = vmatpush1.msra.mxu0 %v1757
    %2390 = vmatprep.subr.mxu0 0.0
    %2391 = vmatpush1.msra.mxu0 %v1760
    %2392 = vmatprep.subr.mxu0 0.0
    %2393 = vmatpush1.msra.mxu0 %v1763
    %2394 = vmatprep.subr.mxu0 0.0
    %2395 = vmatpush1.msra.mxu0 %v1766
    %2396 = vmatprep.subr.mxu0 0.0
    %2397 = vmatpush1.msra.mxu0 %v1769
    %2398 = vmatprep.subr.mxu0 0.0
    %2399 = vmatpush1.msra.mxu0 %v1772
    %2400 = vmatprep.subr.mxu0 0.0
    %2401 = vmatpush1.msra.mxu0 %v1775
    %2402 = vmatprep.subr.mxu0 0.0
    %2403 = vmatpush1.msra.mxu0 %v1778
    %2404 = vmatprep.subr.mxu0 0.0
    %2405 = vmatpush1.msra.mxu0 %v1781
    %2406 = vmatprep.subr.mxu0 0.0
    %2407 = vmatpush1.msra.mxu0 %v1784
    %2408 = vmatprep.subr.mxu0 0.0
    %2409 = vmatpush1.msra.mxu0 %v1787
    %2410 = vmatprep.subr.mxu0 0.0
    %2411 = vmatpush1.msra.mxu0 0.0
    %2412 = vmatprep.subr.mxu0 0.0
    %2413 = vmatpush1.msra.mxu0 0.0
    %2414 = vmatprep.subr.mxu0 0.0
    %2415 = vmatpush1.msra.mxu0 0.0
    %2416 = vmatprep.subr.mxu0 0.0
    %2417 = vmatpush1.msra.mxu0 0.0
    %2418 = vmatprep.subr.mxu0 0.0
    %2419 = vmatpush1.msra.mxu0 0.0
    %2420 = vmatprep.subr.mxu0 0.0
    %2421 = vmatpush1.msra.mxu0 0.0
    %2422 = vmatprep.subr.mxu0 0.0
    %2423 = vmatpush1.msra.mxu0 0.0
    %2424 = vmatprep.subr.mxu0 0.0
    %2425 = vmatpush1.msra.mxu0 0.0
    %2426 = vmatprep.subr.mxu0 0.0
    %2427 = vmatpush1.msra.mxu0 0.0
    %2428 = vmatprep.subr.mxu0 0.0
    %2429 = vmatpush1.msra.mxu0 0.0
    %2430 = vmatprep.subr.mxu0 0.0
    %2431 = vmatpush1.msra.mxu0 0.0
    %2432 = vmatprep.subr.mxu0 0.0
    %2433 = vmatpush1.msra.mxu0 0.0
    %2434 = vmatprep.subr.mxu0 0.0
    %2435 = vmatpush1.msra.mxu0 0.0
    %2436 = vmatprep.subr.mxu0 0.0
    %2437 = vmatpush1.msra.mxu0 0.0
    %2438 = vmatprep.subr.mxu0 0.0
    %2439 = vmatpush1.msra.mxu0 0.0
    %2440 = vmatprep.subr.mxu0 0.0
    %2441 = vmatpush1.msra.mxu0 0.0
    %2442 = vmatprep.mubr.f32.mxu0 0.0
    %2443 = vmatmul.mubr.f32.gmra.mrb[0].mxu0 %v2305
    %v2444 = vpop.f32.mrb[0].mxu0
    %v2445 = vadd.f32 0.0, %v2444
    %v2446 = vpop.f32.mrb[0].mxu0
    %2447 = vdwg.mxu0
    %v2449 = vrot.slane %v2374, 4
    %v2451 = vadd.f32 %v1873, %v2449
    %v2452 = vxor.u32 %v2451, 2147483648
    %v2453 = vmul.f32 %v2452, 1.442695
    %v2454 = vpow.pop %v2453
    %v2455 = vadd.f32 %v2454, 1.0
    %v2456 = vrcp.pop %v2455
    %v2457 = vmul.f32 1.0, %v2456
    %v2459 = vrot.slane %v2376, 4
    %v2461 = vadd.f32 %v1875, %v2459
    %v2462 = vxor.u32 %v2461, 2147483648
    %v2463 = vmul.f32 %v2462, 1.442695
    %v2464 = vpow.pop %v2463
    %v2465 = vadd.f32 %v2464, 1.0
    %v2466 = vrcp.pop %v2465
    %v2467 = vmul.f32 1.0, %v2466
    %v2468 = vadd.f32 %v2445, %v1962
    %v2470 = vrot.slane %v2468, 4
    %v2472 = vmul.f32 %v2457, %v2470
    %v2473 = vadd.f32 %v1950, %v2472
    %v2474 = vtanh.pop %v2473
    %v2475 = vsub.f32 1.0, %v2467
    %v2476 = vmul.f32 %v2475, %v2474
    %v2477 = vrot.slane %v2303, 6
    %v2479 = vmul.f32 %v2467, %v2477
    %v2480 = vadd.f32 %v2476, %v2479
    %v2482 = vrot.slane %v2480, 4
    %2484 = vmatprep.subr.mxu0 %v1741
    %2485 = vmatpush1.msra.mxu0 %v1740
    %2486 = vmatprep.subr.mxu0 %v1744
    %2487 = vmatpush1.msra.mxu0 %v1743
    %2488 = vmatprep.subr.mxu0 %v1747
    %2489 = vmatpush1.msra.mxu0 %v1746
    %2490 = vmatprep.subr.mxu0 %v1750
    %2491 = vmatpush1.msra.mxu0 %v1749
    %2492 = vmatprep.subr.mxu0 %v1753
    %2493 = vmatpush1.msra.mxu0 %v1752
    %2494 = vmatprep.subr.mxu0 %v1756
    %2495 = vmatpush1.msra.mxu0 %v1755
    %2496 = vmatprep.subr.mxu0 %v1759
    %2497 = vmatpush1.msra.mxu0 %v1758
    %2498 = vmatprep.subr.mxu0 %v1762
    %2499 = vmatpush1.msra.mxu0 %v1761
    %2500 = vmatprep.subr.mxu0 %v1765
    %2501 = vmatpush1.msra.mxu0 %v1764
    %2502 = vmatprep.subr.mxu0 %v1768
    %2503 = vmatpush1.msra.mxu0 %v1767
    %2504 = vmatprep.subr.mxu0 %v1771
    %2505 = vmatpush1.msra.mxu0 %v1770
    %2506 = vmatprep.subr.mxu0 %v1774
    %2507 = vmatpush1.msra.mxu0 %v1773
    %2508 = vmatprep.subr.mxu0 %v1777
    %2509 = vmatpush1.msra.mxu0 %v1776
    %2510 = vmatprep.subr.mxu0 %v1780
    %2511 = vmatpush1.msra.mxu0 %v1779
    %2512 = vmatprep.subr.mxu0 %v1783
    %2513 = vmatpush1.msra.mxu0 %v1782
    %2514 = vmatprep.subr.mxu0 %v1786
    %2515 = vmatpush1.msra.mxu0 %v1785
    %2516 = vmatprep.subr.mxu0 0.0
    %2517 = vmatpush1.msra.mxu0 0.0
    %2518 = vmatprep.subr.mxu0 0.0
    %2519 = vmatpush1.msra.mxu0 0.0
    %2520 = vmatprep.subr.mxu0 0.0
    %2521 = vmatpush1.msra.mxu0 0.0
    %2522 = vmatprep.subr.mxu0 0.0
    %2523 = vmatpush1.msra.mxu0 0.0
    %2524 = vmatprep.subr.mxu0 0.0
    %2525 = vmatpush1.msra.mxu0 0.0
    %2526 = vmatprep.subr.mxu0 0.0
    %2527 = vmatpush1.msra.mxu0 0.0
    %2528 = vmatprep.subr.mxu0 0.0
    %2529 = vmatpush1.msra.mxu0 0.0
    %2530 = vmatprep.subr.mxu0 0.0
    %2531 = vmatpush1.msra.mxu0 0.0
    %2532 = vmatprep.subr.mxu0 0.0
    %2533 = vmatpush1.msra.mxu0 0.0
    %2534 = vmatprep.subr.mxu0 0.0
    %2535 = vmatpush1.msra.mxu0 0.0
    %2536 = vmatprep.subr.mxu0 0.0
    %2537 = vmatpush1.msra.mxu0 0.0
    %2538 = vmatprep.subr.mxu0 0.0
    %2539 = vmatpush1.msra.mxu0 0.0
    %2540 = vmatprep.subr.mxu0 0.0
    %2541 = vmatpush1.msra.mxu0 0.0
    %2542 = vmatprep.subr.mxu0 0.0
    %2543 = vmatpush1.msra.mxu0 0.0
    %2544 = vmatprep.subr.mxu0 0.0
    %2545 = vmatpush1.msra.mxu0 0.0
    %2546 = vmatprep.subr.mxu0 0.0
    %2547 = vmatpush1.msra.mxu0 0.0
    %2548 = vmatprep.mubr.f32.mxu0 0.0
    %2549 = vmatmul.mubr.f32.gmra.mrb[0].mxu0 %v2482
    %v2550 = vpop.f32.mrb[0].mxu0
    %v2551 = vadd.f32 0.0, %v2550
    %v2552 = vpop.f32.mrb[0].mxu0
    %v2553 = vadd.f32 0.0, %v2552
    %2554 = vdwg.mxu0
    %2555 = vmatprep.subr.mxu0 0.0
    %2556 = vmatpush1.msra.mxu0 %v1742
    %2557 = vmatprep.subr.mxu0 0.0
    %2558 = vmatpush1.msra.mxu0 %v1745
    %2559 = vmatprep.subr.mxu0 0.0
    %2560 = vmatpush1.msra.mxu0 %v1748
    %2561 = vmatprep.subr.mxu0 0.0
    %2562 = vmatpush1.msra.mxu0 %v1751
    %2563 = vmatprep.subr.mxu0 0.0
    %2564 = vmatpush1.msra.mxu0 %v1754
    %2565 = vmatprep.subr.mxu0 0.0
    %2566 = vmatpush1.msra.mxu0 %v1757
    %2567 = vmatprep.subr.mxu0 0.0
    %2568 = vmatpush1.msra.mxu0 %v1760
    %2569 = vmatprep.subr.mxu0 0.0
    %2570 = vmatpush1.msra.mxu0 %v1763
    %2571 = vmatprep.subr.mxu0 0.0
    %2572 = vmatpush1.msra.mxu0 %v1766
    %2573 = vmatprep.subr.mxu0 0.0
    %2574 = vmatpush1.msra.mxu0 %v1769
    %2575 = vmatprep.subr.mxu0 0.0
    %2576 = vmatpush1.msra.mxu0 %v1772
    %2577 = vmatprep.subr.mxu0 0.0
    %2578 = vmatpush1.msra.mxu0 %v1775
    %2579 = vmatprep.subr.mxu0 0.0
    %2580 = vmatpush1.msra.mxu0 %v1778
    %2581 = vmatprep.subr.mxu0 0.0
    %2582 = vmatpush1.msra.mxu0 %v1781
    %2583 = vmatprep.subr.mxu0 0.0
    %2584 = vmatpush1.msra.mxu0 %v1784
    %2585 = vmatprep.subr.mxu0 0.0
    %2586 = vmatpush1.msra.mxu0 %v1787
    %2587 = vmatprep.subr.mxu0 0.0
    %2588 = vmatpush1.msra.mxu0 0.0
    %2589 = vmatprep.subr.mxu0 0.0
    %2590 = vmatpush1.msra.mxu0 0.0
    %2591 = vmatprep.subr.mxu0 0.0
    %2592 = vmatpush1.msra.mxu0 0.0
    %2593 = vmatprep.subr.mxu0 0.0
    %2594 = vmatpush1.msra.mxu0 0.0
    %2595 = vmatprep.subr.mxu0 0.0
    %2596 = vmatpush1.msra.mxu0 0.0
    %2597 = vmatprep.subr.mxu0 0.0
    %2598 = vmatpush1.msra.mxu0 0.0
    %2599 = vmatprep.subr.mxu0 0.0
    %2600 = vmatpush1.msra.mxu0 0.0
    %2601 = vmatprep.subr.mxu0 0.0
    %2602 = vmatpush1.msra.mxu0 0.0
    %2603 = vmatprep.subr.mxu0 0.0
    %2604 = vmatpush1.msra.mxu0 0.0
    %2605 = vmatprep.subr.mxu0 0.0
    %2606 = vmatpush1.msra.mxu0 0.0
    %2607 = vmatprep.subr.mxu0 0.0
    %2608 = vmatpush1.msra.mxu0 0.0
    %2609 = vmatprep.subr.mxu0 0.0
    %2610 = vmatpush1.msra.mxu0 0.0
    %2611 = vmatprep.subr.mxu0 0.0
    %2612 = vmatpush1.msra.mxu0 0.0
    %2613 = vmatprep.subr.mxu0 0.0
    %2614 = vmatpush1.msra.mxu0 0.0
    %2615 = vmatprep.subr.mxu0 0.0
    %2616 = vmatpush1.msra.mxu0 0.0
    %2617 = vmatprep.subr.mxu0 0.0
    %2618 = vmatpush1.msra.mxu0 0.0
    %2619 = vmatprep.mubr.f32.mxu0 0.0
    %2620 = vmatmul.mubr.f32.gmra.mrb[0].mxu0 %v2482
    %v2621 = vpop.f32.mrb[0].mxu0
    %v2622 = vadd.f32 0.0, %v2621
    %v2623 = vpop.f32.mrb[0].mxu0
    %2624 = vdwg.mxu0
    %v2626 = vrot.slane %v2551, 2
    %v2628 = vadd.f32 %v1873, %v2626
    %v2629 = vxor.u32 %v2628, 2147483648
    %v2630 = vmul.f32 %v2629, 1.442695
    %v2631 = vpow.pop %v2630
    %v2632 = vadd.f32 %v2631, 1.0
    %v2633 = vrcp.pop %v2632
    %v2634 = vmul.f32 1.0, %v2633
    %v2636 = vrot.slane %v2553, 2
    %v2638 = vadd.f32 %v1875, %v2636
    %v2639 = vxor.u32 %v2638, 2147483648
    %v2640 = vmul.f32 %v2639, 1.442695
    %v2641 = vpow.pop %v2640
    %v2642 = vadd.f32 %v2641, 1.0
    %v2643 = vrcp.pop %v2642
    %v2644 = vmul.f32 1.0, %v2643
    %v2645 = vadd.f32 %v2622, %v1962
    %v2647 = vrot.slane %v2645, 2
    %v2649 = vmul.f32 %v2634, %v2647
    %v2650 = vadd.f32 %v1950, %v2649
    %v2651 = vtanh.pop %v2650
    %v2652 = vsub.f32 1.0, %v2644
    %v2653 = vmul.f32 %v2652, %v2651
    %v2654 = vrot.slane %v2480, 6
    %v2656 = vmul.f32 %v2644, %v2654
    %v2657 = vadd.f32 %v2653, %v2656
    %v2659 = vrot.slane %v2657, 6
    %2661 = vmatprep.subr.mxu0 %v1741
    %2662 = vmatpush1.msra.mxu0 %v1740
    %2663 = vmatprep.subr.mxu0 %v1744
    %2664 = vmatpush1.msra.mxu0 %v1743
    %2665 = vmatprep.subr.mxu0 %v1747
    %2666 = vmatpush1.msra.mxu0 %v1746
    %2667 = vmatprep.subr.mxu0 %v1750
    %2668 = vmatpush1.msra.mxu0 %v1749
    %2669 = vmatprep.subr.mxu0 %v1753
    %2670 = vmatpush1.msra.mxu0 %v1752
    %2671 = vmatprep.subr.mxu0 %v1756
    %2672 = vmatpush1.msra.mxu0 %v1755
    %2673 = vmatprep.subr.mxu0 %v1759
    %2674 = vmatpush1.msra.mxu0 %v1758
    %2675 = vmatprep.subr.mxu0 %v1762
    %2676 = vmatpush1.msra.mxu0 %v1761
    %2677 = vmatprep.subr.mxu0 %v1765
    %2678 = vmatpush1.msra.mxu0 %v1764
    %2679 = vmatprep.subr.mxu0 %v1768
    %2680 = vmatpush1.msra.mxu0 %v1767
    %2681 = vmatprep.subr.mxu0 %v1771
    %2682 = vmatpush1.msra.mxu0 %v1770
    %2683 = vmatprep.subr.mxu0 %v1774
    %2684 = vmatpush1.msra.mxu0 %v1773
    %2685 = vmatprep.subr.mxu0 %v1777
    %2686 = vmatpush1.msra.mxu0 %v1776
    %2687 = vmatprep.subr.mxu0 %v1780
    %2688 = vmatpush1.msra.mxu0 %v1779
    %2689 = vmatprep.subr.mxu0 %v1783
    %2690 = vmatpush1.msra.mxu0 %v1782
    %2691 = vmatprep.subr.mxu0 %v1786
    %2692 = vmatpush1.msra.mxu0 %v1785
    %2693 = vmatprep.subr.mxu0 0.0
    %2694 = vmatpush1.msra.mxu0 0.0
    %2695 = vmatprep.subr.mxu0 0.0
    %2696 = vmatpush1.msra.mxu0 0.0
    %2697 = vmatprep.subr.mxu0 0.0
    %2698 = vmatpush1.msra.mxu0 0.0
    %2699 = vmatprep.subr.mxu0 0.0
    %2700 = vmatpush1.msra.mxu0 0.0
    %2701 = vmatprep.subr.mxu0 0.0
    %2702 = vmatpush1.msra.mxu0 0.0
    %2703 = vmatprep.subr.mxu0 0.0
    %2704 = vmatpush1.msra.mxu0 0.0
    %2705 = vmatprep.subr.mxu0 0.0
    %2706 = vmatpush1.msra.mxu0 0.0
    %2707 = vmatprep.subr.mxu0 0.0
    %2708 = vmatpush1.msra.mxu0 0.0
    %2709 = vmatprep.subr.mxu0 0.0
    %2710 = vmatpush1.msra.mxu0 0.0
    %2711 = vmatprep.subr.mxu0 0.0
    %2712 = vmatpush1.msra.mxu0 0.0
    %2713 = vmatprep.subr.mxu0 0.0
    %2714 = vmatpush1.msra.mxu0 0.0
    %2715 = vmatprep.subr.mxu0 0.0
    %2716 = vmatpush1.msra.mxu0 0.0
    %2717 = vmatprep.subr.mxu0 0.0
    %2718 = vmatpush1.msra.mxu0 0.0
    %2719 = vmatprep.subr.mxu0 0.0
    %2720 = vmatpush1.msra.mxu0 0.0
    %2721 = vmatprep.subr.mxu0 0.0
    %2722 = vmatpush1.msra.mxu0 0.0
    %2723 = vmatprep.subr.mxu0 0.0
    %2724 = vmatpush1.msra.mxu0 0.0
    %2725 = vmatprep.mubr.f32.mxu0 0.0
    %2726 = vmatmul.mubr.f32.gmra.mrb[0].mxu0 %v2659
    %v2727 = vpop.f32.mrb[0].mxu0
    %v2728 = vadd.f32 0.0, %v2727
    %v2729 = vpop.f32.mrb[0].mxu0
    %v2730 = vadd.f32 0.0, %v2729
    %2731 = vdwg.mxu0
    %2732 = vmatprep.subr.mxu0 0.0
    %2733 = vmatpush1.msra.mxu0 %v1742
    %2734 = vmatprep.subr.mxu0 0.0
    %2735 = vmatpush1.msra.mxu0 %v1745
    %2736 = vmatprep.subr.mxu0 0.0
    %2737 = vmatpush1.msra.mxu0 %v1748
    %2738 = vmatprep.subr.mxu0 0.0
    %2739 = vmatpush1.msra.mxu0 %v1751
    %2740 = vmatprep.subr.mxu0 0.0
    %2741 = vmatpush1.msra.mxu0 %v1754
    %2742 = vmatprep.subr.mxu0 0.0
    %2743 = vmatpush1.msra.mxu0 %v1757
    %2744 = vmatprep.subr.mxu0 0.0
    %2745 = vmatpush1.msra.mxu0 %v1760
    %2746 = vmatprep.subr.mxu0 0.0
    %2747 = vmatpush1.msra.mxu0 %v1763
    %2748 = vmatprep.subr.mxu0 0.0
    %2749 = vmatpush1.msra.mxu0 %v1766
    %2750 = vmatprep.subr.mxu0 0.0
    %2751 = vmatpush1.msra.mxu0 %v1769
    %2752 = vmatprep.subr.mxu0 0.0
    %2753 = vmatpush1.msra.mxu0 %v1772
    %2754 = vmatprep.subr.mxu0 0.0
    %2755 = vmatpush1.msra.mxu0 %v1775
    %2756 = vmatprep.subr.mxu0 0.0
    %2757 = vmatpush1.msra.mxu0 %v1778
    %2758 = vmatprep.subr.mxu0 0.0
    %2759 = vmatpush1.msra.mxu0 %v1781
    %2760 = vmatprep.subr.mxu0 0.0
    %2761 = vmatpush1.msra.mxu0 %v1784
    %2762 = vmatprep.subr.mxu0 0.0
    %2763 = vmatpush1.msra.mxu0 %v1787
    %2764 = vmatprep.subr.mxu0 0.0
    %2765 = vmatpush1.msra.mxu0 0.0
    %2766 = vmatprep.subr.mxu0 0.0
    %2767 = vmatpush1.msra.mxu0 0.0
    %2768 = vmatprep.subr.mxu0 0.0
    %2769 = vmatpush1.msra.mxu0 0.0
    %2770 = vmatprep.subr.mxu0 0.0
    %2771 = vmatpush1.msra.mxu0 0.0
    %2772 = vmatprep.subr.mxu0 0.0
    %2773 = vmatpush1.msra.mxu0 0.0
    %2774 = vmatprep.subr.mxu0 0.0
    %2775 = vmatpush1.msra.mxu0 0.0
    %2776 = vmatprep.subr.mxu0 0.0
    %2777 = vmatpush1.msra.mxu0 0.0
    %2778 = vmatprep.subr.mxu0 0.0
    %2779 = vmatpush1.msra.mxu0 0.0
    %2780 = vmatprep.subr.mxu0 0.0
    %2781 = vmatpush1.msra.mxu0 0.0
    %2782 = vmatprep.subr.mxu0 0.0
    %2783 = vmatpush1.msra.mxu0 0.0
    %2784 = vmatprep.subr.mxu0 0.0
    %2785 = vmatpush1.msra.mxu0 0.0
    %2786 = vmatprep.subr.mxu0 0.0
    %2787 = vmatpush1.msra.mxu0 0.0
    %2788 = vmatprep.subr.mxu0 0.0
    %2789 = vmatpush1.msra.mxu0 0.0
    %2790 = vmatprep.subr.mxu0 0.0
    %2791 = vmatpush1.msra.mxu0 0.0
    %2792 = vmatprep.subr.mxu0 0.0
    %2793 = vmatpush1.msra.mxu0 0.0
    %2794 = vmatprep.subr.mxu0 0.0
    %2795 = vmatpush1.msra.mxu0 0.0
    %2796 = vmatprep.mubr.f32.mxu0 0.0
    %2797 = vmatmul.mubr.f32.gmra.mrb[0].mxu0 %v2659
    %v2798 = vpop.f32.mrb[0].mxu0
    %v2799 = vadd.f32 0.0, %v2798
    %v2800 = vpop.f32.mrb[0].mxu0
    %2801 = vdwg.mxu0
    %v2802 = vadd.f32 %v1879, %v2728
    %v2803 = vxor.u32 %v2802, 2147483648
    %v2804 = vmul.f32 %v2803, 1.442695
    %v2805 = vpow.pop %v2804
    %v2806 = vadd.f32 %v2805, 1.0
    %v2807 = vrcp.pop %v2806
    %v2808 = vmul.f32 1.0, %v2807
    %v2809 = vadd.f32 %v1881, %v2730
    %v2810 = vxor.u32 %v2809, 2147483648
    %v2811 = vmul.f32 %v2810, 1.442695
    %v2812 = vpow.pop %v2811
    %v2813 = vadd.f32 %v2812, 1.0
    %v2814 = vrcp.pop %v2813
    %v2815 = vmul.f32 1.0, %v2814
    %v2816 = vadd.f32 %v2799, %v1962
    %v2817 = vmul.f32 %v2808, %v2816
    %v2818 = vadd.f32 %v1955, %v2817
    %v2819 = vtanh.pop %v2818
    %v2820 = vsub.f32 1.0, %v2815
    %v2821 = vmul.f32 %v2820, %v2819
    %v2822 = vmul.f32 %v2815, %v2659
    %v2823 = vadd.f32 %v2821, %v2822
    %2824 = vmatprep.subr.mxu0 %v1741
    %2825 = vmatpush1.msra.mxu0 %v1740
    %2826 = vmatprep.subr.mxu0 %v1744
    %2827 = vmatpush1.msra.mxu0 %v1743
    %2828 = vmatprep.subr.mxu0 %v1747
    %2829 = vmatpush1.msra.mxu0 %v1746
    %2830 = vmatprep.subr.mxu0 %v1750
    %2831 = vmatpush1.msra.mxu0 %v1749
    %2832 = vmatprep.subr.mxu0 %v1753
    %2833 = vmatpush1.msra.mxu0 %v1752
    %2834 = vmatprep.subr.mxu0 %v1756
    %2835 = vmatpush1.msra.mxu0 %v1755
    %2836 = vmatprep.subr.mxu0 %v1759
    %2837 = vmatpush1.msra.mxu0 %v1758
    %2838 = vmatprep.subr.mxu0 %v1762
    %2839 = vmatpush1.msra.mxu0 %v1761
    %2840 = vmatprep.subr.mxu0 %v1765
    %2841 = vmatpush1.msra.mxu0 %v1764
    %2842 = vmatprep.subr.mxu0 %v1768
    %2843 = vmatpush1.msra.mxu0 %v1767
    %2844 = vmatprep.subr.mxu0 %v1771
    %2845 = vmatpush1.msra.mxu0 %v1770
    %2846 = vmatprep.subr.mxu0 %v1774
    %2847 = vmatpush1.msra.mxu0 %v1773
    %2848 = vmatprep.subr.mxu0 %v1777
    %2849 = vmatpush1.msra.mxu0 %v1776
    %2850 = vmatprep.subr.mxu0 %v1780
    %2851 = vmatpush1.msra.mxu0 %v1779
    %2852 = vmatprep.subr.mxu0 %v1783
    %2853 = vmatpush1.msra.mxu0 %v1782
    %2854 = vmatprep.subr.mxu0 %v1786
    %2855 = vmatpush1.msra.mxu0 %v1785
    %2856 = vmatprep.subr.mxu0 0.0
    %2857 = vmatpush1.msra.mxu0 0.0
    %2858 = vmatprep.subr.mxu0 0.0
    %2859 = vmatpush1.msra.mxu0 0.0
    %2860 = vmatprep.subr.mxu0 0.0
    %2861 = vmatpush1.msra.mxu0 0.0
    %2862 = vmatprep.subr.mxu0 0.0
    %2863 = vmatpush1.msra.mxu0 0.0
    %2864 = vmatprep.subr.mxu0 0.0
    %2865 = vmatpush1.msra.mxu0 0.0
    %2866 = vmatprep.subr.mxu0 0.0
    %2867 = vmatpush1.msra.mxu0 0.0
    %2868 = vmatprep.subr.mxu0 0.0
    %2869 = vmatpush1.msra.mxu0 0.0
    %2870 = vmatprep.subr.mxu0 0.0
    %2871 = vmatpush1.msra.mxu0 0.0
    %2872 = vmatprep.subr.mxu0 0.0
    %2873 = vmatpush1.msra.mxu0 0.0
    %2874 = vmatprep.subr.mxu0 0.0
    %2875 = vmatpush1.msra.mxu0 0.0
    %2876 = vmatprep.subr.mxu0 0.0
    %2877 = vmatpush1.msra.mxu0 0.0
    %2878 = vmatprep.subr.mxu0 0.0
    %2879 = vmatpush1.msra.mxu0 0.0
    %2880 = vmatprep.subr.mxu0 0.0
    %2881 = vmatpush1.msra.mxu0 0.0
    %2882 = vmatprep.subr.mxu0 0.0
    %2883 = vmatpush1.msra.mxu0 0.0
    %2884 = vmatprep.subr.mxu0 0.0
    %2885 = vmatpush1.msra.mxu0 0.0
    %2886 = vmatprep.subr.mxu0 0.0
    %2887 = vmatpush1.msra.mxu0 0.0
    %2888 = vmatprep.mubr.f32.mxu0 0.0
    %2889 = vmatmul.mubr.f32.gmra.mrb[0].mxu0 %v2823
    %v2890 = vpop.f32.mrb[0].mxu0
    %v2891 = vadd.f32 0.0, %v2890
    %v2892 = vpop.f32.mrb[0].mxu0
    %v2893 = vadd.f32 0.0, %v2892
    %2894 = vdwg.mxu0
    %2895 = vmatprep.subr.mxu0 0.0
    %2896 = vmatpush1.msra.mxu0 %v1742
    %2897 = vmatprep.subr.mxu0 0.0
    %2898 = vmatpush1.msra.mxu0 %v1745
    %2899 = vmatprep.subr.mxu0 0.0
    %2900 = vmatpush1.msra.mxu0 %v1748
    %2901 = vmatprep.subr.mxu0 0.0
    %2902 = vmatpush1.msra.mxu0 %v1751
    %2903 = vmatprep.subr.mxu0 0.0
    %2904 = vmatpush1.msra.mxu0 %v1754
    %2905 = vmatprep.subr.mxu0 0.0
    %2906 = vmatpush1.msra.mxu0 %v1757
    %2907 = vmatprep.subr.mxu0 0.0
    %2908 = vmatpush1.msra.mxu0 %v1760
    %2909 = vmatprep.subr.mxu0 0.0
    %2910 = vmatpush1.msra.mxu0 %v1763
    %2911 = vmatprep.subr.mxu0 0.0
    %2912 = vmatpush1.msra.mxu0 %v1766
    %2913 = vmatprep.subr.mxu0 0.0
    %2914 = vmatpush1.msra.mxu0 %v1769
    %2915 = vmatprep.subr.mxu0 0.0
    %2916 = vmatpush1.msra.mxu0 %v1772
    %2917 = vmatprep.subr.mxu0 0.0
    %2918 = vmatpush1.msra.mxu0 %v1775
    %2919 = vmatprep.subr.mxu0 0.0
    %2920 = vmatpush1.msra.mxu0 %v1778
    %2921 = vmatprep.subr.mxu0 0.0
    %2922 = vmatpush1.msra.mxu0 %v1781
    %2923 = vmatprep.subr.mxu0 0.0
    %2924 = vmatpush1.msra.mxu0 %v1784
    %2925 = vmatprep.subr.mxu0 0.0
    %2926 = vmatpush1.msra.mxu0 %v1787
    %2927 = vmatprep.subr.mxu0 0.0
    %2928 = vmatpush1.msra.mxu0 0.0
    %2929 = vmatprep.subr.mxu0 0.0
    %2930 = vmatpush1.msra.mxu0 0.0
    %2931 = vmatprep.subr.mxu0 0.0
    %2932 = vmatpush1.msra.mxu0 0.0
    %2933 = vmatprep.subr.mxu0 0.0
    %2934 = vmatpush1.msra.mxu0 0.0
    %2935 = vmatprep.subr.mxu0 0.0
    %2936 = vmatpush1.msra.mxu0 0.0
    %2937 = vmatprep.subr.mxu0 0.0
    %2938 = vmatpush1.msra.mxu0 0.0
    %2939 = vmatprep.subr.mxu0 0.0
    %2940 = vmatpush1.msra.mxu0 0.0
    %2941 = vmatprep.subr.mxu0 0.0
    %2942 = vmatpush1.msra.mxu0 0.0
    %2943 = vmatprep.subr.mxu0 0.0
    %2944 = vmatpush1.msra.mxu0 0.0
    %2945 = vmatprep.subr.mxu0 0.0
    %2946 = vmatpush1.msra.mxu0 0.0
    %2947 = vmatprep.subr.mxu0 0.0
    %2948 = vmatpush1.msra.mxu0 0.0
    %2949 = vmatprep.subr.mxu0 0.0
    %2950 = vmatpush1.msra.mxu0 0.0
    %2951 = vmatprep.subr.mxu0 0.0
    %2952 = vmatpush1.msra.mxu0 0.0
    %2953 = vmatprep.subr.mxu0 0.0
    %2954 = vmatpush1.msra.mxu0 0.0
    %2955 = vmatprep.subr.mxu0 0.0
    %2956 = vmatpush1.msra.mxu0 0.0
    %2957 = vmatprep.subr.mxu0 0.0
    %2958 = vmatpush1.msra.mxu0 0.0
    %2959 = vmatprep.mubr.f32.mxu0 0.0
    %2960 = vmatmul.mubr.f32.gmra.mrb[0].mxu0 %v2823
    %v2961 = vpop.f32.mrb[0].mxu0
    %v2962 = vadd.f32 0.0, %v2961
    %v2963 = vpop.f32.mrb[0].mxu0
    %2964 = vdwg.mxu0
    %v2966 = vrot.slane %v2891, 6
    %v2968 = vadd.f32 %v1879, %v2966
    %v2969 = vxor.u32 %v2968, 2147483648
    %v2970 = vmul.f32 %v2969, 1.442695
    %v2971 = vpow.pop %v2970
    %v2972 = vadd.f32 %v2971, 1.0
    %v2973 = vrcp.pop %v2972
    %v2974 = vmul.f32 1.0, %v2973
    %v2976 = vrot.slane %v2893, 6
    %v2978 = vadd.f32 %v1881, %v2976
    %v2979 = vxor.u32 %v2978, 2147483648
    %v2980 = vmul.f32 %v2979, 1.442695
    %v2981 = vpow.pop %v2980
    %v2982 = vadd.f32 %v2981, 1.0
    %v2983 = vrcp.pop %v2982
    %v2984 = vmul.f32 1.0, %v2983
    %v2985 = vadd.f32 %v2962, %v1962
    %v2987 = vrot.slane %v2985, 6
    %v2989 = vmul.f32 %v2974, %v2987
    %v2990 = vadd.f32 %v1955, %v2989
    %v2991 = vtanh.pop %v2990
    %v2992 = vsub.f32 1.0, %v2984
    %v2993 = vmul.f32 %v2992, %v2991
    %v2995 = vrot.slane %v2823, 6
    %v2997 = vmul.f32 %v2984, %v2995
    %v2998 = vadd.f32 %v2993, %v2997
    %v3000 = vrot.slane %v2998, 2
    %3002 = vmatprep.subr.mxu0 %v1741
    %3003 = vmatpush1.msra.mxu0 %v1740
    %3004 = vmatprep.subr.mxu0 %v1744
    %3005 = vmatpush1.msra.mxu0 %v1743
    %3006 = vmatprep.subr.mxu0 %v1747
    %3007 = vmatpush1.msra.mxu0 %v1746
    %3008 = vmatprep.subr.mxu0 %v1750
    %3009 = vmatpush1.msra.mxu0 %v1749
    %3010 = vmatprep.subr.mxu0 %v1753
    %3011 = vmatpush1.msra.mxu0 %v1752
    %3012 = vmatprep.subr.mxu0 %v1756
    %3013 = vmatpush1.msra.mxu0 %v1755
    %3014 = vmatprep.subr.mxu0 %v1759
    %3015 = vmatpush1.msra.mxu0 %v1758
    %3016 = vmatprep.subr.mxu0 %v1762
    %3017 = vmatpush1.msra.mxu0 %v1761
    %3018 = vmatprep.subr.mxu0 %v1765
    %3019 = vmatpush1.msra.mxu0 %v1764
    %3020 = vmatprep.subr.mxu0 %v1768
    %3021 = vmatpush1.msra.mxu0 %v1767
    %3022 = vmatprep.subr.mxu0 %v1771
    %3023 = vmatpush1.msra.mxu0 %v1770
    %3024 = vmatprep.subr.mxu0 %v1774
    %3025 = vmatpush1.msra.mxu0 %v1773
    %3026 = vmatprep.subr.mxu0 %v1777
    %3027 = vmatpush1.msra.mxu0 %v1776
    %3028 = vmatprep.subr.mxu0 %v1780
    %3029 = vmatpush1.msra.mxu0 %v1779
    %3030 = vmatprep.subr.mxu0 %v1783
    %3031 = vmatpush1.msra.mxu0 %v1782
    %3032 = vmatprep.subr.mxu0 %v1786
    %3033 = vmatpush1.msra.mxu0 %v1785
    %3034 = vmatprep.subr.mxu0 0.0
    %3035 = vmatpush1.msra.mxu0 0.0
    %3036 = vmatprep.subr.mxu0 0.0
    %3037 = vmatpush1.msra.mxu0 0.0
    %3038 = vmatprep.subr.mxu0 0.0
    %3039 = vmatpush1.msra.mxu0 0.0
    %3040 = vmatprep.subr.mxu0 0.0
    %3041 = vmatpush1.msra.mxu0 0.0
    %3042 = vmatprep.subr.mxu0 0.0
    %3043 = vmatpush1.msra.mxu0 0.0
    %3044 = vmatprep.subr.mxu0 0.0
    %3045 = vmatpush1.msra.mxu0 0.0
    %3046 = vmatprep.subr.mxu0 0.0
    %3047 = vmatpush1.msra.mxu0 0.0
    %3048 = vmatprep.subr.mxu0 0.0
    %3049 = vmatpush1.msra.mxu0 0.0
    %3050 = vmatprep.subr.mxu0 0.0
    %3051 = vmatpush1.msra.mxu0 0.0
    %3052 = vmatprep.subr.mxu0 0.0
    %3053 = vmatpush1.msra.mxu0 0.0
    %3054 = vmatprep.subr.mxu0 0.0
    %3055 = vmatpush1.msra.mxu0 0.0
    %3056 = vmatprep.subr.mxu0 0.0
    %3057 = vmatpush1.msra.mxu0 0.0
    %3058 = vmatprep.subr.mxu0 0.0
    %3059 = vmatpush1.msra.mxu0 0.0
    %3060 = vmatprep.subr.mxu0 0.0
    %3061 = vmatpush1.msra.mxu0 0.0
    %3062 = vmatprep.subr.mxu0 0.0
    %3063 = vmatpush1.msra.mxu0 0.0
    %3064 = vmatprep.subr.mxu0 0.0
    %3065 = vmatpush1.msra.mxu0 0.0
    %3066 = vmatprep.mubr.f32.mxu0 0.0
    %3067 = vmatmul.mubr.f32.gmra.mrb[0].mxu0 %v3000
    %v3068 = vpop.f32.mrb[0].mxu0
    %v3069 = vadd.f32 0.0, %v3068
    %v3070 = vpop.f32.mrb[0].mxu0
    %v3071 = vadd.f32 0.0, %v3070
    %3072 = vdwg.mxu0
    %3073 = vmatprep.subr.mxu0 0.0
    %3074 = vmatpush1.msra.mxu0 %v1742
    %3075 = vmatprep.subr.mxu0 0.0
    %3076 = vmatpush1.msra.mxu0 %v1745
    %3077 = vmatprep.subr.mxu0 0.0
    %3078 = vmatpush1.msra.mxu0 %v1748
    %3079 = vmatprep.subr.mxu0 0.0
    %3080 = vmatpush1.msra.mxu0 %v1751
    %3081 = vmatprep.subr.mxu0 0.0
    %3082 = vmatpush1.msra.mxu0 %v1754
    %3083 = vmatprep.subr.mxu0 0.0
    %3084 = vmatpush1.msra.mxu0 %v1757
    %3085 = vmatprep.subr.mxu0 0.0
    %3086 = vmatpush1.msra.mxu0 %v1760
    %3087 = vmatprep.subr.mxu0 0.0
    %3088 = vmatpush1.msra.mxu0 %v1763
    %3089 = vmatprep.subr.mxu0 0.0
    %3090 = vmatpush1.msra.mxu0 %v1766
    %3091 = vmatprep.subr.mxu0 0.0
    %3092 = vmatpush1.msra.mxu0 %v1769
    %3093 = vmatprep.subr.mxu0 0.0
    %3094 = vmatpush1.msra.mxu0 %v1772
    %3095 = vmatprep.subr.mxu0 0.0
    %3096 = vmatpush1.msra.mxu0 %v1775
    %3097 = vmatprep.subr.mxu0 0.0
    %3098 = vmatpush1.msra.mxu0 %v1778
    %3099 = vmatprep.subr.mxu0 0.0
    %3100 = vmatpush1.msra.mxu0 %v1781
    %3101 = vmatprep.subr.mxu0 0.0
    %3102 = vmatpush1.msra.mxu0 %v1784
    %3103 = vmatprep.subr.mxu0 0.0
    %3104 = vmatpush1.msra.mxu0 %v1787
    %3105 = vmatprep.subr.mxu0 0.0
    %3106 = vmatpush1.msra.mxu0 0.0
    %3107 = vmatprep.subr.mxu0 0.0
    %3108 = vmatpush1.msra.mxu0 0.0
    %3109 = vmatprep.subr.mxu0 0.0
    %3110 = vmatpush1.msra.mxu0 0.0
    %3111 = vmatprep.subr.mxu0 0.0
    %3112 = vmatpush1.msra.mxu0 0.0
    %3113 = vmatprep.subr.mxu0 0.0
    %3114 = vmatpush1.msra.mxu0 0.0
    %3115 = vmatprep.subr.mxu0 0.0
    %3116 = vmatpush1.msra.mxu0 0.0
    %3117 = vmatprep.subr.mxu0 0.0
    %3118 = vmatpush1.msra.mxu0 0.0
    %3119 = vmatprep.subr.mxu0 0.0
    %3120 = vmatpush1.msra.mxu0 0.0
    %3121 = vmatprep.subr.mxu0 0.0
    %3122 = vmatpush1.msra.mxu0 0.0
    %3123 = vmatprep.subr.mxu0 0.0
    %3124 = vmatpush1.msra.mxu0 0.0
    %3125 = vmatprep.subr.mxu0 0.0
    %3126 = vmatpush1.msra.mxu0 0.0
    %3127 = vmatprep.subr.mxu0 0.0
    %3128 = vmatpush1.msra.mxu0 0.0
    %3129 = vmatprep.subr.mxu0 0.0
    %3130 = vmatpush1.msra.mxu0 0.0
    %3131 = vmatprep.subr.mxu0 0.0
    %3132 = vmatpush1.msra.mxu0 0.0
    %3133 = vmatprep.subr.mxu0 0.0
    %3134 = vmatpush1.msra.mxu0 0.0
    %3135 = vmatprep.subr.mxu0 0.0
    %3136 = vmatpush1.msra.mxu0 0.0
    %3137 = vmatprep.mubr.f32.mxu0 0.0
    %3138 = vmatmul.mubr.f32.gmra.mrb[0].mxu0 %v3000
    %v3139 = vpop.f32.mrb[0].mxu0
    %v3140 = vadd.f32 0.0, %v3139
    %v3141 = vpop.f32.mrb[0].mxu0
    %3142 = vdwg.mxu0
    %v3144 = vrot.slane %v3069, 4
    %v3146 = vadd.f32 %v1879, %v3144
    %v3147 = vxor.u32 %v3146, 2147483648
    %v3148 = vmul.f32 %v3147, 1.442695
    %v3149 = vpow.pop %v3148
    %v3150 = vadd.f32 %v3149, 1.0
    %v3151 = vrcp.pop %v3150
    %v3152 = vmul.f32 1.0, %v3151
    %v3154 = vrot.slane %v3071, 4
    %v3156 = vadd.f32 %v1881, %v3154
    %v3157 = vxor.u32 %v3156, 2147483648
    %v3158 = vmul.f32 %v3157, 1.442695
    %v3159 = vpow.pop %v3158
    %v3160 = vadd.f32 %v3159, 1.0
    %v3161 = vrcp.pop %v3160
    %v3162 = vmul.f32 1.0, %v3161
    %v3163 = vadd.f32 %v3140, %v1962
    %v3165 = vrot.slane %v3163, 4
    %v3167 = vmul.f32 %v3152, %v3165
    %v3168 = vadd.f32 %v1955, %v3167
    %v3169 = vtanh.pop %v3168
    %v3170 = vsub.f32 1.0, %v3162
    %v3171 = vmul.f32 %v3170, %v3169
    %v3172 = vrot.slane %v2998, 6
    %v3174 = vmul.f32 %v3162, %v3172
    %v3175 = vadd.f32 %v3171, %v3174
    %v3177 = vrot.slane %v3175, 4
    %3179 = vmatprep.subr.mxu0 %v1741
    %3180 = vmatpush1.msra.mxu0 %v1740
    %3181 = vmatprep.subr.mxu0 %v1744
    %3182 = vmatpush1.msra.mxu0 %v1743
    %3183 = vmatprep.subr.mxu0 %v1747
    %3184 = vmatpush1.msra.mxu0 %v1746
    %3185 = vmatprep.subr.mxu0 %v1750
    %3186 = vmatpush1.msra.mxu0 %v1749
    %3187 = vmatprep.subr.mxu0 %v1753
    %3188 = vmatpush1.msra.mxu0 %v1752
    %3189 = vmatprep.subr.mxu0 %v1756
    %3190 = vmatpush1.msra.mxu0 %v1755
    %3191 = vmatprep.subr.mxu0 %v1759
    %3192 = vmatpush1.msra.mxu0 %v1758
    %3193 = vmatprep.subr.mxu0 %v1762
    %3194 = vmatpush1.msra.mxu0 %v1761
    %3195 = vmatprep.subr.mxu0 %v1765
    %3196 = vmatpush1.msra.mxu0 %v1764
    %3197 = vmatprep.subr.mxu0 %v1768
    %3198 = vmatpush1.msra.mxu0 %v1767
    %3199 = vmatprep.subr.mxu0 %v1771
    %3200 = vmatpush1.msra.mxu0 %v1770
    %3201 = vmatprep.subr.mxu0 %v1774
    %3202 = vmatpush1.msra.mxu0 %v1773
    %3203 = vmatprep.subr.mxu0 %v1777
    %3204 = vmatpush1.msra.mxu0 %v1776
    %3205 = vmatprep.subr.mxu0 %v1780
    %3206 = vmatpush1.msra.mxu0 %v1779
    %3207 = vmatprep.subr.mxu0 %v1783
    %3208 = vmatpush1.msra.mxu0 %v1782
    %3209 = vmatprep.subr.mxu0 %v1786
    %3210 = vmatpush1.msra.mxu0 %v1785
    %3211 = vmatprep.subr.mxu0 0.0
    %3212 = vmatpush1.msra.mxu0 0.0
    %3213 = vmatprep.subr.mxu0 0.0
    %3214 = vmatpush1.msra.mxu0 0.0
    %3215 = vmatprep.subr.mxu0 0.0
    %3216 = vmatpush1.msra.mxu0 0.0
    %3217 = vmatprep.subr.mxu0 0.0
    %3218 = vmatpush1.msra.mxu0 0.0
    %3219 = vmatprep.subr.mxu0 0.0
    %3220 = vmatpush1.msra.mxu0 0.0
    %3221 = vmatprep.subr.mxu0 0.0
    %3222 = vmatpush1.msra.mxu0 0.0
    %3223 = vmatprep.subr.mxu0 0.0
    %3224 = vmatpush1.msra.mxu0 0.0
    %3225 = vmatprep.subr.mxu0 0.0
    %3226 = vmatpush1.msra.mxu0 0.0
    %3227 = vmatprep.subr.mxu0 0.0
    %3228 = vmatpush1.msra.mxu0 0.0
    %3229 = vmatprep.subr.mxu0 0.0
    %3230 = vmatpush1.msra.mxu0 0.0
    %3231 = vmatprep.subr.mxu0 0.0
    %3232 = vmatpush1.msra.mxu0 0.0
    %3233 = vmatprep.subr.mxu0 0.0
    %3234 = vmatpush1.msra.mxu0 0.0
    %3235 = vmatprep.subr.mxu0 0.0
    %3236 = vmatpush1.msra.mxu0 0.0
    %3237 = vmatprep.subr.mxu0 0.0
    %3238 = vmatpush1.msra.mxu0 0.0
    %3239 = vmatprep.subr.mxu0 0.0
    %3240 = vmatpush1.msra.mxu0 0.0
    %3241 = vmatprep.subr.mxu0 0.0
    %3242 = vmatpush1.msra.mxu0 0.0
    %3243 = vmatprep.mubr.f32.mxu0 0.0
    %3244 = vmatmul.mubr.f32.gmra.mrb[0].mxu0 %v3177
    %v3245 = vpop.f32.mrb[0].mxu0
    %v3246 = vadd.f32 0.0, %v3245
    %v3247 = vpop.f32.mrb[0].mxu0
    %v3248 = vadd.f32 0.0, %v3247
    %3249 = vdwg.mxu0
    %3250 = vmatprep.subr.mxu0 0.0
    %3251 = vmatpush1.msra.mxu0 %v1742
    %3252 = vmatprep.subr.mxu0 0.0
    %3253 = vmatpush1.msra.mxu0 %v1745
    %3254 = vmatprep.subr.mxu0 0.0
    %3255 = vmatpush1.msra.mxu0 %v1748
    %3256 = vmatprep.subr.mxu0 0.0
    %3257 = vmatpush1.msra.mxu0 %v1751
    %3258 = vmatprep.subr.mxu0 0.0
    %3259 = vmatpush1.msra.mxu0 %v1754
    %3260 = vmatprep.subr.mxu0 0.0
    %3261 = vmatpush1.msra.mxu0 %v1757
    %3262 = vmatprep.subr.mxu0 0.0
    %3263 = vmatpush1.msra.mxu0 %v1760
    %3264 = vmatprep.subr.mxu0 0.0
    %3265 = vmatpush1.msra.mxu0 %v1763
    %3266 = vmatprep.subr.mxu0 0.0
    %3267 = vmatpush1.msra.mxu0 %v1766
    %3268 = vmatprep.subr.mxu0 0.0
    %3269 = vmatpush1.msra.mxu0 %v1769
    %3270 = vmatprep.subr.mxu0 0.0
    %3271 = vmatpush1.msra.mxu0 %v1772
    %3272 = vmatprep.subr.mxu0 0.0
    %3273 = vmatpush1.msra.mxu0 %v1775
    %3274 = vmatprep.subr.mxu0 0.0
    %3275 = vmatpush1.msra.mxu0 %v1778
    %3276 = vmatprep.subr.mxu0 0.0
    %3277 = vmatpush1.msra.mxu0 %v1781
    %3278 = vmatprep.subr.mxu0 0.0
    %3279 = vmatpush1.msra.mxu0 %v1784
    %3280 = vmatprep.subr.mxu0 0.0
    %3281 = vmatpush1.msra.mxu0 %v1787
    %3282 = vmatprep.subr.mxu0 0.0
    %3283 = vmatpush1.msra.mxu0 0.0
    %3284 = vmatprep.subr.mxu0 0.0
    %3285 = vmatpush1.msra.mxu0 0.0
    %3286 = vmatprep.subr.mxu0 0.0
    %3287 = vmatpush1.msra.mxu0 0.0
    %3288 = vmatprep.subr.mxu0 0.0
    %3289 = vmatpush1.msra.mxu0 0.0
    %3290 = vmatprep.subr.mxu0 0.0
    %3291 = vmatpush1.msra.mxu0 0.0
    %3292 = vmatprep.subr.mxu0 0.0
    %3293 = vmatpush1.msra.mxu0 0.0
    %3294 = vmatprep.subr.mxu0 0.0
    %3295 = vmatpush1.msra.mxu0 0.0
    %3296 = vmatprep.subr.mxu0 0.0
    %3297 = vmatpush1.msra.mxu0 0.0
    %3298 = vmatprep.subr.mxu0 0.0
    %3299 = vmatpush1.msra.mxu0 0.0
    %3300 = vmatprep.subr.mxu0 0.0
    %3301 = vmatpush1.msra.mxu0 0.0
    %3302 = vmatprep.subr.mxu0 0.0
    %3303 = vmatpush1.msra.mxu0 0.0
    %3304 = vmatprep.subr.mxu0 0.0
    %3305 = vmatpush1.msra.mxu0 0.0
    %3306 = vmatprep.subr.mxu0 0.0
    %3307 = vmatpush1.msra.mxu0 0.0
    %3308 = vmatprep.subr.mxu0 0.0
    %3309 = vmatpush1.msra.mxu0 0.0
    %3310 = vmatprep.subr.mxu0 0.0
    %3311 = vmatpush1.msra.mxu0 0.0
    %3312 = vmatprep.subr.mxu0 0.0
    %3313 = vmatpush1.msra.mxu0 0.0
    %3314 = vmatprep.mubr.f32.mxu0 0.0
    %3315 = vmatmul.mubr.f32.gmra.mrb[0].mxu0 %v3177
    %v3316 = vpop.f32.mrb[0].mxu0
    %v3317 = vadd.f32 0.0, %v3316
    %v3318 = vpop.f32.mrb[0].mxu0
    %3319 = vdwg.mxu0
    %v3321 = vrot.slane %v3246, 2
    %v3323 = vadd.f32 %v1879, %v3321
    %v3324 = vxor.u32 %v3323, 2147483648
    %v3325 = vmul.f32 %v3324, 1.442695
    %v3326 = vpow.pop %v3325
    %v3327 = vadd.f32 %v3326, 1.0
    %v3328 = vrcp.pop %v3327
    %v3329 = vmul.f32 1.0, %v3328
    %v3331 = vrot.slane %v3248, 2
    %v3333 = vadd.f32 %v1881, %v3331
    %v3334 = vxor.u32 %v3333, 2147483648
    %v3335 = vmul.f32 %v3334, 1.442695
    %v3336 = vpow.pop %v3335
    %v3337 = vadd.f32 %v3336, 1.0
    %v3338 = vrcp.pop %v3337
    %v3339 = vmul.f32 1.0, %v3338
    %v3340 = vadd.f32 %v3317, %v1962
    %v3342 = vrot.slane %v3340, 2
    %v3344 = vmul.f32 %v3329, %v3342
    %v3345 = vadd.f32 %v1955, %v3344
    %v3346 = vtanh.pop %v3345
    %v3347 = vsub.f32 1.0, %v3339
    %v3348 = vmul.f32 %v3347, %v3346
    %v3349 = vrot.slane %v3175, 6
    %v3351 = vmul.f32 %v3339, %v3349
    %v3352 = vadd.f32 %v3348, %v3351
    %s3353 = scalar_lea.vmem [#allocation5], 2
    %3354 = vst [vmem:[%s3353 - $0x6] sm:$0xc0] %v3352
    %v3355 = vxor.u32 %v3352, 2147483648
    %v3356 = vmul.f32 %v3355, 1.442695
    %v3357 = vpow.pop %v3356
    %v3358 = vadd.f32 %v3357, 1.0
    %v3359 = vrcp.pop %v3358
    %v3360 = vmul.f32 1.0, %v3359
    %v3361 = vld [vmem:[%s10] sm:$0xff]
    %v3362 = vld [vmem:[%s10 + $0x8] sm:$0xff]
    %v3363 = vld [vmem:[%s10 + $0x10] sm:$0xff]
    %v3364 = vld [vmem:[%s10 + $0x18] sm:$0xff]
    %v3365 = vld [vmem:[%s10 + $0x20] sm:$0xff]
    %v3366 = vld [vmem:[%s10 + $0x28] sm:$0xff]
    %v3367 = vld [vmem:[%s10 + $0x30] sm:$0xff]
    %v3368 = vld [vmem:[%s10 + $0x38] sm:$0xff]
    %v3369 = vld [vmem:[%s10 + $0x40] sm:$0xff]
    %v3370 = vld [vmem:[%s10 + $0x48] sm:$0xff]
    %v3371 = vld [vmem:[%s10 + $0x50] sm:$0xff]
    %v3372 = vld [vmem:[%s10 + $0x58] sm:$0xff]
    %v3373 = vld [vmem:[%s10 + $0x60] sm:$0xff]
    %v3374 = vld [vmem:[%s10 + $0x68] sm:$0xff]
    %v3375 = vld [vmem:[%s10 + $0x70] sm:$0xff]
    %v3376 = vld [vmem:[%s10 + $0x78] sm:$0xff]
    %v3377 = vld [vmem:[%s11] sm:$0x1]
    %v3379 = vlaneseq
    %v3380 = vshrl.u32 %v3379, 7
    %v3381 = vsub.s32 0, %v3380
    %v3382 = vrot.slane %v3377, %v3381
    %v3385 = vrot.slane %v3360, 6
    %3387 = vmatprep.subr.mxu0 0.0
    %3388 = vmatpush1.msra.mxu0 %v3361
    %3389 = vmatprep.subr.mxu0 0.0
    %3390 = vmatpush1.msra.mxu0 %v3362
    %3391 = vmatprep.subr.mxu0 0.0
    %3392 = vmatpush1.msra.mxu0 %v3363
    %3393 = vmatprep.subr.mxu0 0.0
    %3394 = vmatpush1.msra.mxu0 %v3364
    %3395 = vmatprep.subr.mxu0 0.0
    %3396 = vmatpush1.msra.mxu0 %v3365
    %3397 = vmatprep.subr.mxu0 0.0
    %3398 = vmatpush1.msra.mxu0 %v3366
    %3399 = vmatprep.subr.mxu0 0.0
    %3400 = vmatpush1.msra.mxu0 %v3367
    %3401 = vmatprep.subr.mxu0 0.0
    %3402 = vmatpush1.msra.mxu0 %v3368
    %3403 = vmatprep.subr.mxu0 0.0
    %3404 = vmatpush1.msra.mxu0 %v3369
    %3405 = vmatprep.subr.mxu0 0.0
    %3406 = vmatpush1.msra.mxu0 %v3370
    %3407 = vmatprep.subr.mxu0 0.0
    %3408 = vmatpush1.msra.mxu0 %v3371
    %3409 = vmatprep.subr.mxu0 0.0
    %3410 = vmatpush1.msra.mxu0 %v3372
    %3411 = vmatprep.subr.mxu0 0.0
    %3412 = vmatpush1.msra.mxu0 %v3373
    %3413 = vmatprep.subr.mxu0 0.0
    %3414 = vmatpush1.msra.mxu0 %v3374
    %3415 = vmatprep.subr.mxu0 0.0
    %3416 = vmatpush1.msra.mxu0 %v3375
    %3417 = vmatprep.subr.mxu0 0.0
    %3418 = vmatpush1.msra.mxu0 %v3376
    %3419 = vmatprep.subr.mxu0 0.0
    %3420 = vmatpush1.msra.mxu0 0.0
    %3421 = vmatprep.subr.mxu0 0.0
    %3422 = vmatpush1.msra.mxu0 0.0
    %3423 = vmatprep.subr.mxu0 0.0
    %3424 = vmatpush1.msra.mxu0 0.0
    %3425 = vmatprep.subr.mxu0 0.0
    %3426 = vmatpush1.msra.mxu0 0.0
    %3427 = vmatprep.subr.mxu0 0.0
    %3428 = vmatpush1.msra.mxu0 0.0
    %3429 = vmatprep.subr.mxu0 0.0
    %3430 = vmatpush1.msra.mxu0 0.0
    %3431 = vmatprep.subr.mxu0 0.0
    %3432 = vmatpush1.msra.mxu0 0.0
    %3433 = vmatprep.subr.mxu0 0.0
    %3434 = vmatpush1.msra.mxu0 0.0
    %3435 = vmatprep.subr.mxu0 0.0
    %3436 = vmatpush1.msra.mxu0 0.0
    %3437 = vmatprep.subr.mxu0 0.0
    %3438 = vmatpush1.msra.mxu0 0.0
    %3439 = vmatprep.subr.mxu0 0.0
    %3440 = vmatpush1.msra.mxu0 0.0
    %3441 = vmatprep.subr.mxu0 0.0
    %3442 = vmatpush1.msra.mxu0 0.0
    %3443 = vmatprep.subr.mxu0 0.0
    %3444 = vmatpush1.msra.mxu0 0.0
    %3445 = vmatprep.subr.mxu0 0.0
    %3446 = vmatpush1.msra.mxu0 0.0
    %3447 = vmatprep.subr.mxu0 0.0
    %3448 = vmatpush1.msra.mxu0 0.0
    %3449 = vmatprep.subr.mxu0 0.0
    %3450 = vmatpush1.msra.mxu0 0.0
    %3451 = vmatprep.mubr.f32.mxu0 0.0
    %3452 = vmatmul.mubr.f32.gmra.mrb[0].mxu0 %v3385
    %v3453 = vpop.f32.mrb[0].mxu0
    %v3454 = vadd.f32 %v3382, %v3453
    %v3455 = vpop.f32.mrb[0].mxu0
    %3456 = vdwg.mxu0
    %v3457 = vxor.u32 %v3454, 2147483648
    %v3458 = vmul.f32 %v3457, 1.442695
    %v3459 = vpow.pop %v3458
    %v3460 = vadd.f32 %v3459, 1.0
    %v3461 = vrcp.pop %v3460
    %v3462 = vmul.f32 1.0, %v3461
    %v3463 = vld [vmem:[%s12] sm:$0xff]
    %v3464 = vld [vmem:[%s12 + $0x8] sm:$0xff]
    %v3465 = vld [vmem:[%s12 + $0x10] sm:$0xff]
    %v3466 = vld [vmem:[%s12 + $0x18] sm:$0xff]
    %v3467 = vld [vmem:[%s12 + $0x20] sm:$0xff]
    %v3468 = vld [vmem:[%s12 + $0x28] sm:$0xff]
    %v3469 = vld [vmem:[%s12 + $0x30] sm:$0xff]
    %v3470 = vld [vmem:[%s12 + $0x38] sm:$0xff]
    %v3471 = vld [vmem:[%s12 + $0x40] sm:$0xff]
    %v3472 = vld [vmem:[%s12 + $0x48] sm:$0xff]
    %v3473 = vld [vmem:[%s12 + $0x50] sm:$0xff]
    %v3474 = vld [vmem:[%s12 + $0x58] sm:$0xff]
    %v3475 = vld [vmem:[%s12 + $0x60] sm:$0xff]
    %v3476 = vld [vmem:[%s12 + $0x68] sm:$0xff]
    %v3477 = vld [vmem:[%s12 + $0x70] sm:$0xff]
    %v3478 = vld [vmem:[%s12 + $0x78] sm:$0xff]
    %3479 = vmatprep.subr.mxu0 0.0
    %3480 = vmatpush1.msra.mxu0 %v3463
    %3481 = vmatprep.subr.mxu0 0.0
    %3482 = vmatpush1.msra.mxu0 %v3464
    %3483 = vmatprep.subr.mxu0 0.0
    %3484 = vmatpush1.msra.mxu0 %v3465
    %3485 = vmatprep.subr.mxu0 0.0
    %3486 = vmatpush1.msra.mxu0 %v3466
    %3487 = vmatprep.subr.mxu0 0.0
    %3488 = vmatpush1.msra.mxu0 %v3467
    %3489 = vmatprep.subr.mxu0 0.0
    %3490 = vmatpush1.msra.mxu0 %v3468
    %3491 = vmatprep.subr.mxu0 0.0
    %3492 = vmatpush1.msra.mxu0 %v3469
    %3493 = vmatprep.subr.mxu0 0.0
    %3494 = vmatpush1.msra.mxu0 %v3470
    %3495 = vmatprep.subr.mxu0 0.0
    %3496 = vmatpush1.msra.mxu0 %v3471
    %3497 = vmatprep.subr.mxu0 0.0
    %3498 = vmatpush1.msra.mxu0 %v3472
    %3499 = vmatprep.subr.mxu0 0.0
    %3500 = vmatpush1.msra.mxu0 %v3473
    %3501 = vmatprep.subr.mxu0 0.0
    %3502 = vmatpush1.msra.mxu0 %v3474
    %3503 = vmatprep.subr.mxu0 0.0
    %3504 = vmatpush1.msra.mxu0 %v3475
    %3505 = vmatprep.subr.mxu0 0.0
    %3506 = vmatpush1.msra.mxu0 %v3476
    %3507 = vmatprep.subr.mxu0 0.0
    %3508 = vmatpush1.msra.mxu0 %v3477
    %3509 = vmatprep.subr.mxu0 0.0
    %3510 = vmatpush1.msra.mxu0 %v3478
    %3511 = vmatprep.subr.mxu0 0.0
    %3512 = vmatpush1.msra.mxu0 0.0
    %3513 = vmatprep.subr.mxu0 0.0
    %3514 = vmatpush1.msra.mxu0 0.0
    %3515 = vmatprep.subr.mxu0 0.0
    %3516 = vmatpush1.msra.mxu0 0.0
    %3517 = vmatprep.subr.mxu0 0.0
    %3518 = vmatpush1.msra.mxu0 0.0
    %3519 = vmatprep.subr.mxu0 0.0
    %3520 = vmatpush1.msra.mxu0 0.0
    %3521 = vmatprep.subr.mxu0 0.0
    %3522 = vmatpush1.msra.mxu0 0.0
    %3523 = vmatprep.subr.mxu0 0.0
    %3524 = vmatpush1.msra.mxu0 0.0
    %3525 = vmatprep.subr.mxu0 0.0
    %3526 = vmatpush1.msra.mxu0 0.0
    %3527 = vmatprep.subr.mxu0 0.0
    %3528 = vmatpush1.msra.mxu0 0.0
    %3529 = vmatprep.subr.mxu0 0.0
    %3530 = vmatpush1.msra.mxu0 0.0
    %3531 = vmatprep.subr.mxu0 0.0
    %3532 = vmatpush1.msra.mxu0 0.0
    %3533 = vmatprep.subr.mxu0 0.0
    %3534 = vmatpush1.msra.mxu0 0.0
    %3535 = vmatprep.subr.mxu0 0.0
    %3536 = vmatpush1.msra.mxu0 0.0
    %3537 = vmatprep.subr.mxu0 0.0
    %3538 = vmatpush1.msra.mxu0 0.0
    %3539 = vmatprep.subr.mxu0 0.0
    %3540 = vmatpush1.msra.mxu0 0.0
    %3541 = vmatprep.subr.mxu0 0.0
    %3542 = vmatpush1.msra.mxu0 0.0
    %3543 = vmatprep.mubr.f32.mxu0 0.0
    %3544 = vmatmul.mubr.f32.gmra.mrb[0].mxu0 %v3462
    %v3545 = vpop.f32.mrb[0].mxu0
    %v3546 = vadd.f32 0.0, %v3545
    %v3547 = vpop.f32.mrb[0].mxu0
    %3548 = vdwg.mxu0
    %v3549 = vxor.u32 %v3546, 2147483648
    %v3550 = vmul.f32 %v3549, 1.442695
    %v3551 = vpow.pop %v3550
    %v3552 = vadd.f32 %v3551, 1.0
    %v3553 = vrcp.pop %v3552
    %v3554 = vmul.f32 1.0, %v3553
    %v3555 = vld [vmem:[%s13] sm:$0xff]
    %v3556 = vld [vmem:[%s13 + $0x8] sm:$0xff]
    %v3557 = vld [vmem:[%s13 + $0x10] sm:$0xff]
    %v3558 = vld [vmem:[%s13 + $0x18] sm:$0xff]
    %v3559 = vld [vmem:[%s13 + $0x20] sm:$0xff]
    %v3560 = vld [vmem:[%s13 + $0x28] sm:$0xff]
    %v3561 = vld [vmem:[%s13 + $0x30] sm:$0xff]
    %v3562 = vld [vmem:[%s13 + $0x38] sm:$0xff]
    %v3563 = vld [vmem:[%s13 + $0x40] sm:$0xff]
    %v3564 = vld [vmem:[%s13 + $0x48] sm:$0xff]
    %v3565 = vld [vmem:[%s13 + $0x50] sm:$0xff]
    %v3566 = vld [vmem:[%s13 + $0x58] sm:$0xff]
    %v3567 = vld [vmem:[%s13 + $0x60] sm:$0xff]
    %v3568 = vld [vmem:[%s13 + $0x68] sm:$0xff]
    %v3569 = vld [vmem:[%s13 + $0x70] sm:$0xff]
    %v3570 = vld [vmem:[%s13 + $0x78] sm:$0xff]
    %3571 = vmatprep.subr.mxu0 0.0
    %3572 = vmatpush1.msra.mxu0 %v3555
    %3573 = vmatprep.subr.mxu0 0.0
    %3574 = vmatpush1.msra.mxu0 %v3556
    %3575 = vmatprep.subr.mxu0 0.0
    %3576 = vmatpush1.msra.mxu0 %v3557
    %3577 = vmatprep.subr.mxu0 0.0
    %3578 = vmatpush1.msra.mxu0 %v3558
    %3579 = vmatprep.subr.mxu0 0.0
    %3580 = vmatpush1.msra.mxu0 %v3559
    %3581 = vmatprep.subr.mxu0 0.0
    %3582 = vmatpush1.msra.mxu0 %v3560
    %3583 = vmatprep.subr.mxu0 0.0
    %3584 = vmatpush1.msra.mxu0 %v3561
    %3585 = vmatprep.subr.mxu0 0.0
    %3586 = vmatpush1.msra.mxu0 %v3562
    %3587 = vmatprep.subr.mxu0 0.0
    %3588 = vmatpush1.msra.mxu0 %v3563
    %3589 = vmatprep.subr.mxu0 0.0
    %3590 = vmatpush1.msra.mxu0 %v3564
    %3591 = vmatprep.subr.mxu0 0.0
    %3592 = vmatpush1.msra.mxu0 %v3565
    %3593 = vmatprep.subr.mxu0 0.0
    %3594 = vmatpush1.msra.mxu0 %v3566
    %3595 = vmatprep.subr.mxu0 0.0
    %3596 = vmatpush1.msra.mxu0 %v3567
    %3597 = vmatprep.subr.mxu0 0.0
    %3598 = vmatpush1.msra.mxu0 %v3568
    %3599 = vmatprep.subr.mxu0 0.0
    %3600 = vmatpush1.msra.mxu0 %v3569
    %3601 = vmatprep.subr.mxu0 0.0
    %3602 = vmatpush1.msra.mxu0 %v3570
    %3603 = vmatprep.subr.mxu0 0.0
    %3604 = vmatpush1.msra.mxu0 0.0
    %3605 = vmatprep.subr.mxu0 0.0
    %3606 = vmatpush1.msra.mxu0 0.0
    %3607 = vmatprep.subr.mxu0 0.0
    %3608 = vmatpush1.msra.mxu0 0.0
    %3609 = vmatprep.subr.mxu0 0.0
    %3610 = vmatpush1.msra.mxu0 0.0
    %3611 = vmatprep.subr.mxu0 0.0
    %3612 = vmatpush1.msra.mxu0 0.0
    %3613 = vmatprep.subr.mxu0 0.0
    %3614 = vmatpush1.msra.mxu0 0.0
    %3615 = vmatprep.subr.mxu0 0.0
    %3616 = vmatpush1.msra.mxu0 0.0
    %3617 = vmatprep.subr.mxu0 0.0
    %3618 = vmatpush1.msra.mxu0 0.0
    %3619 = vmatprep.subr.mxu0 0.0
    %3620 = vmatpush1.msra.mxu0 0.0
    %3621 = vmatprep.subr.mxu0 0.0
    %3622 = vmatpush1.msra.mxu0 0.0
    %3623 = vmatprep.subr.mxu0 0.0
    %3624 = vmatpush1.msra.mxu0 0.0
    %3625 = vmatprep.subr.mxu0 0.0
    %3626 = vmatpush1.msra.mxu0 0.0
    %3627 = vmatprep.subr.mxu0 0.0
    %3628 = vmatpush1.msra.mxu0 0.0
    %3629 = vmatprep.subr.mxu0 0.0
    %3630 = vmatpush1.msra.mxu0 0.0
    %3631 = vmatprep.subr.mxu0 0.0
    %3632 = vmatpush1.msra.mxu0 0.0
    %3633 = vmatprep.subr.mxu0 0.0
    %3634 = vmatpush1.msra.mxu0 0.0
    %3635 = vmatprep.mubr.f32.mxu0 0.0
    %3636 = vmatmul.mubr.f32.gmra.mrb[0].mxu0 %v3554
    %v3637 = vpop.f32.mrb[0].mxu0
    %v3638 = vadd.f32 0.0, %v3637
    %v3639 = vpop.f32.mrb[0].mxu0
    %3640 = vdwg.mxu0
    %v3641 = vxor.u32 %v3638, 2147483648
    %v3642 = vmul.f32 %v3641, 1.442695
    %v3643 = vpow.pop %v3642
    %v3644 = vadd.f32 %v3643, 1.0
    %v3645 = vrcp.pop %v3644
    %v3646 = vmul.f32 1.0, %v3645
    %v3647 = vld [vmem:[%s14] sm:$0xff]
    %v3648 = vld [vmem:[%s14 + $0x8] sm:$0xff]
    %v3649 = vld [vmem:[%s14 + $0x10] sm:$0xff]
    %v3650 = vld [vmem:[%s14 + $0x18] sm:$0xff]
    %v3651 = vld [vmem:[%s14 + $0x20] sm:$0xff]
    %v3652 = vld [vmem:[%s14 + $0x28] sm:$0xff]
    %v3653 = vld [vmem:[%s14 + $0x30] sm:$0xff]
    %v3654 = vld [vmem:[%s14 + $0x38] sm:$0xff]
    %v3655 = vld [vmem:[%s14 + $0x40] sm:$0xff]
    %v3656 = vld [vmem:[%s14 + $0x48] sm:$0xff]
    %v3657 = vld [vmem:[%s14 + $0x50] sm:$0xff]
    %v3658 = vld [vmem:[%s14 + $0x58] sm:$0xff]
    %v3659 = vld [vmem:[%s14 + $0x60] sm:$0xff]
    %v3660 = vld [vmem:[%s14 + $0x68] sm:$0xff]
    %v3661 = vld [vmem:[%s14 + $0x70] sm:$0xff]
    %v3662 = vld [vmem:[%s14 + $0x78] sm:$0xff]
    %3663 = vmatprep.subr.mxu0 0.0
    %3664 = vmatpush1.msra.mxu0 %v3647
    %3665 = vmatprep.subr.mxu0 0.0
    %3666 = vmatpush1.msra.mxu0 %v3648
    %3667 = vmatprep.subr.mxu0 0.0
    %3668 = vmatpush1.msra.mxu0 %v3649
    %3669 = vmatprep.subr.mxu0 0.0
    %3670 = vmatpush1.msra.mxu0 %v3650
    %3671 = vmatprep.subr.mxu0 0.0
    %3672 = vmatpush1.msra.mxu0 %v3651
    %3673 = vmatprep.subr.mxu0 0.0
    %3674 = vmatpush1.msra.mxu0 %v3652
    %3675 = vmatprep.subr.mxu0 0.0
    %3676 = vmatpush1.msra.mxu0 %v3653
    %3677 = vmatprep.subr.mxu0 0.0
    %3678 = vmatpush1.msra.mxu0 %v3654
    %3679 = vmatprep.subr.mxu0 0.0
    %3680 = vmatpush1.msra.mxu0 %v3655
    %3681 = vmatprep.subr.mxu0 0.0
    %3682 = vmatpush1.msra.mxu0 %v3656
    %3683 = vmatprep.subr.mxu0 0.0
    %3684 = vmatpush1.msra.mxu0 %v3657
    %3685 = vmatprep.subr.mxu0 0.0
    %3686 = vmatpush1.msra.mxu0 %v3658
    %3687 = vmatprep.subr.mxu0 0.0
    %3688 = vmatpush1.msra.mxu0 %v3659
    %3689 = vmatprep.subr.mxu0 0.0
    %3690 = vmatpush1.msra.mxu0 %v3660
    %3691 = vmatprep.subr.mxu0 0.0
    %3692 = vmatpush1.msra.mxu0 %v3661
    %3693 = vmatprep.subr.mxu0 0.0
    %3694 = vmatpush1.msra.mxu0 %v3662
    %3695 = vmatprep.subr.mxu0 0.0
    %3696 = vmatpush1.msra.mxu0 0.0
    %3697 = vmatprep.subr.mxu0 0.0
    %3698 = vmatpush1.msra.mxu0 0.0
    %3699 = vmatprep.subr.mxu0 0.0
    %3700 = vmatpush1.msra.mxu0 0.0
    %3701 = vmatprep.subr.mxu0 0.0
    %3702 = vmatpush1.msra.mxu0 0.0
    %3703 = vmatprep.subr.mxu0 0.0
    %3704 = vmatpush1.msra.mxu0 0.0
    %3705 = vmatprep.subr.mxu0 0.0
    %3706 = vmatpush1.msra.mxu0 0.0
    %3707 = vmatprep.subr.mxu0 0.0
    %3708 = vmatpush1.msra.mxu0 0.0
    %3709 = vmatprep.subr.mxu0 0.0
    %3710 = vmatpush1.msra.mxu0 0.0
    %3711 = vmatprep.subr.mxu0 0.0
    %3712 = vmatpush1.msra.mxu0 0.0
    %3713 = vmatprep.subr.mxu0 0.0
    %3714 = vmatpush1.msra.mxu0 0.0
    %3715 = vmatprep.subr.mxu0 0.0
    %3716 = vmatpush1.msra.mxu0 0.0
    %3717 = vmatprep.subr.mxu0 0.0
    %3718 = vmatpush1.msra.mxu0 0.0
    %3719 = vmatprep.subr.mxu0 0.0
    %3720 = vmatpush1.msra.mxu0 0.0
    %3721 = vmatprep.subr.mxu0 0.0
    %3722 = vmatpush1.msra.mxu0 0.0
    %3723 = vmatprep.subr.mxu0 0.0
    %3724 = vmatpush1.msra.mxu0 0.0
    %3725 = vmatprep.subr.mxu0 0.0
    %3726 = vmatpush1.msra.mxu0 0.0
    %3727 = vmatprep.mubr.f32.mxu0 0.0
    %3728 = vmatmul.mubr.f32.gmra.mrb[0].mxu0 %v3646
    %v3729 = vpop.f32.mrb[0].mxu0
    %v3730 = vadd.f32 0.0, %v3729
    %v3731 = vpop.f32.mrb[0].mxu0
    %3732 = vdwg.mxu0
    %3733 = vst [vmem:[#allocation3] sm:$0x3] %v3730
    // Predicated region
    $region62: #{mynet_forward.1} parent=1 // pred_check
      _
    $region63: #{mynet_forward.1} parent=1 // pred_check_branch
      %3735 = sbr.rel (0) target = $region65
    $region64: #{mynet_forward.1} parent=1 // pred_region
      %s3737 = ssub.s32 32, 32
      %3738 = vsyncadd [#allocation4], %s3737
      %s3740 = sshll.u32 [#allocation3], 4
      %s3741 = int_to_ptr.vmem [resolvable:$true] %s3740
      %3743 = dma.vmem_to_hbm [thread:$0]  %s3741, 32, %s15, [#allocation4]
    $region65: #{mynet_forward.1} parent=1 // pred_fallthru
      _
    // Predicated region
    $region66: #{mynet_forward.1} parent=1 // pred_check
      _
    $region67: #{mynet_forward.1} parent=1 // pred_check_branch
      %3745 = sbr.rel (0) target = $region69
    $region68: #{mynet_forward.1} parent=1 // pred_region
      %s3747 = ssub.s32 64, 64
      %3748 = vsyncadd [#allocation6], %s3747
      %s3749 = sshll.u32 [#allocation5], 4
      %s3750 = int_to_ptr.vmem [resolvable:$true] %s3749
      %3755 = dma.vmem_to_hbm [thread:$0]  %s3750, 64, %s16, [#allocation6], 32, 32, 2
    $region69: #{mynet_forward.1} parent=1 // pred_fallthru
      _
    // Predicated region
    $region70: #{mynet_forward.1} parent=1 // pred_check
      _
    $region71: #{mynet_forward.1} parent=1 // pred_check_branch
      %3757 = sbr.rel (0) target = $region73
    $region72: #{mynet_forward.1} parent=1 // pred_region
      %3758 = dma.done [#allocation4], 32
    $region73: #{mynet_forward.1} parent=1 // pred_fallthru
      _
    // Predicated region
    $region74: #{mynet_forward.1} parent=1 // pred_check
      _
    $region75: #{mynet_forward.1} parent=1 // pred_check_branch
      %3760 = sbr.rel (0) target = $region77
    $region76: #{mynet_forward.1} parent=1 // pred_region
      %3761 = dma.done [#allocation6], 64
    $region77: #{mynet_forward.1} parent=1 // pred_fallthru
      _
    %3762 = vsyncpa [#allocation4], 1
    %3763 = vsyncpa [#allocation6], 1

</llo_original>
